<compile_context>
chip_gen: v7x
topology: tpu7x:2x2x1
jax: 0.10.0
libtpu: 0.0.40
codegen_flags: <defaults>
</compile_context>

<pallas_src>
import jax
import jax.numpy as jnp
from jax.experimental import pallas as pl
from jax.experimental.pallas import tpu as pltpu

HP = 128  # lane-padded per-gate hidden width (one full lane group per gate)


def gru_kernel(x_ref, h_init_ref,
               wih0_ref, whh0_ref, b0_ref, b0hn_ref,
               wih1_ref, whh1_ref, b1_ref, b1hn_ref,
               wfc_ref, bfc_ref,
               out_ref, hfin_ref,
               gi0_ref):
    """Wavefront 2-layer GRU + FC head, fully resident in VMEM."""
    SB = x_ref.shape[0]                # seq * padded_batch (time-major, flattened)
    Bp = h_init_ref.shape[1]
    S = SB // Bp
    Hp = whh0_ref.shape[0]
    f32 = jnp.float32
    bf16 = jnp.bfloat16

    # Layer-0 input projection for every timestep as one hoisted GEMM (off the
    # recurrent chain), staged through VMEM so per-step reads are aligned
    # (8, 3*Hp) tiles and gi0 is not held live in vregs across the unroll.
    gi0_ref[...] = (jnp.dot(x_ref[...], wih0_ref[...], preferred_element_type=f32)
                    + b0_ref[...])

    # Hoist bias broadcasts once (broadcast_in_dim is not CSE'd inside the loop).
    b0hn = jnp.broadcast_to(b0hn_ref[...], (Bp, Hp))
    b1 = jnp.broadcast_to(b1_ref[...], (Bp, 3 * Hp))
    b1hn = jnp.broadcast_to(b1hn_ref[...], (Bp, Hp))

    def cell(gi, gh, bhn, h_prev):
        # Gate blocks lane-aligned at [0:Hp | Hp:2Hp | 2Hp:3Hp]; all math f32.
        r = jax.nn.sigmoid(gi[:, 0:Hp] + gh[:, 0:Hp])
        z = jax.nn.sigmoid(gi[:, Hp:2 * Hp] + gh[:, Hp:2 * Hp])
        n = jnp.tanh(gi[:, 2 * Hp:3 * Hp] + r * (gh[:, 2 * Hp:3 * Hp] + bhn))
        return n + z * (h_prev - n)            # == (1-z)*n + z*h_prev

    h0 = h_init_ref[0]
    h1 = h_init_ref[1]

    # Wavefront: step w advances layer 0 to time w and layer 1 to time w-1.
    # Chain length S+1; the up-to-three matmuls per step are independent.
    for w in range(S + 1):                                    # static, fully unrolled
        h0_prev = h0
        h0b = h0_prev.astype(bf16)
        if w < S:
            gh0 = jnp.dot(h0b, whh0_ref[...], preferred_element_type=f32)
        if w >= 1:
            gi1 = jnp.dot(h0b, wih1_ref[...], preferred_element_type=f32)
            gh1 = jnp.dot(h1.astype(bf16), whh1_ref[...], preferred_element_type=f32)
        if w < S:
            h0 = cell(gi0_ref[w * Bp:(w + 1) * Bp, :], gh0, b0hn, h0_prev)
        if w >= 1:
            h1 = cell(gi1 + b1, gh1, b1hn, h1)

    # FC head on the last timestep of the top layer.
    out_ref[...] = (jnp.dot(h1.astype(bf16), wfc_ref[...], preferred_element_type=f32)
                    + bfc_ref[...])
    hfin_ref[0] = h0
    hfin_ref[1] = h1


def pack_params(params, hidden_size, Hp=HP):
    """Rearrange logical (transposed) GRU params into the lane-padded, bf16,
    bias-pre-summed layout the kernel consumes.  Done once, outside the kernel."""
    H = hidden_size
    bf16 = jnp.bfloat16
    I = params["wih0_t"].shape[0]
    O = params["wfc_t"].shape[1]
    Ip = ((I + 127) // 128) * 128
    Op = ((O + 127) // 128) * 128

    def pad_gate_cols(w):   # (in, 3H) -> (in, 3*Hp): each gate in its own 128-lane slab
        parts = []
        for g in range(3):
            blk = w[:, g * H:(g + 1) * H]
            parts.append(jnp.pad(blk, ((0, 0), (0, Hp - H))))
        return jnp.concatenate(parts, axis=1)

    def pad_rows_to(w, n):   # zero-pad contraction rows
        return jnp.pad(w, ((0, n - w.shape[0]), (0, 0)))

    def layer(wih_t, whh_t, bih, bhh, in_rows):
        # pre-sum r/z biases; keep b_hn separate (it lives inside r * (...)).
        b_full = jnp.concatenate(
            [bih[:, :2 * H] + bhh[:, :2 * H], bih[:, 2 * H:]], axis=1)
        return dict(
            wih=pad_rows_to(pad_gate_cols(wih_t), in_rows).astype(bf16),
            whh=pad_rows_to(pad_gate_cols(whh_t), Hp).astype(bf16),
            b=pad_gate_cols(b_full),
            bhn=jnp.pad(bhh[:, 2 * H:], ((0, 0), (0, Hp - H))),
        )

    l0 = layer(params["wih0_t"], params["whh0_t"], params["bih0"], params["bhh0"], Ip)
    l1 = layer(params["wih1_t"], params["whh1_t"], params["bih1"], params["bhh1"], Hp)

    wfc = jnp.pad(params["wfc_t"], ((0, Hp - H), (0, Op - O))).astype(bf16)
    bfc = jnp.pad(params["bfc"], ((0, 0), (0, Op - O)))

    return dict(
        wih0=l0["wih"], whh0=l0["whh"], b0=l0["b"], b0hn=l0["bhn"],
        wih1=l1["wih"], whh1=l1["whh"], b1=l1["b"], b1hn=l1["bhn"],
        wfc=wfc, bfc=bfc, o_dim=O,
    )


def gru_forward(x_bsi, hidden, packed):
    """x_bsi: (batch, seq, input) like batch_first nn.GRU. hidden: (L, batch, H)."""
    B, S, I = x_bsi.shape
    L, _, H = hidden.shape
    Hp = packed["whh0"].shape[0]
    Ip = packed["wih0"].shape[0]
    Op = packed["wfc"].shape[1]
    O = packed["o_dim"]
    Bp = ((B + 7) // 8) * 8          # sublane-aligned batch

    # time-major, batch/feature padded, flattened: (S*Bp, Ip), bf16 MXU operand.
    x_t = jnp.transpose(x_bsi, (1, 0, 2))
    x_t = jnp.pad(x_t, ((0, 0), (0, Bp - B), (0, Ip - I)))
    x_flat = x_t.reshape(S * Bp, Ip).astype(jnp.bfloat16)

    h_init = jnp.pad(hidden, ((0, 0), (0, Bp - B), (0, Hp - H)))

    vmem = pl.BlockSpec(memory_space=pltpu.MemorySpace.VMEM)
    out_p, hfin_p = pl.pallas_call(
        gru_kernel,
        out_shape=(jax.ShapeDtypeStruct((Bp, Op), jnp.float32),
                   jax.ShapeDtypeStruct((L, Bp, Hp), jnp.float32)),
        in_specs=[vmem] * 12,
        out_specs=(vmem, vmem),
        scratch_shapes=[pltpu.VMEM((S * Bp, 3 * Hp), jnp.float32)],
    )(x_flat, h_init,
      packed["wih0"], packed["whh0"], packed["b0"], packed["b0hn"],
      packed["wih1"], packed["whh1"], packed["b1"], packed["b1hn"],
      packed["wfc"], packed["bfc"])
    return out_p[:B, :O], hfin_p[:, :B, :H]


def init_params(key, input_size, hidden_size, output_size):
    """Deterministic PyTorch-style uniform(-1/sqrt(H), 1/sqrt(H)) init (logical layout)."""
    H, I, O = hidden_size, input_size, output_size
    k = 1.0 / jnp.sqrt(jnp.float32(H))
    keys = jax.random.split(key, 12)
    u = lambda kk, shape, bound: jax.random.uniform(kk, shape, jnp.float32, -bound, bound)
    return {
        "wih0_t": u(keys[0], (I, 3 * H), k),
        "whh0_t": u(keys[1], (H, 3 * H), k),
        "bih0":   u(keys[2], (1, 3 * H), k),
        "bhh0":   u(keys[3], (1, 3 * H), k),
        "wih1_t": u(keys[4], (H, 3 * H), k),
        "whh1_t": u(keys[5], (H, 3 * H), k),
        "bih1":   u(keys[6], (1, 3 * H), k),
        "bhh1":   u(keys[7], (1, 3 * H), k),
        "wfc_t":  u(keys[8], (H, O), k),
        "bfc":    u(keys[9], (1, O), k),
    }


def gru_reference(x_bsi, hidden, params):
    """Pure-JAX f32 reference of the PyTorch module (unpadded logical params)."""
    B, S, I = x_bsi.shape
    H = hidden.shape[-1]

    def cell(x_t, h_prev, wih, whh, bih, bhh):
        gi = x_t @ wih + bih
        gh = h_prev @ whh + bhh
        r = jax.nn.sigmoid(gi[:, :H] + gh[:, :H])
        z = jax.nn.sigmoid(gi[:, H:2 * H] + gh[:, H:2 * H])
        n = jnp.tanh(gi[:, 2 * H:] + r * gh[:, 2 * H:])
        return (1.0 - z) * n + z * h_prev

    h0, h1 = hidden[0], hidden[1]
    for t in range(S):
        x_t = x_bsi[:, t, :]
        h0 = cell(x_t, h0, params["wih0_t"], params["whh0_t"], params["bih0"], params["bhh0"])
        h1 = cell(h0, h1, params["wih1_t"], params["whh1_t"], params["bih1"], params["bhh1"])
    out = h1 @ params["wfc_t"] + params["bfc"]
    return out, jnp.stack([h0, h1], axis=0)


if __name__ == "__main__":
    input_size, hidden_size, output_size, num_layers = 8, 32, 4, 2
    batch, seq = 2, 8

    root = jax.random.PRNGKey(0)
    k_x, k_p = jax.random.split(root)

    x = jax.random.normal(k_x, (batch, seq, input_size), jnp.float32)
    hidden = jnp.zeros((num_layers, batch, hidden_size), jnp.float32)  # reset_hidden_state
    params = init_params(k_p, input_size, hidden_size, output_size)
    packed = pack_params(params, hidden_size)

    out, h_fin = gru_forward(x, hidden, packed)
    out = jax.block_until_ready(out)
    h_fin = jax.block_until_ready(h_fin)

    out_ref, h_ref = gru_reference(x, hidden, params)
    assert out.shape == (batch, output_size)
    assert h_fin.shape == (num_layers, batch, hidden_size)
    # bf16 MXU operands with f32 accumulation -> relaxed tolerance vs f32 reference.
    assert jnp.allclose(out, out_ref, atol=2e-2, rtol=2e-2)
    assert jnp.allclose(h_fin, h_ref, atol=2e-2, rtol=2e-2)

    print("KERNEL_OK")
</pallas_src>

<mosaic_0001>
module attributes {stable_mosaic.version = 11 : i64} {
  func.func @gru_kernel(%arg0: memref<64x128xbf16, #tpu.memory_space<vmem>>, %arg1: memref<2x8x128xf32, #tpu.memory_space<vmem>>, %arg2: memref<128x384xbf16, #tpu.memory_space<vmem>>, %arg3: memref<128x384xbf16, #tpu.memory_space<vmem>>, %arg4: memref<1x384xf32, #tpu.memory_space<vmem>>, %arg5: memref<1x128xf32, #tpu.memory_space<vmem>>, %arg6: memref<128x384xbf16, #tpu.memory_space<vmem>>, %arg7: memref<128x384xbf16, #tpu.memory_space<vmem>>, %arg8: memref<1x384xf32, #tpu.memory_space<vmem>>, %arg9: memref<1x128xf32, #tpu.memory_space<vmem>>, %arg10: memref<128x128xbf16, #tpu.memory_space<vmem>>, %arg11: memref<1x128xf32, #tpu.memory_space<vmem>>, %arg12: memref<8x128xf32, #tpu.memory_space<vmem>>, %arg13: memref<2x8x128xf32, #tpu.memory_space<vmem>>, %arg14: memref<64x384xf32, #tpu.memory_space<vmem>>) attributes {dimension_semantics = [], scalar_prefetch = 0 : i64, scratch_operands = 1 : i64, tpu.core_type = #tpu.core_type<tc>} {
    %c0 = arith.constant 0 : index
    %c0_0 = arith.constant 0 : index
    %0 = vector.load %arg0[%c0, %c0_0] : memref<64x128xbf16, #tpu.memory_space<vmem>>, vector<64x128xbf16>
    %c0_1 = arith.constant 0 : index
    %c0_2 = arith.constant 0 : index
    %1 = vector.load %arg2[%c0_1, %c0_2] : memref<128x384xbf16, #tpu.memory_space<vmem>>, vector<128x384xbf16>
    %cst = arith.constant dense<0.000000e+00> : vector<64x384xf32>
    %2 = tpu.matmul %0, %1, %cst {dimension_numbers = #tpu.dot_dimension_numbers<[1], [0], [0], [1], [0, 0, 1, 1], [], []>} : vector<64x128xbf16>, vector<128x384xbf16>, vector<64x384xf32> -> vector<64x384xf32>
    %c0_3 = arith.constant 0 : index
    %c0_4 = arith.constant 0 : index
    %3 = vector.load %arg4[%c0_3, %c0_4] : memref<1x384xf32, #tpu.memory_space<vmem>>, vector<1x384xf32>
    %4 = vector.broadcast %3 : vector<1x384xf32> to vector<64x384xf32>
    %5 = arith.addf %2, %4 : vector<64x384xf32>
    %c0_5 = arith.constant 0 : index
    %c0_6 = arith.constant 0 : index
    %6 = vector.load %arg14[%c0_5, %c0_6] : memref<64x384xf32, #tpu.memory_space<vmem>>, vector<64x384xf32>
    tpu.vector_store %arg14[%c0_5, %c0_6], %5 {strides = array<i32>} : memref<64x384xf32, #tpu.memory_space<vmem>>, vector<64x384xf32>,
    %c0_7 = arith.constant 0 : index
    %c0_8 = arith.constant 0 : index
    %7 = vector.load %arg5[%c0_7, %c0_8] : memref<1x128xf32, #tpu.memory_space<vmem>>, vector<1x128xf32>
    %8 = vector.shape_cast %7 : vector<1x128xf32> to vector<1x128xf32>
    %9 = vector.broadcast %8 : vector<1x128xf32> to vector<8x128xf32>
    %c0_9 = arith.constant 0 : index
    %c0_10 = arith.constant 0 : index
    %10 = vector.load %arg8[%c0_9, %c0_10] : memref<1x384xf32, #tpu.memory_space<vmem>>, vector<1x384xf32>
    %11 = vector.shape_cast %10 : vector<1x384xf32> to vector<1x384xf32>
    %12 = vector.broadcast %11 : vector<1x384xf32> to vector<8x384xf32>
    %c0_11 = arith.constant 0 : index
    %c0_12 = arith.constant 0 : index
    %13 = vector.load %arg9[%c0_11, %c0_12] : memref<1x128xf32, #tpu.memory_space<vmem>>, vector<1x128xf32>
    %14 = vector.shape_cast %13 : vector<1x128xf32> to vector<1x128xf32>
    %15 = vector.broadcast %14 : vector<1x128xf32> to vector<8x128xf32>
    %c0_13 = arith.constant 0 : index
    %c0_14 = arith.constant 0 : index
    %c0_15 = arith.constant 0 : index
    %16 = vector.load %arg1[%c0_13, %c0_14, %c0_15] : memref<2x8x128xf32, #tpu.memory_space<vmem>>, vector<1x8x128xf32>
    %17 = vector.shape_cast %16 : vector<1x8x128xf32> to vector<8x128xf32>
    %c1 = arith.constant 1 : index
    %c0_16 = arith.constant 0 : index
    %c0_17 = arith.constant 0 : index
    %18 = vector.load %arg1[%c1, %c0_16, %c0_17] : memref<2x8x128xf32, #tpu.memory_space<vmem>>, vector<1x8x128xf32>
    %19 = vector.shape_cast %18 : vector<1x8x128xf32> to vector<8x128xf32>
    %20 = arith.truncf %17 : vector<8x128xf32> to vector<8x128xbf16>
    %c0_18 = arith.constant 0 : index
    %c0_19 = arith.constant 0 : index
    %21 = vector.load %arg3[%c0_18, %c0_19] : memref<128x384xbf16, #tpu.memory_space<vmem>>, vector<128x384xbf16>
    %cst_20 = arith.constant dense<0.000000e+00> : vector<8x384xf32>
    %22 = tpu.matmul %20, %21, %cst_20 {dimension_numbers = #tpu.dot_dimension_numbers<[1], [0], [0], [1], [0, 0, 1, 1], [], []>} : vector<8x128xbf16>, vector<128x384xbf16>, vector<8x384xf32> -> vector<8x384xf32>
    %c0_21 = arith.constant 0 : index
    %c0_22 = arith.constant 0 : index
    %23 = vector.load %arg14[%c0_21, %c0_22] : memref<64x384xf32, #tpu.memory_space<vmem>>, vector<8x384xf32>
    %24 = vector.extract_strided_slice %23 {offsets = [0, 0], sizes = [8, 128], strides = [1, 1]} : vector<8x384xf32> to vector<8x128xf32>
    %25 = vector.extract_strided_slice %22 {offsets = [0, 0], sizes = [8, 128], strides = [1, 1]} : vector<8x384xf32> to vector<8x128xf32>
    %26 = arith.addf %24, %25 : vector<8x128xf32>
    %27 = arith.negf %26 : vector<8x128xf32>
    %28 = math.exp %27 : vector<8x128xf32>
    %cst_23 = arith.constant 1.000000e+00 : f32
    %29 = vector.broadcast %cst_23 : f32 to vector<8x128xf32>
    %30 = arith.addf %29, %28 : vector<8x128xf32>
    %31 = arith.divf %29, %30 : vector<8x128xf32>
    %32 = vector.extract_strided_slice %23 {offsets = [0, 128], sizes = [8, 128], strides = [1, 1]} : vector<8x384xf32> to vector<8x128xf32>
    %33 = vector.extract_strided_slice %22 {offsets = [0, 128], sizes = [8, 128], strides = [1, 1]} : vector<8x384xf32> to vector<8x128xf32>
    %34 = arith.addf %32, %33 : vector<8x128xf32>
    %35 = arith.negf %34 : vector<8x128xf32>
    %36 = math.exp %35 : vector<8x128xf32>
    %cst_24 = arith.constant 1.000000e+00 : f32
    %37 = vector.broadcast %cst_24 : f32 to vector<8x128xf32>
    %38 = arith.addf %37, %36 : vector<8x128xf32>
    %39 = arith.divf %37, %38 : vector<8x128xf32>
    %40 = vector.extract_strided_slice %23 {offsets = [0, 256], sizes = [8, 128], strides = [1, 1]} : vector<8x384xf32> to vector<8x128xf32>
    %41 = vector.extract_strided_slice %22 {offsets = [0, 256], sizes = [8, 128], strides = [1, 1]} : vector<8x384xf32> to vector<8x128xf32>
    %42 = arith.addf %41, %9 : vector<8x128xf32>
    %43 = arith.mulf %31, %42 : vector<8x128xf32>
    %44 = arith.addf %40, %43 : vector<8x128xf32>
    %45 = math.tanh %44 : vector<8x128xf32>
    %46 = arith.subf %17, %45 : vector<8x128xf32>
    %47 = arith.mulf %39, %46 : vector<8x128xf32>
    %48 = arith.addf %45, %47 : vector<8x128xf32>
    %49 = arith.truncf %48 : vector<8x128xf32> to vector<8x128xbf16>
    %c0_25 = arith.constant 0 : index
    %c0_26 = arith.constant 0 : index
    %50 = vector.load %arg3[%c0_25, %c0_26] : memref<128x384xbf16, #tpu.memory_space<vmem>>, vector<128x384xbf16>
    %cst_27 = arith.constant dense<0.000000e+00> : vector<8x384xf32>
    %51 = tpu.matmul %49, %50, %cst_27 {dimension_numbers = #tpu.dot_dimension_numbers<[1], [0], [0], [1], [0, 0, 1, 1], [], []>} : vector<8x128xbf16>, vector<128x384xbf16>, vector<8x384xf32> -> vector<8x384xf32>
    %c0_28 = arith.constant 0 : index
    %c0_29 = arith.constant 0 : index
    %52 = vector.load %arg6[%c0_28, %c0_29] : memref<128x384xbf16, #tpu.memory_space<vmem>>, vector<128x384xbf16>
    %cst_30 = arith.constant dense<0.000000e+00> : vector<8x384xf32>
    %53 = tpu.matmul %49, %52, %cst_30 {dimension_numbers = #tpu.dot_dimension_numbers<[1], [0], [0], [1], [0, 0, 1, 1], [], []>} : vector<8x128xbf16>, vector<128x384xbf16>, vector<8x384xf32> -> vector<8x384xf32>
    %54 = arith.truncf %19 : vector<8x128xf32> to vector<8x128xbf16>
    %c0_31 = arith.constant 0 : index
    %c0_32 = arith.constant 0 : index
    %55 = vector.load %arg7[%c0_31, %c0_32] : memref<128x384xbf16, #tpu.memory_space<vmem>>, vector<128x384xbf16>
    %cst_33 = arith.constant dense<0.000000e+00> : vector<8x384xf32>
    %56 = tpu.matmul %54, %55, %cst_33 {dimension_numbers = #tpu.dot_dimension_numbers<[1], [0], [0], [1], [0, 0, 1, 1], [], []>} : vector<8x128xbf16>, vector<128x384xbf16>, vector<8x384xf32> -> vector<8x384xf32>
    %c8 = arith.constant 8 : index
    %c0_34 = arith.constant 0 : index
    %57 = vector.load %arg14[%c8, %c0_34] : memref<64x384xf32, #tpu.memory_space<vmem>>, vector<8x384xf32>
    %58 = vector.extract_strided_slice %57 {offsets = [0, 0], sizes = [8, 128], strides = [1, 1]} : vector<8x384xf32> to vector<8x128xf32>
    %59 = vector.extract_strided_slice %51 {offsets = [0, 0], sizes = [8, 128], strides = [1, 1]} : vector<8x384xf32> to vector<8x128xf32>
    %60 = arith.addf %58, %59 : vector<8x128xf32>
    %61 = arith.negf %60 : vector<8x128xf32>
    %62 = math.exp %61 : vector<8x128xf32>
    %cst_35 = arith.constant 1.000000e+00 : f32
    %63 = vector.broadcast %cst_35 : f32 to vector<8x128xf32>
    %64 = arith.addf %63, %62 : vector<8x128xf32>
    %65 = arith.divf %63, %64 : vector<8x128xf32>
    %66 = vector.extract_strided_slice %57 {offsets = [0, 128], sizes = [8, 128], strides = [1, 1]} : vector<8x384xf32> to vector<8x128xf32>
    %67 = vector.extract_strided_slice %51 {offsets = [0, 128], sizes = [8, 128], strides = [1, 1]} : vector<8x384xf32> to vector<8x128xf32>
    %68 = arith.addf %66, %67 : vector<8x128xf32>
    %69 = arith.negf %68 : vector<8x128xf32>
    %70 = math.exp %69 : vector<8x128xf32>
    %cst_36 = arith.constant 1.000000e+00 : f32
    %71 = vector.broadcast %cst_36 : f32 to vector<8x128xf32>
    %72 = arith.addf %71, %70 : vector<8x128xf32>
    %73 = arith.divf %71, %72 : vector<8x128xf32>
    %74 = vector.extract_strided_slice %57 {offsets = [0, 256], sizes = [8, 128], strides = [1, 1]} : vector<8x384xf32> to vector<8x128xf32>
    %75 = vector.extract_strided_slice %51 {offsets = [0, 256], sizes = [8, 128], strides = [1, 1]} : vector<8x384xf32> to vector<8x128xf32>
    %76 = arith.addf %75, %9 : vector<8x128xf32>
    %77 = arith.mulf %65, %76 : vector<8x128xf32>
    %78 = arith.addf %74, %77 : vector<8x128xf32>
    %79 = math.tanh %78 : vector<8x128xf32>
    %80 = arith.subf %48, %79 : vector<8x128xf32>
    %81 = arith.mulf %73, %80 : vector<8x128xf32>
    %82 = arith.addf %79, %81 : vector<8x128xf32>
    %83 = arith.addf %53, %12 : vector<8x384xf32>
    %84 = vector.extract_strided_slice %83 {offsets = [0, 0], sizes = [8, 128], strides = [1, 1]} : vector<8x384xf32> to vector<8x128xf32>
    %85 = vector.extract_strided_slice %56 {offsets = [0, 0], sizes = [8, 128], strides = [1, 1]} : vector<8x384xf32> to vector<8x128xf32>
    %86 = arith.addf %84, %85 : vector<8x128xf32>
    %87 = arith.negf %86 : vector<8x128xf32>
    %88 = math.exp %87 : vector<8x128xf32>
    %cst_37 = arith.constant 1.000000e+00 : f32
    %89 = vector.broadcast %cst_37 : f32 to vector<8x128xf32>
    %90 = arith.addf %89, %88 : vector<8x128xf32>
    %91 = arith.divf %89, %90 : vector<8x128xf32>
    %92 = vector.extract_strided_slice %83 {offsets = [0, 128], sizes = [8, 128], strides = [1, 1]} : vector<8x384xf32> to vector<8x128xf32>
    %93 = vector.extract_strided_slice %56 {offsets = [0, 128], sizes = [8, 128], strides = [1, 1]} : vector<8x384xf32> to vector<8x128xf32>
    %94 = arith.addf %92, %93 : vector<8x128xf32>
    %95 = arith.negf %94 : vector<8x128xf32>
    %96 = math.exp %95 : vector<8x128xf32>
    %cst_38 = arith.constant 1.000000e+00 : f32
    %97 = vector.broadcast %cst_38 : f32 to vector<8x128xf32>
    %98 = arith.addf %97, %96 : vector<8x128xf32>
    %99 = arith.divf %97, %98 : vector<8x128xf32>
    %100 = vector.extract_strided_slice %83 {offsets = [0, 256], sizes = [8, 128], strides = [1, 1]} : vector<8x384xf32> to vector<8x128xf32>
    %101 = vector.extract_strided_slice %56 {offsets = [0, 256], sizes = [8, 128], strides = [1, 1]} : vector<8x384xf32> to vector<8x128xf32>
    %102 = arith.addf %101, %15 : vector<8x128xf32>
    %103 = arith.mulf %91, %102 : vector<8x128xf32>
    %104 = arith.addf %100, %103 : vector<8x128xf32>
    %105 = math.tanh %104 : vector<8x128xf32>
    %106 = arith.subf %19, %105 : vector<8x128xf32>
    %107 = arith.mulf %99, %106 : vector<8x128xf32>
    %108 = arith.addf %105, %107 : vector<8x128xf32>
    %109 = arith.truncf %82 : vector<8x128xf32> to vector<8x128xbf16>
    %c0_39 = arith.constant 0 : index
    %c0_40 = arith.constant 0 : index
    %110 = vector.load %arg3[%c0_39, %c0_40] : memref<128x384xbf16, #tpu.memory_space<vmem>>, vector<128x384xbf16>
    %cst_41 = arith.constant dense<0.000000e+00> : vector<8x384xf32>
    %111 = tpu.matmul %109, %110, %cst_41 {dimension_numbers = #tpu.dot_dimension_numbers<[1], [0], [0], [1], [0, 0, 1, 1], [], []>} : vector<8x128xbf16>, vector<128x384xbf16>, vector<8x384xf32> -> vector<8x384xf32>
    %c0_42 = arith.constant 0 : index
    %c0_43 = arith.constant 0 : index
    %112 = vector.load %arg6[%c0_42, %c0_43] : memref<128x384xbf16, #tpu.memory_space<vmem>>, vector<128x384xbf16>
    %cst_44 = arith.constant dense<0.000000e+00> : vector<8x384xf32>
    %113 = tpu.matmul %109, %112, %cst_44 {dimension_numbers = #tpu.dot_dimension_numbers<[1], [0], [0], [1], [0, 0, 1, 1], [], []>} : vector<8x128xbf16>, vector<128x384xbf16>, vector<8x384xf32> -> vector<8x384xf32>
    %114 = arith.truncf %108 : vector<8x128xf32> to vector<8x128xbf16>
    %c0_45 = arith.constant 0 : index
    %c0_46 = arith.constant 0 : index
    %115 = vector.load %arg7[%c0_45, %c0_46] : memref<128x384xbf16, #tpu.memory_space<vmem>>, vector<128x384xbf16>
    %cst_47 = arith.constant dense<0.000000e+00> : vector<8x384xf32>
    %116 = tpu.matmul %114, %115, %cst_47 {dimension_numbers = #tpu.dot_dimension_numbers<[1], [0], [0], [1], [0, 0, 1, 1], [], []>} : vector<8x128xbf16>, vector<128x384xbf16>, vector<8x384xf32> -> vector<8x384xf32>
    %c16 = arith.constant 16 : index
    %c0_48 = arith.constant 0 : index
    %117 = vector.load %arg14[%c16, %c0_48] : memref<64x384xf32, #tpu.memory_space<vmem>>, vector<8x384xf32>
    %118 = vector.extract_strided_slice %117 {offsets = [0, 0], sizes = [8, 128], strides = [1, 1]} : vector<8x384xf32> to vector<8x128xf32>
    %119 = vector.extract_strided_slice %111 {offsets = [0, 0], sizes = [8, 128], strides = [1, 1]} : vector<8x384xf32> to vector<8x128xf32>
    %120 = arith.addf %118, %119 : vector<8x128xf32>
    %121 = arith.negf %120 : vector<8x128xf32>
    %122 = math.exp %121 : vector<8x128xf32>
    %cst_49 = arith.constant 1.000000e+00 : f32
    %123 = vector.broadcast %cst_49 : f32 to vector<8x128xf32>
    %124 = arith.addf %123, %122 : vector<8x128xf32>
    %125 = arith.divf %123, %124 : vector<8x128xf32>
    %126 = vector.extract_strided_slice %117 {offsets = [0, 128], sizes = [8, 128], strides = [1, 1]} : vector<8x384xf32> to vector<8x128xf32>
    %127 = vector.extract_strided_slice %111 {offsets = [0, 128], sizes = [8, 128], strides = [1, 1]} : vector<8x384xf32> to vector<8x128xf32>
    %128 = arith.addf %126, %127 : vector<8x128xf32>
    %129 = arith.negf %128 : vector<8x128xf32>
    %130 = math.exp %129 : vector<8x128xf32>
    %cst_50 = arith.constant 1.000000e+00 : f32
    %131 = vector.broadcast %cst_50 : f32 to vector<8x128xf32>
    %132 = arith.addf %131, %130 : vector<8x128xf32>
    %133 = arith.divf %131, %132 : vector<8x128xf32>
    %134 = vector.extract_strided_slice %117 {offsets = [0, 256], sizes = [8, 128], strides = [1, 1]} : vector<8x384xf32> to vector<8x128xf32>
    %135 = vector.extract_strided_slice %111 {offsets = [0, 256], sizes = [8, 128], strides = [1, 1]} : vector<8x384xf32> to vector<8x128xf32>
    %136 = arith.addf %135, %9 : vector<8x128xf32>
    %137 = arith.mulf %125, %136 : vector<8x128xf32>
    %138 = arith.addf %134, %137 : vector<8x128xf32>
    %139 = math.tanh %138 : vector<8x128xf32>
    %140 = arith.subf %82, %139 : vector<8x128xf32>
    %141 = arith.mulf %133, %140 : vector<8x128xf32>
    %142 = arith.addf %139, %141 : vector<8x128xf32>
    %143 = arith.addf %113, %12 : vector<8x384xf32>
    %144 = vector.extract_strided_slice %143 {offsets = [0, 0], sizes = [8, 128], strides = [1, 1]} : vector<8x384xf32> to vector<8x128xf32>
    %145 = vector.extract_strided_slice %116 {offsets = [0, 0], sizes = [8, 128], strides = [1, 1]} : vector<8x384xf32> to vector<8x128xf32>
    %146 = arith.addf %144, %145 : vector<8x128xf32>
    %147 = arith.negf %146 : vector<8x128xf32>
    %148 = math.exp %147 : vector<8x128xf32>
    %cst_51 = arith.constant 1.000000e+00 : f32
    %149 = vector.broadcast %cst_51 : f32 to vector<8x128xf32>
    %150 = arith.addf %149, %148 : vector<8x128xf32>
    %151 = arith.divf %149, %150 : vector<8x128xf32>
    %152 = vector.extract_strided_slice %143 {offsets = [0, 128], sizes = [8, 128], strides = [1, 1]} : vector<8x384xf32> to vector<8x128xf32>
    %153 = vector.extract_strided_slice %116 {offsets = [0, 128], sizes = [8, 128], strides = [1, 1]} : vector<8x384xf32> to vector<8x128xf32>
    %154 = arith.addf %152, %153 : vector<8x128xf32>
    %155 = arith.negf %154 : vector<8x128xf32>
    %156 = math.exp %155 : vector<8x128xf32>
    %cst_52 = arith.constant 1.000000e+00 : f32
    %157 = vector.broadcast %cst_52 : f32 to vector<8x128xf32>
    %158 = arith.addf %157, %156 : vector<8x128xf32>
    %159 = arith.divf %157, %158 : vector<8x128xf32>
    %160 = vector.extract_strided_slice %143 {offsets = [0, 256], sizes = [8, 128], strides = [1, 1]} : vector<8x384xf32> to vector<8x128xf32>
    %161 = vector.extract_strided_slice %116 {offsets = [0, 256], sizes = [8, 128], strides = [1, 1]} : vector<8x384xf32> to vector<8x128xf32>
    %162 = arith.addf %161, %15 : vector<8x128xf32>
    %163 = arith.mulf %151, %162 : vector<8x128xf32>
    %164 = arith.addf %160, %163 : vector<8x128xf32>
    %165 = math.tanh %164 : vector<8x128xf32>
    %166 = arith.subf %108, %165 : vector<8x128xf32>
    %167 = arith.mulf %159, %166 : vector<8x128xf32>
    %168 = arith.addf %165, %167 : vector<8x128xf32>
    %169 = arith.truncf %142 : vector<8x128xf32> to vector<8x128xbf16>
    %c0_53 = arith.constant 0 : index
    %c0_54 = arith.constant 0 : index
    %170 = vector.load %arg3[%c0_53, %c0_54] : memref<128x384xbf16, #tpu.memory_space<vmem>>, vector<128x384xbf16>
    %cst_55 = arith.constant dense<0.000000e+00> : vector<8x384xf32>
    %171 = tpu.matmul %169, %170, %cst_55 {dimension_numbers = #tpu.dot_dimension_numbers<[1], [0], [0], [1], [0, 0, 1, 1], [], []>} : vector<8x128xbf16>, vector<128x384xbf16>, vector<8x384xf32> -> vector<8x384xf32>
    %c0_56 = arith.constant 0 : index
    %c0_57 = arith.constant 0 : index
    %172 = vector.load %arg6[%c0_56, %c0_57] : memref<128x384xbf16, #tpu.memory_space<vmem>>, vector<128x384xbf16>
    %cst_58 = arith.constant dense<0.000000e+00> : vector<8x384xf32>
    %173 = tpu.matmul %169, %172, %cst_58 {dimension_numbers = #tpu.dot_dimension_numbers<[1], [0], [0], [1], [0, 0, 1, 1], [], []>} : vector<8x128xbf16>, vector<128x384xbf16>, vector<8x384xf32> -> vector<8x384xf32>
    %174 = arith.truncf %168 : vector<8x128xf32> to vector<8x128xbf16>
    %c0_59 = arith.constant 0 : index
    %c0_60 = arith.constant 0 : index
    %175 = vector.load %arg7[%c0_59, %c0_60] : memref<128x384xbf16, #tpu.memory_space<vmem>>, vector<128x384xbf16>
    %cst_61 = arith.constant dense<0.000000e+00> : vector<8x384xf32>
    %176 = tpu.matmul %174, %175, %cst_61 {dimension_numbers = #tpu.dot_dimension_numbers<[1], [0], [0], [1], [0, 0, 1, 1], [], []>} : vector<8x128xbf16>, vector<128x384xbf16>, vector<8x384xf32> -> vector<8x384xf32>
    %c24 = arith.constant 24 : index
    %c0_62 = arith.constant 0 : index
    %177 = vector.load %arg14[%c24, %c0_62] : memref<64x384xf32, #tpu.memory_space<vmem>>, vector<8x384xf32>
    %178 = vector.extract_strided_slice %177 {offsets = [0, 0], sizes = [8, 128], strides = [1, 1]} : vector<8x384xf32> to vector<8x128xf32>
    %179 = vector.extract_strided_slice %171 {offsets = [0, 0], sizes = [8, 128], strides = [1, 1]} : vector<8x384xf32> to vector<8x128xf32>
    %180 = arith.addf %178, %179 : vector<8x128xf32>
    %181 = arith.negf %180 : vector<8x128xf32>
    %182 = math.exp %181 : vector<8x128xf32>
    %cst_63 = arith.constant 1.000000e+00 : f32
    %183 = vector.broadcast %cst_63 : f32 to vector<8x128xf32>
    %184 = arith.addf %183, %182 : vector<8x128xf32>
    %185 = arith.divf %183, %184 : vector<8x128xf32>
    %186 = vector.extract_strided_slice %177 {offsets = [0, 128], sizes = [8, 128], strides = [1, 1]} : vector<8x384xf32> to vector<8x128xf32>
    %187 = vector.extract_strided_slice %171 {offsets = [0, 128], sizes = [8, 128], strides = [1, 1]} : vector<8x384xf32> to vector<8x128xf32>
    %188 = arith.addf %186, %187 : vector<8x128xf32>
    %189 = arith.negf %188 : vector<8x128xf32>
    %190 = math.exp %189 : vector<8x128xf32>
    %cst_64 = arith.constant 1.000000e+00 : f32
    %191 = vector.broadcast %cst_64 : f32 to vector<8x128xf32>
    %192 = arith.addf %191, %190 : vector<8x128xf32>
    %193 = arith.divf %191, %192 : vector<8x128xf32>
    %194 = vector.extract_strided_slice %177 {offsets = [0, 256], sizes = [8, 128], strides = [1, 1]} : vector<8x384xf32> to vector<8x128xf32>
    %195 = vector.extract_strided_slice %171 {offsets = [0, 256], sizes = [8, 128], strides = [1, 1]} : vector<8x384xf32> to vector<8x128xf32>
    %196 = arith.addf %195, %9 : vector<8x128xf32>
    %197 = arith.mulf %185, %196 : vector<8x128xf32>
    %198 = arith.addf %194, %197 : vector<8x128xf32>
    %199 = math.tanh %198 : vector<8x128xf32>
    %200 = arith.subf %142, %199 : vector<8x128xf32>
    %201 = arith.mulf %193, %200 : vector<8x128xf32>
    %202 = arith.addf %199, %201 : vector<8x128xf32>
    %203 = arith.addf %173, %12 : vector<8x384xf32>
    %204 = vector.extract_strided_slice %203 {offsets = [0, 0], sizes = [8, 128], strides = [1, 1]} : vector<8x384xf32> to vector<8x128xf32>
    %205 = vector.extract_strided_slice %176 {offsets = [0, 0], sizes = [8, 128], strides = [1, 1]} : vector<8x384xf32> to vector<8x128xf32>
    %206 = arith.addf %204, %205 : vector<8x128xf32>
    %207 = arith.negf %206 : vector<8x128xf32>
    %208 = math.exp %207 : vector<8x128xf32>
    %cst_65 = arith.constant 1.000000e+00 : f32
    %209 = vector.broadcast %cst_65 : f32 to vector<8x128xf32>
    %210 = arith.addf %209, %208 : vector<8x128xf32>
    %211 = arith.divf %209, %210 : vector<8x128xf32>
    %212 = vector.extract_strided_slice %203 {offsets = [0, 128], sizes = [8, 128], strides = [1, 1]} : vector<8x384xf32> to vector<8x128xf32>
    %213 = vector.extract_strided_slice %176 {offsets = [0, 128], sizes = [8, 128], strides = [1, 1]} : vector<8x384xf32> to vector<8x128xf32>
    %214 = arith.addf %212, %213 : vector<8x128xf32>
    %215 = arith.negf %214 : vector<8x128xf32>
    %216 = math.exp %215 : vector<8x128xf32>
    %cst_66 = arith.constant 1.000000e+00 : f32
    %217 = vector.broadcast %cst_66 : f32 to vector<8x128xf32>
    %218 = arith.addf %217, %216 : vector<8x128xf32>
    %219 = arith.divf %217, %218 : vector<8x128xf32>
    %220 = vector.extract_strided_slice %203 {offsets = [0, 256], sizes = [8, 128], strides = [1, 1]} : vector<8x384xf32> to vector<8x128xf32>
    %221 = vector.extract_strided_slice %176 {offsets = [0, 256], sizes = [8, 128], strides = [1, 1]} : vector<8x384xf32> to vector<8x128xf32>
    %222 = arith.addf %221, %15 : vector<8x128xf32>
    %223 = arith.mulf %211, %222 : vector<8x128xf32>
    %224 = arith.addf %220, %223 : vector<8x128xf32>
    %225 = math.tanh %224 : vector<8x128xf32>
    %226 = arith.subf %168, %225 : vector<8x128xf32>
    %227 = arith.mulf %219, %226 : vector<8x128xf32>
    %228 = arith.addf %225, %227 : vector<8x128xf32>
    %229 = arith.truncf %202 : vector<8x128xf32> to vector<8x128xbf16>
    %c0_67 = arith.constant 0 : index
    %c0_68 = arith.constant 0 : index
    %230 = vector.load %arg3[%c0_67, %c0_68] : memref<128x384xbf16, #tpu.memory_space<vmem>>, vector<128x384xbf16>
    %cst_69 = arith.constant dense<0.000000e+00> : vector<8x384xf32>
    %231 = tpu.matmul %229, %230, %cst_69 {dimension_numbers = #tpu.dot_dimension_numbers<[1], [0], [0], [1], [0, 0, 1, 1], [], []>} : vector<8x128xbf16>, vector<128x384xbf16>, vector<8x384xf32> -> vector<8x384xf32>
    %c0_70 = arith.constant 0 : index
    %c0_71 = arith.constant 0 : index
    %232 = vector.load %arg6[%c0_70, %c0_71] : memref<128x384xbf16, #tpu.memory_space<vmem>>, vector<128x384xbf16>
    %cst_72 = arith.constant dense<0.000000e+00> : vector<8x384xf32>
    %233 = tpu.matmul %229, %232, %cst_72 {dimension_numbers = #tpu.dot_dimension_numbers<[1], [0], [0], [1], [0, 0, 1, 1], [], []>} : vector<8x128xbf16>, vector<128x384xbf16>, vector<8x384xf32> -> vector<8x384xf32>
    %234 = arith.truncf %228 : vector<8x128xf32> to vector<8x128xbf16>
    %c0_73 = arith.constant 0 : index
    %c0_74 = arith.constant 0 : index
    %235 = vector.load %arg7[%c0_73, %c0_74] : memref<128x384xbf16, #tpu.memory_space<vmem>>, vector<128x384xbf16>
    %cst_75 = arith.constant dense<0.000000e+00> : vector<8x384xf32>
    %236 = tpu.matmul %234, %235, %cst_75 {dimension_numbers = #tpu.dot_dimension_numbers<[1], [0], [0], [1], [0, 0, 1, 1], [], []>} : vector<8x128xbf16>, vector<128x384xbf16>, vector<8x384xf32> -> vector<8x384xf32>
    %c32 = arith.constant 32 : index
    %c0_76 = arith.constant 0 : index
    %237 = vector.load %arg14[%c32, %c0_76] : memref<64x384xf32, #tpu.memory_space<vmem>>, vector<8x384xf32>
    %238 = vector.extract_strided_slice %237 {offsets = [0, 0], sizes = [8, 128], strides = [1, 1]} : vector<8x384xf32> to vector<8x128xf32>
    %239 = vector.extract_strided_slice %231 {offsets = [0, 0], sizes = [8, 128], strides = [1, 1]} : vector<8x384xf32> to vector<8x128xf32>
    %240 = arith.addf %238, %239 : vector<8x128xf32>
    %241 = arith.negf %240 : vector<8x128xf32>
    %242 = math.exp %241 : vector<8x128xf32>
    %cst_77 = arith.constant 1.000000e+00 : f32
    %243 = vector.broadcast %cst_77 : f32 to vector<8x128xf32>
    %244 = arith.addf %243, %242 : vector<8x128xf32>
    %245 = arith.divf %243, %244 : vector<8x128xf32>
    %246 = vector.extract_strided_slice %237 {offsets = [0, 128], sizes = [8, 128], strides = [1, 1]} : vector<8x384xf32> to vector<8x128xf32>
    %247 = vector.extract_strided_slice %231 {offsets = [0, 128], sizes = [8, 128], strides = [1, 1]} : vector<8x384xf32> to vector<8x128xf32>
    %248 = arith.addf %246, %247 : vector<8x128xf32>
    %249 = arith.negf %248 : vector<8x128xf32>
    %250 = math.exp %249 : vector<8x128xf32>
    %cst_78 = arith.constant 1.000000e+00 : f32
    %251 = vector.broadcast %cst_78 : f32 to vector<8x128xf32>
    %252 = arith.addf %251, %250 : vector<8x128xf32>
    %253 = arith.divf %251, %252 : vector<8x128xf32>
    %254 = vector.extract_strided_slice %237 {offsets = [0, 256], sizes = [8, 128], strides = [1, 1]} : vector<8x384xf32> to vector<8x128xf32>
    %255 = vector.extract_strided_slice %231 {offsets = [0, 256], sizes = [8, 128], strides = [1, 1]} : vector<8x384xf32> to vector<8x128xf32>
    %256 = arith.addf %255, %9 : vector<8x128xf32>
    %257 = arith.mulf %245, %256 : vector<8x128xf32>
    %258 = arith.addf %254, %257 : vector<8x128xf32>
    %259 = math.tanh %258 : vector<8x128xf32>
    %260 = arith.subf %202, %259 : vector<8x128xf32>
    %261 = arith.mulf %253, %260 : vector<8x128xf32>
    %262 = arith.addf %259, %261 : vector<8x128xf32>
    %263 = arith.addf %233, %12 : vector<8x384xf32>
    %264 = vector.extract_strided_slice %263 {offsets = [0, 0], sizes = [8, 128], strides = [1, 1]} : vector<8x384xf32> to vector<8x128xf32>
    %265 = vector.extract_strided_slice %236 {offsets = [0, 0], sizes = [8, 128], strides = [1, 1]} : vector<8x384xf32> to vector<8x128xf32>
    %266 = arith.addf %264, %265 : vector<8x128xf32>
    %267 = arith.negf %266 : vector<8x128xf32>
    %268 = math.exp %267 : vector<8x128xf32>
    %cst_79 = arith.constant 1.000000e+00 : f32
    %269 = vector.broadcast %cst_79 : f32 to vector<8x128xf32>
    %270 = arith.addf %269, %268 : vector<8x128xf32>
    %271 = arith.divf %269, %270 : vector<8x128xf32>
    %272 = vector.extract_strided_slice %263 {offsets = [0, 128], sizes = [8, 128], strides = [1, 1]} : vector<8x384xf32> to vector<8x128xf32>
    %273 = vector.extract_strided_slice %236 {offsets = [0, 128], sizes = [8, 128], strides = [1, 1]} : vector<8x384xf32> to vector<8x128xf32>
    %274 = arith.addf %272, %273 : vector<8x128xf32>
    %275 = arith.negf %274 : vector<8x128xf32>
    %276 = math.exp %275 : vector<8x128xf32>
    %cst_80 = arith.constant 1.000000e+00 : f32
    %277 = vector.broadcast %cst_80 : f32 to vector<8x128xf32>
    %278 = arith.addf %277, %276 : vector<8x128xf32>
    %279 = arith.divf %277, %278 : vector<8x128xf32>
    %280 = vector.extract_strided_slice %263 {offsets = [0, 256], sizes = [8, 128], strides = [1, 1]} : vector<8x384xf32> to vector<8x128xf32>
    %281 = vector.extract_strided_slice %236 {offsets = [0, 256], sizes = [8, 128], strides = [1, 1]} : vector<8x384xf32> to vector<8x128xf32>
    %282 = arith.addf %281, %15 : vector<8x128xf32>
    %283 = arith.mulf %271, %282 : vector<8x128xf32>
    %284 = arith.addf %280, %283 : vector<8x128xf32>
    %285 = math.tanh %284 : vector<8x128xf32>
    %286 = arith.subf %228, %285 : vector<8x128xf32>
    %287 = arith.mulf %279, %286 : vector<8x128xf32>
    %288 = arith.addf %285, %287 : vector<8x128xf32>
    %289 = arith.truncf %262 : vector<8x128xf32> to vector<8x128xbf16>
    %c0_81 = arith.constant 0 : index
    %c0_82 = arith.constant 0 : index
    %290 = vector.load %arg3[%c0_81, %c0_82] : memref<128x384xbf16, #tpu.memory_space<vmem>>, vector<128x384xbf16>
    %cst_83 = arith.constant dense<0.000000e+00> : vector<8x384xf32>
    %291 = tpu.matmul %289, %290, %cst_83 {dimension_numbers = #tpu.dot_dimension_numbers<[1], [0], [0], [1], [0, 0, 1, 1], [], []>} : vector<8x128xbf16>, vector<128x384xbf16>, vector<8x384xf32> -> vector<8x384xf32>
    %c0_84 = arith.constant 0 : index
    %c0_85 = arith.constant 0 : index
    %292 = vector.load %arg6[%c0_84, %c0_85] : memref<128x384xbf16, #tpu.memory_space<vmem>>, vector<128x384xbf16>
    %cst_86 = arith.constant dense<0.000000e+00> : vector<8x384xf32>
    %293 = tpu.matmul %289, %292, %cst_86 {dimension_numbers = #tpu.dot_dimension_numbers<[1], [0], [0], [1], [0, 0, 1, 1], [], []>} : vector<8x128xbf16>, vector<128x384xbf16>, vector<8x384xf32> -> vector<8x384xf32>
    %294 = arith.truncf %288 : vector<8x128xf32> to vector<8x128xbf16>
    %c0_87 = arith.constant 0 : index
    %c0_88 = arith.constant 0 : index
    %295 = vector.load %arg7[%c0_87, %c0_88] : memref<128x384xbf16, #tpu.memory_space<vmem>>, vector<128x384xbf16>
    %cst_89 = arith.constant dense<0.000000e+00> : vector<8x384xf32>
    %296 = tpu.matmul %294, %295, %cst_89 {dimension_numbers = #tpu.dot_dimension_numbers<[1], [0], [0], [1], [0, 0, 1, 1], [], []>} : vector<8x128xbf16>, vector<128x384xbf16>, vector<8x384xf32> -> vector<8x384xf32>
    %c40 = arith.constant 40 : index
    %c0_90 = arith.constant 0 : index
    %297 = vector.load %arg14[%c40, %c0_90] : memref<64x384xf32, #tpu.memory_space<vmem>>, vector<8x384xf32>
    %298 = vector.extract_strided_slice %297 {offsets = [0, 0], sizes = [8, 128], strides = [1, 1]} : vector<8x384xf32> to vector<8x128xf32>
    %299 = vector.extract_strided_slice %291 {offsets = [0, 0], sizes = [8, 128], strides = [1, 1]} : vector<8x384xf32> to vector<8x128xf32>
    %300 = arith.addf %298, %299 : vector<8x128xf32>
    %301 = arith.negf %300 : vector<8x128xf32>
    %302 = math.exp %301 : vector<8x128xf32>
    %cst_91 = arith.constant 1.000000e+00 : f32
    %303 = vector.broadcast %cst_91 : f32 to vector<8x128xf32>
    %304 = arith.addf %303, %302 : vector<8x128xf32>
    %305 = arith.divf %303, %304 : vector<8x128xf32>
    %306 = vector.extract_strided_slice %297 {offsets = [0, 128], sizes = [8, 128], strides = [1, 1]} : vector<8x384xf32> to vector<8x128xf32>
    %307 = vector.extract_strided_slice %291 {offsets = [0, 128], sizes = [8, 128], strides = [1, 1]} : vector<8x384xf32> to vector<8x128xf32>
    %308 = arith.addf %306, %307 : vector<8x128xf32>
    %309 = arith.negf %308 : vector<8x128xf32>
    %310 = math.exp %309 : vector<8x128xf32>
    %cst_92 = arith.constant 1.000000e+00 : f32
    %311 = vector.broadcast %cst_92 : f32 to vector<8x128xf32>
    %312 = arith.addf %311, %310 : vector<8x128xf32>
    %313 = arith.divf %311, %312 : vector<8x128xf32>
    %314 = vector.extract_strided_slice %297 {offsets = [0, 256], sizes = [8, 128], strides = [1, 1]} : vector<8x384xf32> to vector<8x128xf32>
    %315 = vector.extract_strided_slice %291 {offsets = [0, 256], sizes = [8, 128], strides = [1, 1]} : vector<8x384xf32> to vector<8x128xf32>
    %316 = arith.addf %315, %9 : vector<8x128xf32>
    %317 = arith.mulf %305, %316 : vector<8x128xf32>
    %318 = arith.addf %314, %317 : vector<8x128xf32>
    %319 = math.tanh %318 : vector<8x128xf32>
    %320 = arith.subf %262, %319 : vector<8x128xf32>
    %321 = arith.mulf %313, %320 : vector<8x128xf32>
    %322 = arith.addf %319, %321 : vector<8x128xf32>
    %323 = arith.addf %293, %12 : vector<8x384xf32>
    %324 = vector.extract_strided_slice %323 {offsets = [0, 0], sizes = [8, 128], strides = [1, 1]} : vector<8x384xf32> to vector<8x128xf32>
    %325 = vector.extract_strided_slice %296 {offsets = [0, 0], sizes = [8, 128], strides = [1, 1]} : vector<8x384xf32> to vector<8x128xf32>
    %326 = arith.addf %324, %325 : vector<8x128xf32>
    %327 = arith.negf %326 : vector<8x128xf32>
    %328 = math.exp %327 : vector<8x128xf32>
    %cst_93 = arith.constant 1.000000e+00 : f32
    %329 = vector.broadcast %cst_93 : f32 to vector<8x128xf32>
    %330 = arith.addf %329, %328 : vector<8x128xf32>
    %331 = arith.divf %329, %330 : vector<8x128xf32>
    %332 = vector.extract_strided_slice %323 {offsets = [0, 128], sizes = [8, 128], strides = [1, 1]} : vector<8x384xf32> to vector<8x128xf32>
    %333 = vector.extract_strided_slice %296 {offsets = [0, 128], sizes = [8, 128], strides = [1, 1]} : vector<8x384xf32> to vector<8x128xf32>
    %334 = arith.addf %332, %333 : vector<8x128xf32>
    %335 = arith.negf %334 : vector<8x128xf32>
    %336 = math.exp %335 : vector<8x128xf32>
    %cst_94 = arith.constant 1.000000e+00 : f32
    %337 = vector.broadcast %cst_94 : f32 to vector<8x128xf32>
    %338 = arith.addf %337, %336 : vector<8x128xf32>
    %339 = arith.divf %337, %338 : vector<8x128xf32>
    %340 = vector.extract_strided_slice %323 {offsets = [0, 256], sizes = [8, 128], strides = [1, 1]} : vector<8x384xf32> to vector<8x128xf32>
    %341 = vector.extract_strided_slice %296 {offsets = [0, 256], sizes = [8, 128], strides = [1, 1]} : vector<8x384xf32> to vector<8x128xf32>
    %342 = arith.addf %341, %15 : vector<8x128xf32>
    %343 = arith.mulf %331, %342 : vector<8x128xf32>
    %344 = arith.addf %340, %343 : vector<8x128xf32>
    %345 = math.tanh %344 : vector<8x128xf32>
    %346 = arith.subf %288, %345 : vector<8x128xf32>
    %347 = arith.mulf %339, %346 : vector<8x128xf32>
    %348 = arith.addf %345, %347 : vector<8x128xf32>
    %349 = arith.truncf %322 : vector<8x128xf32> to vector<8x128xbf16>
    %c0_95 = arith.constant 0 : index
    %c0_96 = arith.constant 0 : index
    %350 = vector.load %arg3[%c0_95, %c0_96] : memref<128x384xbf16, #tpu.memory_space<vmem>>, vector<128x384xbf16>
    %cst_97 = arith.constant dense<0.000000e+00> : vector<8x384xf32>
    %351 = tpu.matmul %349, %350, %cst_97 {dimension_numbers = #tpu.dot_dimension_numbers<[1], [0], [0], [1], [0, 0, 1, 1], [], []>} : vector<8x128xbf16>, vector<128x384xbf16>, vector<8x384xf32> -> vector<8x384xf32>
    %c0_98 = arith.constant 0 : index
    %c0_99 = arith.constant 0 : index
    %352 = vector.load %arg6[%c0_98, %c0_99] : memref<128x384xbf16, #tpu.memory_space<vmem>>, vector<128x384xbf16>
    %cst_100 = arith.constant dense<0.000000e+00> : vector<8x384xf32>
    %353 = tpu.matmul %349, %352, %cst_100 {dimension_numbers = #tpu.dot_dimension_numbers<[1], [0], [0], [1], [0, 0, 1, 1], [], []>} : vector<8x128xbf16>, vector<128x384xbf16>, vector<8x384xf32> -> vector<8x384xf32>
    %354 = arith.truncf %348 : vector<8x128xf32> to vector<8x128xbf16>
    %c0_101 = arith.constant 0 : index
    %c0_102 = arith.constant 0 : index
    %355 = vector.load %arg7[%c0_101, %c0_102] : memref<128x384xbf16, #tpu.memory_space<vmem>>, vector<128x384xbf16>
    %cst_103 = arith.constant dense<0.000000e+00> : vector<8x384xf32>
    %356 = tpu.matmul %354, %355, %cst_103 {dimension_numbers = #tpu.dot_dimension_numbers<[1], [0], [0], [1], [0, 0, 1, 1], [], []>} : vector<8x128xbf16>, vector<128x384xbf16>, vector<8x384xf32> -> vector<8x384xf32>
    %c48 = arith.constant 48 : index
    %c0_104 = arith.constant 0 : index
    %357 = vector.load %arg14[%c48, %c0_104] : memref<64x384xf32, #tpu.memory_space<vmem>>, vector<8x384xf32>
    %358 = vector.extract_strided_slice %357 {offsets = [0, 0], sizes = [8, 128], strides = [1, 1]} : vector<8x384xf32> to vector<8x128xf32>
    %359 = vector.extract_strided_slice %351 {offsets = [0, 0], sizes = [8, 128], strides = [1, 1]} : vector<8x384xf32> to vector<8x128xf32>
    %360 = arith.addf %358, %359 : vector<8x128xf32>
    %361 = arith.negf %360 : vector<8x128xf32>
    %362 = math.exp %361 : vector<8x128xf32>
    %cst_105 = arith.constant 1.000000e+00 : f32
    %363 = vector.broadcast %cst_105 : f32 to vector<8x128xf32>
    %364 = arith.addf %363, %362 : vector<8x128xf32>
    %365 = arith.divf %363, %364 : vector<8x128xf32>
    %366 = vector.extract_strided_slice %357 {offsets = [0, 128], sizes = [8, 128], strides = [1, 1]} : vector<8x384xf32> to vector<8x128xf32>
    %367 = vector.extract_strided_slice %351 {offsets = [0, 128], sizes = [8, 128], strides = [1, 1]} : vector<8x384xf32> to vector<8x128xf32>
    %368 = arith.addf %366, %367 : vector<8x128xf32>
    %369 = arith.negf %368 : vector<8x128xf32>
    %370 = math.exp %369 : vector<8x128xf32>
    %cst_106 = arith.constant 1.000000e+00 : f32
    %371 = vector.broadcast %cst_106 : f32 to vector<8x128xf32>
    %372 = arith.addf %371, %370 : vector<8x128xf32>
    %373 = arith.divf %371, %372 : vector<8x128xf32>
    %374 = vector.extract_strided_slice %357 {offsets = [0, 256], sizes = [8, 128], strides = [1, 1]} : vector<8x384xf32> to vector<8x128xf32>
    %375 = vector.extract_strided_slice %351 {offsets = [0, 256], sizes = [8, 128], strides = [1, 1]} : vector<8x384xf32> to vector<8x128xf32>
    %376 = arith.addf %375, %9 : vector<8x128xf32>
    %377 = arith.mulf %365, %376 : vector<8x128xf32>
    %378 = arith.addf %374, %377 : vector<8x128xf32>
    %379 = math.tanh %378 : vector<8x128xf32>
    %380 = arith.subf %322, %379 : vector<8x128xf32>
    %381 = arith.mulf %373, %380 : vector<8x128xf32>
    %382 = arith.addf %379, %381 : vector<8x128xf32>
    %383 = arith.addf %353, %12 : vector<8x384xf32>
    %384 = vector.extract_strided_slice %383 {offsets = [0, 0], sizes = [8, 128], strides = [1, 1]} : vector<8x384xf32> to vector<8x128xf32>
    %385 = vector.extract_strided_slice %356 {offsets = [0, 0], sizes = [8, 128], strides = [1, 1]} : vector<8x384xf32> to vector<8x128xf32>
    %386 = arith.addf %384, %385 : vector<8x128xf32>
    %387 = arith.negf %386 : vector<8x128xf32>
    %388 = math.exp %387 : vector<8x128xf32>
    %cst_107 = arith.constant 1.000000e+00 : f32
    %389 = vector.broadcast %cst_107 : f32 to vector<8x128xf32>
    %390 = arith.addf %389, %388 : vector<8x128xf32>
    %391 = arith.divf %389, %390 : vector<8x128xf32>
    %392 = vector.extract_strided_slice %383 {offsets = [0, 128], sizes = [8, 128], strides = [1, 1]} : vector<8x384xf32> to vector<8x128xf32>
    %393 = vector.extract_strided_slice %356 {offsets = [0, 128], sizes = [8, 128], strides = [1, 1]} : vector<8x384xf32> to vector<8x128xf32>
    %394 = arith.addf %392, %393 : vector<8x128xf32>
    %395 = arith.negf %394 : vector<8x128xf32>
    %396 = math.exp %395 : vector<8x128xf32>
    %cst_108 = arith.constant 1.000000e+00 : f32
    %397 = vector.broadcast %cst_108 : f32 to vector<8x128xf32>
    %398 = arith.addf %397, %396 : vector<8x128xf32>
    %399 = arith.divf %397, %398 : vector<8x128xf32>
    %400 = vector.extract_strided_slice %383 {offsets = [0, 256], sizes = [8, 128], strides = [1, 1]} : vector<8x384xf32> to vector<8x128xf32>
    %401 = vector.extract_strided_slice %356 {offsets = [0, 256], sizes = [8, 128], strides = [1, 1]} : vector<8x384xf32> to vector<8x128xf32>
    %402 = arith.addf %401, %15 : vector<8x128xf32>
    %403 = arith.mulf %391, %402 : vector<8x128xf32>
    %404 = arith.addf %400, %403 : vector<8x128xf32>
    %405 = math.tanh %404 : vector<8x128xf32>
    %406 = arith.subf %348, %405 : vector<8x128xf32>
    %407 = arith.mulf %399, %406 : vector<8x128xf32>
    %408 = arith.addf %405, %407 : vector<8x128xf32>
    %409 = arith.truncf %382 : vector<8x128xf32> to vector<8x128xbf16>
    %c0_109 = arith.constant 0 : index
    %c0_110 = arith.constant 0 : index
    %410 = vector.load %arg3[%c0_109, %c0_110] : memref<128x384xbf16, #tpu.memory_space<vmem>>, vector<128x384xbf16>
    %cst_111 = arith.constant dense<0.000000e+00> : vector<8x384xf32>
    %411 = tpu.matmul %409, %410, %cst_111 {dimension_numbers = #tpu.dot_dimension_numbers<[1], [0], [0], [1], [0, 0, 1, 1], [], []>} : vector<8x128xbf16>, vector<128x384xbf16>, vector<8x384xf32> -> vector<8x384xf32>
    %c0_112 = arith.constant 0 : index
    %c0_113 = arith.constant 0 : index
    %412 = vector.load %arg6[%c0_112, %c0_113] : memref<128x384xbf16, #tpu.memory_space<vmem>>, vector<128x384xbf16>
    %cst_114 = arith.constant dense<0.000000e+00> : vector<8x384xf32>
    %413 = tpu.matmul %409, %412, %cst_114 {dimension_numbers = #tpu.dot_dimension_numbers<[1], [0], [0], [1], [0, 0, 1, 1], [], []>} : vector<8x128xbf16>, vector<128x384xbf16>, vector<8x384xf32> -> vector<8x384xf32>
    %414 = arith.truncf %408 : vector<8x128xf32> to vector<8x128xbf16>
    %c0_115 = arith.constant 0 : index
    %c0_116 = arith.constant 0 : index
    %415 = vector.load %arg7[%c0_115, %c0_116] : memref<128x384xbf16, #tpu.memory_space<vmem>>, vector<128x384xbf16>
    %cst_117 = arith.constant dense<0.000000e+00> : vector<8x384xf32>
    %416 = tpu.matmul %414, %415, %cst_117 {dimension_numbers = #tpu.dot_dimension_numbers<[1], [0], [0], [1], [0, 0, 1, 1], [], []>} : vector<8x128xbf16>, vector<128x384xbf16>, vector<8x384xf32> -> vector<8x384xf32>
    %c56 = arith.constant 56 : index
    %c0_118 = arith.constant 0 : index
    %417 = vector.load %arg14[%c56, %c0_118] : memref<64x384xf32, #tpu.memory_space<vmem>>, vector<8x384xf32>
    %418 = vector.extract_strided_slice %417 {offsets = [0, 0], sizes = [8, 128], strides = [1, 1]} : vector<8x384xf32> to vector<8x128xf32>
    %419 = vector.extract_strided_slice %411 {offsets = [0, 0], sizes = [8, 128], strides = [1, 1]} : vector<8x384xf32> to vector<8x128xf32>
    %420 = arith.addf %418, %419 : vector<8x128xf32>
    %421 = arith.negf %420 : vector<8x128xf32>
    %422 = math.exp %421 : vector<8x128xf32>
    %cst_119 = arith.constant 1.000000e+00 : f32
    %423 = vector.broadcast %cst_119 : f32 to vector<8x128xf32>
    %424 = arith.addf %423, %422 : vector<8x128xf32>
    %425 = arith.divf %423, %424 : vector<8x128xf32>
    %426 = vector.extract_strided_slice %417 {offsets = [0, 128], sizes = [8, 128], strides = [1, 1]} : vector<8x384xf32> to vector<8x128xf32>
    %427 = vector.extract_strided_slice %411 {offsets = [0, 128], sizes = [8, 128], strides = [1, 1]} : vector<8x384xf32> to vector<8x128xf32>
    %428 = arith.addf %426, %427 : vector<8x128xf32>
    %429 = arith.negf %428 : vector<8x128xf32>
    %430 = math.exp %429 : vector<8x128xf32>
    %cst_120 = arith.constant 1.000000e+00 : f32
    %431 = vector.broadcast %cst_120 : f32 to vector<8x128xf32>
    %432 = arith.addf %431, %430 : vector<8x128xf32>
    %433 = arith.divf %431, %432 : vector<8x128xf32>
    %434 = vector.extract_strided_slice %417 {offsets = [0, 256], sizes = [8, 128], strides = [1, 1]} : vector<8x384xf32> to vector<8x128xf32>
    %435 = vector.extract_strided_slice %411 {offsets = [0, 256], sizes = [8, 128], strides = [1, 1]} : vector<8x384xf32> to vector<8x128xf32>
    %436 = arith.addf %435, %9 : vector<8x128xf32>
    %437 = arith.mulf %425, %436 : vector<8x128xf32>
    %438 = arith.addf %434, %437 : vector<8x128xf32>
    %439 = math.tanh %438 : vector<8x128xf32>
    %440 = arith.subf %382, %439 : vector<8x128xf32>
    %441 = arith.mulf %433, %440 : vector<8x128xf32>
    %442 = arith.addf %439, %441 : vector<8x128xf32>
    %443 = arith.addf %413, %12 : vector<8x384xf32>
    %444 = vector.extract_strided_slice %443 {offsets = [0, 0], sizes = [8, 128], strides = [1, 1]} : vector<8x384xf32> to vector<8x128xf32>
    %445 = vector.extract_strided_slice %416 {offsets = [0, 0], sizes = [8, 128], strides = [1, 1]} : vector<8x384xf32> to vector<8x128xf32>
    %446 = arith.addf %444, %445 : vector<8x128xf32>
    %447 = arith.negf %446 : vector<8x128xf32>
    %448 = math.exp %447 : vector<8x128xf32>
    %cst_121 = arith.constant 1.000000e+00 : f32
    %449 = vector.broadcast %cst_121 : f32 to vector<8x128xf32>
    %450 = arith.addf %449, %448 : vector<8x128xf32>
    %451 = arith.divf %449, %450 : vector<8x128xf32>
    %452 = vector.extract_strided_slice %443 {offsets = [0, 128], sizes = [8, 128], strides = [1, 1]} : vector<8x384xf32> to vector<8x128xf32>
    %453 = vector.extract_strided_slice %416 {offsets = [0, 128], sizes = [8, 128], strides = [1, 1]} : vector<8x384xf32> to vector<8x128xf32>
    %454 = arith.addf %452, %453 : vector<8x128xf32>
    %455 = arith.negf %454 : vector<8x128xf32>
    %456 = math.exp %455 : vector<8x128xf32>
    %cst_122 = arith.constant 1.000000e+00 : f32
    %457 = vector.broadcast %cst_122 : f32 to vector<8x128xf32>
    %458 = arith.addf %457, %456 : vector<8x128xf32>
    %459 = arith.divf %457, %458 : vector<8x128xf32>
    %460 = vector.extract_strided_slice %443 {offsets = [0, 256], sizes = [8, 128], strides = [1, 1]} : vector<8x384xf32> to vector<8x128xf32>
    %461 = vector.extract_strided_slice %416 {offsets = [0, 256], sizes = [8, 128], strides = [1, 1]} : vector<8x384xf32> to vector<8x128xf32>
    %462 = arith.addf %461, %15 : vector<8x128xf32>
    %463 = arith.mulf %451, %462 : vector<8x128xf32>
    %464 = arith.addf %460, %463 : vector<8x128xf32>
    %465 = math.tanh %464 : vector<8x128xf32>
    %466 = arith.subf %408, %465 : vector<8x128xf32>
    %467 = arith.mulf %459, %466 : vector<8x128xf32>
    %468 = arith.addf %465, %467 : vector<8x128xf32>
    %469 = arith.truncf %442 : vector<8x128xf32> to vector<8x128xbf16>
    %c0_123 = arith.constant 0 : index
    %c0_124 = arith.constant 0 : index
    %470 = vector.load %arg6[%c0_123, %c0_124] : memref<128x384xbf16, #tpu.memory_space<vmem>>, vector<128x384xbf16>
    %cst_125 = arith.constant dense<0.000000e+00> : vector<8x384xf32>
    %471 = tpu.matmul %469, %470, %cst_125 {dimension_numbers = #tpu.dot_dimension_numbers<[1], [0], [0], [1], [0, 0, 1, 1], [], []>} : vector<8x128xbf16>, vector<128x384xbf16>, vector<8x384xf32> -> vector<8x384xf32>
    %472 = arith.truncf %468 : vector<8x128xf32> to vector<8x128xbf16>
    %c0_126 = arith.constant 0 : index
    %c0_127 = arith.constant 0 : index
    %473 = vector.load %arg7[%c0_126, %c0_127] : memref<128x384xbf16, #tpu.memory_space<vmem>>, vector<128x384xbf16>
    %cst_128 = arith.constant dense<0.000000e+00> : vector<8x384xf32>
    %474 = tpu.matmul %472, %473, %cst_128 {dimension_numbers = #tpu.dot_dimension_numbers<[1], [0], [0], [1], [0, 0, 1, 1], [], []>} : vector<8x128xbf16>, vector<128x384xbf16>, vector<8x384xf32> -> vector<8x384xf32>
    %475 = arith.addf %471, %12 : vector<8x384xf32>
    %476 = vector.extract_strided_slice %475 {offsets = [0, 0], sizes = [8, 128], strides = [1, 1]} : vector<8x384xf32> to vector<8x128xf32>
    %477 = vector.extract_strided_slice %474 {offsets = [0, 0], sizes = [8, 128], strides = [1, 1]} : vector<8x384xf32> to vector<8x128xf32>
    %478 = arith.addf %476, %477 : vector<8x128xf32>
    %479 = arith.negf %478 : vector<8x128xf32>
    %480 = math.exp %479 : vector<8x128xf32>
    %cst_129 = arith.constant 1.000000e+00 : f32
    %481 = vector.broadcast %cst_129 : f32 to vector<8x128xf32>
    %482 = arith.addf %481, %480 : vector<8x128xf32>
    %483 = arith.divf %481, %482 : vector<8x128xf32>
    %484 = vector.extract_strided_slice %475 {offsets = [0, 128], sizes = [8, 128], strides = [1, 1]} : vector<8x384xf32> to vector<8x128xf32>
    %485 = vector.extract_strided_slice %474 {offsets = [0, 128], sizes = [8, 128], strides = [1, 1]} : vector<8x384xf32> to vector<8x128xf32>
    %486 = arith.addf %484, %485 : vector<8x128xf32>
    %487 = arith.negf %486 : vector<8x128xf32>
    %488 = math.exp %487 : vector<8x128xf32>
    %cst_130 = arith.constant 1.000000e+00 : f32
    %489 = vector.broadcast %cst_130 : f32 to vector<8x128xf32>
    %490 = arith.addf %489, %488 : vector<8x128xf32>
    %491 = arith.divf %489, %490 : vector<8x128xf32>
    %492 = vector.extract_strided_slice %475 {offsets = [0, 256], sizes = [8, 128], strides = [1, 1]} : vector<8x384xf32> to vector<8x128xf32>
    %493 = vector.extract_strided_slice %474 {offsets = [0, 256], sizes = [8, 128], strides = [1, 1]} : vector<8x384xf32> to vector<8x128xf32>
    %494 = arith.addf %493, %15 : vector<8x128xf32>
    %495 = arith.mulf %483, %494 : vector<8x128xf32>
    %496 = arith.addf %492, %495 : vector<8x128xf32>
    %497 = math.tanh %496 : vector<8x128xf32>
    %498 = arith.subf %468, %497 : vector<8x128xf32>
    %499 = arith.mulf %491, %498 : vector<8x128xf32>
    %500 = arith.addf %497, %499 : vector<8x128xf32>
    %501 = arith.truncf %500 : vector<8x128xf32> to vector<8x128xbf16>
    %c0_131 = arith.constant 0 : index
    %c0_132 = arith.constant 0 : index
    %502 = vector.load %arg10[%c0_131, %c0_132] : memref<128x128xbf16, #tpu.memory_space<vmem>>, vector<128x128xbf16>
    %cst_133 = arith.constant dense<0.000000e+00> : vector<8x128xf32>
    %503 = tpu.matmul %501, %502, %cst_133 {dimension_numbers = #tpu.dot_dimension_numbers<[1], [0], [0], [1], [0, 0, 1, 1], [], []>} : vector<8x128xbf16>, vector<128x128xbf16>, vector<8x128xf32> -> vector<8x128xf32>
    %c0_134 = arith.constant 0 : index
    %c0_135 = arith.constant 0 : index
    %504 = vector.load %arg11[%c0_134, %c0_135] : memref<1x128xf32, #tpu.memory_space<vmem>>, vector<1x128xf32>
    %505 = vector.broadcast %504 : vector<1x128xf32> to vector<8x128xf32>
    %506 = arith.addf %503, %505 : vector<8x128xf32>
    %c0_136 = arith.constant 0 : index
    %c0_137 = arith.constant 0 : index
    %507 = vector.load %arg12[%c0_136, %c0_137] : memref<8x128xf32, #tpu.memory_space<vmem>>, vector<8x128xf32>
    tpu.vector_store %arg12[%c0_136, %c0_137], %506 {strides = array<i32>} : memref<8x128xf32, #tpu.memory_space<vmem>>, vector<8x128xf32>,
    %c0_138 = arith.constant 0 : index
    %c0_139 = arith.constant 0 : index
    %c0_140 = arith.constant 0 : index
    %508 = vector.load %arg13[%c0_138, %c0_139, %c0_140] : memref<2x8x128xf32, #tpu.memory_space<vmem>>, vector<1x8x128xf32>
    %509 = vector.shape_cast %508 : vector<1x8x128xf32> to vector<8x128xf32>
    %510 = vector.shape_cast %442 : vector<8x128xf32> to vector<1x8x128xf32>
    tpu.vector_store %arg13[%c0_138, %c0_139, %c0_140], %510 {strides = array<i32>} : memref<2x8x128xf32, #tpu.memory_space<vmem>>, vector<1x8x128xf32>,
    %c1_141 = arith.constant 1 : index
    %c0_142 = arith.constant 0 : index
    %c0_143 = arith.constant 0 : index
    %511 = vector.load %arg13[%c1_141, %c0_142, %c0_143] : memref<2x8x128xf32, #tpu.memory_space<vmem>>, vector<1x8x128xf32>
    %512 = vector.shape_cast %511 : vector<1x8x128xf32> to vector<8x128xf32>
    %513 = vector.shape_cast %500 : vector<8x128xf32> to vector<1x8x128xf32>
    tpu.vector_store %arg13[%c1_141, %c0_142, %c0_143], %513 {strides = array<i32>} : memref<2x8x128xf32, #tpu.memory_space<vmem>>, vector<1x8x128xf32>,
    return
  }
}

</mosaic_0001>

<llo_original>
// kernel: tpu_custom_call.1
$region0: #{tpu_custom_call.1}
  #allocation0 [shape = 'u32[]', space=smem, size = 0x4, offset = 0x4, fixed_abs, tag = 'smem constant byte address 0x4 - core index']
  #allocation1 [shape = 'u32[144,128]{1,0:T(1,128)}', space=vmem, size = 0x12000, scoped, tag = 'internal scratch']
  #allocation2 [shape = 'f32[64,384]{1,0:T(8,128)}', space=vmem, size = 0x18000, scoped, tag = 'scratch operand']
  %s0 = inlined_call_operand.hbm [shape: bf16[64,128], index: 0, kind: input, shape index: {}]
  %s1 = inlined_call_operand.hbm [shape: f32[2,8,128], index: 1, kind: input, shape index: {}]
  %s2 = inlined_call_operand.hbm [shape: bf16[128,384], index: 2, kind: input, shape index: {}]
  %s3 = inlined_call_operand.hbm [shape: bf16[128,384], index: 3, kind: input, shape index: {}]
  %s4 = inlined_call_operand.vmem [shape: f32[1,384], index: 4, kind: input, shape index: {}]
  %s5 = inlined_call_operand.vmem [shape: f32[1,128], index: 5, kind: input, shape index: {}]
  %s6 = inlined_call_operand.hbm [shape: bf16[128,384], index: 6, kind: input, shape index: {}]
  %s7 = inlined_call_operand.hbm [shape: bf16[128,384], index: 7, kind: input, shape index: {}]
  %s8 = inlined_call_operand.vmem [shape: f32[1,384], index: 8, kind: input, shape index: {}]
  %s9 = inlined_call_operand.vmem [shape: f32[1,128], index: 9, kind: input, shape index: {}]
  %s10 = inlined_call_operand.hbm [shape: bf16[128,128], index: 10, kind: input, shape index: {}]
  %s11 = inlined_call_operand.vmem [shape: f32[1,128], index: 11, kind: input, shape index: {}]
  %s12 = inlined_call_operand.hbm [shape: f32[8,128], index: 12, kind: output, shape index: {0}]
  %s13 = inlined_call_operand.hbm [shape: f32[2,8,128], index: 13, kind: output, shape index: {1}]
  %14 = xla_tuple %s12, %s13
  %s15 = sld [smem:[#allocation0]]
  $region94: #{tpu_custom_call.1} parent=0
    _
  %s17 = ssub.s32 1, %s15
  %s18 = scalar_select 0, %s17, %s15
  $region1: #{tpu_custom_call.1} parent=0
    #allocation3 [shape = 'u8[16384]{0}', space=vmem, size = 0x4000, scoped, tag = 'input window, operand 0, single buffered']
    #allocation4 [shape = 's32[1]{0}', space=sflag, size = 0x4, scoped, tag = 'scoped memory for tpu_custom_call.1']
    #allocation5 [shape = 's32[1]{0}', space=sflag, size = 0x4, scoped, tag = 'scoped memory for tpu_custom_call.1']
    #allocation6 [shape = 'u8[8192]{0}', space=vmem, size = 0x2000, scoped, tag = 'input window, operand 1, single buffered']
    #allocation7 [shape = 's32[1]{0}', space=sflag, size = 0x4, scoped, tag = 'scoped memory for tpu_custom_call.1']
    #allocation8 [shape = 'u8[98304]{0}', space=vmem, size = 0x18000, scoped, tag = 'input window, operand 2, single buffered']
    #allocation9 [shape = 'u8[98304]{0}', space=vmem, size = 0x18000, scoped, tag = 'input window, operand 3, single buffered']
    #allocation10 [shape = 's32[1]{0}', space=sflag, size = 0x4, scoped, tag = 'scoped memory for tpu_custom_call.1']
    #allocation11 [shape = 'u8[98304]{0}', space=vmem, size = 0x18000, scoped, tag = 'input window, operand 6, single buffered']
    #allocation12 [shape = 'u8[98304]{0}', space=vmem, size = 0x18000, scoped, tag = 'input window, operand 7, single buffered']
    #allocation13 [shape = 's32[1]{0}', space=sflag, size = 0x4, scoped, tag = 'scoped memory for tpu_custom_call.1']
    #allocation14 [shape = 'u8[32768]{0}', space=vmem, size = 0x8000, scoped, tag = 'input window, operand 10, single buffered']
    #allocation15 [shape = 'u8[4096]{0}', space=vmem, size = 0x1000, scoped, tag = 'output window, operand 0, single buffered']
    #allocation16 [shape = 'u8[8192]{0}', space=vmem, size = 0x2000, scoped, tag = 'output window, operand 1, single buffered']
    #allocation17 [shape = 's32[1]{0}', space=sflag, size = 0x4, scoped, tag = 'scoped memory for tpu_custom_call.1']
    %19 = vsyncpa [#allocation4], 0
    %20 = vsyncpa [#allocation7], 0
    %21 = vsyncpa [#allocation10], 0
    %22 = vsyncpa [#allocation13], 0
    %23 = vsyncpa [#allocation5], 0
    %24 = vsyncpa [#allocation17], 0
    // Predicated region
    $region2: #{tpu_custom_call.1} parent=1 // pred_check
      _
    $region3: #{tpu_custom_call.1} parent=1 // pred_check_branch
      %26 = sbr.rel (0) target = $region5
    $region4: #{tpu_custom_call.1} parent=1 // pred_region
      %s28 = ssub.s32 512, 512
      %29 = vsyncadd [#allocation4], %s28
      %s30 = sshll.u32 [#allocation3], 4
      %s31 = int_to_ptr.vmem [resolvable:$true] %s30
      %36 = dma.hbm_to_vmem [thread:$0]  %s0, 512, %s31, [#allocation4], 64, 64, 4
    $region5: #{tpu_custom_call.1} parent=1 // pred_fallthru
      _
    // Predicated region
    $region6: #{tpu_custom_call.1} parent=1 // pred_check
      _
    $region7: #{tpu_custom_call.1} parent=1 // pred_check_branch
      %38 = sbr.rel (0) target = $region9
    $region8: #{tpu_custom_call.1} parent=1 // pred_region
      %s40 = ssub.s32 256, 256
      %41 = vsyncadd [#allocation7], %s40
      %s42 = sshll.u32 [#allocation6], 4
      %s43 = int_to_ptr.vmem [resolvable:$true] %s42
      %48 = dma.hbm_to_vmem [thread:$0]  %s1, 256, %s43, [#allocation7], 128, 128, 8
    $region9: #{tpu_custom_call.1} parent=1 // pred_fallthru
      _
    // Predicated region
    $region10: #{tpu_custom_call.1} parent=1 // pred_check
      _
    $region11: #{tpu_custom_call.1} parent=1 // pred_check_branch
      %50 = sbr.rel (0) target = $region13
    $region12: #{tpu_custom_call.1} parent=1 // pred_region
      %s52 = ssub.s32 3072, 3072
      %53 = vsyncadd [#allocation7], %s52
      %s54 = sshll.u32 [#allocation8], 4
      %s55 = int_to_ptr.vmem [resolvable:$true] %s54
      %60 = dma.hbm_to_vmem [thread:$0]  %s2, 3072, %s55, [#allocation7], 192, 192, 12
    $region13: #{tpu_custom_call.1} parent=1 // pred_fallthru
      _
    // Predicated region
    $region14: #{tpu_custom_call.1} parent=1 // pred_check
      _
    $region15: #{tpu_custom_call.1} parent=1 // pred_check_branch
      %62 = sbr.rel (0) target = $region17
    $region16: #{tpu_custom_call.1} parent=1 // pred_region
      %s64 = ssub.s32 3072, 3072
      %65 = vsyncadd [#allocation10], %s64
      %s66 = sshll.u32 [#allocation9], 4
      %s67 = int_to_ptr.vmem [resolvable:$true] %s66
      %72 = dma.hbm_to_vmem [thread:$0]  %s3, 3072, %s67, [#allocation10], 192, 192, 12
    $region17: #{tpu_custom_call.1} parent=1 // pred_fallthru
      _
    // Predicated region
    $region18: #{tpu_custom_call.1} parent=1 // pred_check
      _
    $region19: #{tpu_custom_call.1} parent=1 // pred_check_branch
      %74 = sbr.rel (0) target = $region21
    $region20: #{tpu_custom_call.1} parent=1 // pred_region
      _
    $region21: #{tpu_custom_call.1} parent=1 // pred_fallthru
      _
    // Predicated region
    $region22: #{tpu_custom_call.1} parent=1 // pred_check
      _
    $region23: #{tpu_custom_call.1} parent=1 // pred_check_branch
      %76 = sbr.rel (0) target = $region25
    $region24: #{tpu_custom_call.1} parent=1 // pred_region
      _
    $region25: #{tpu_custom_call.1} parent=1 // pred_fallthru
      _
    // Predicated region
    $region26: #{tpu_custom_call.1} parent=1 // pred_check
      _
    $region27: #{tpu_custom_call.1} parent=1 // pred_check_branch
      %78 = sbr.rel (0) target = $region29
    $region28: #{tpu_custom_call.1} parent=1 // pred_region
      %s80 = ssub.s32 3072, 3072
      %81 = vsyncadd [#allocation10], %s80
      %s82 = sshll.u32 [#allocation11], 4
      %s83 = int_to_ptr.vmem [resolvable:$true] %s82
      %88 = dma.hbm_to_vmem [thread:$0]  %s6, 3072, %s83, [#allocation10], 192, 192, 12
    $region29: #{tpu_custom_call.1} parent=1 // pred_fallthru
      _
    // Predicated region
    $region30: #{tpu_custom_call.1} parent=1 // pred_check
      _
    $region31: #{tpu_custom_call.1} parent=1 // pred_check_branch
      %90 = sbr.rel (0) target = $region33
    $region32: #{tpu_custom_call.1} parent=1 // pred_region
      %s92 = ssub.s32 3072, 3072
      %93 = vsyncadd [#allocation13], %s92
      %s94 = sshll.u32 [#allocation12], 4
      %s95 = int_to_ptr.vmem [resolvable:$true] %s94
      %100 = dma.hbm_to_vmem [thread:$0]  %s7, 3072, %s95, [#allocation13], 192, 192, 12
    $region33: #{tpu_custom_call.1} parent=1 // pred_fallthru
      _
    // Predicated region
    $region34: #{tpu_custom_call.1} parent=1 // pred_check
      _
    $region35: #{tpu_custom_call.1} parent=1 // pred_check_branch
      %102 = sbr.rel (0) target = $region37
    $region36: #{tpu_custom_call.1} parent=1 // pred_region
      _
    $region37: #{tpu_custom_call.1} parent=1 // pred_fallthru
      _
    // Predicated region
    $region38: #{tpu_custom_call.1} parent=1 // pred_check
      _
    $region39: #{tpu_custom_call.1} parent=1 // pred_check_branch
      %104 = sbr.rel (0) target = $region41
    $region40: #{tpu_custom_call.1} parent=1 // pred_region
      _
    $region41: #{tpu_custom_call.1} parent=1 // pred_fallthru
      _
    // Predicated region
    $region42: #{tpu_custom_call.1} parent=1 // pred_check
      _
    $region43: #{tpu_custom_call.1} parent=1 // pred_check_branch
      %106 = sbr.rel (0) target = $region45
    $region44: #{tpu_custom_call.1} parent=1 // pred_region
      %s108 = ssub.s32 1024, 1024
      %109 = vsyncadd [#allocation13], %s108
      %s110 = sshll.u32 [#allocation14], 4
      %s111 = int_to_ptr.vmem [resolvable:$true] %s110
      %116 = dma.hbm_to_vmem [thread:$0]  %s10, 1024, %s111, [#allocation13], 64, 64, 4
    $region45: #{tpu_custom_call.1} parent=1 // pred_fallthru
      _
    // Predicated region
    $region46: #{tpu_custom_call.1} parent=1 // pred_check
      _
    $region47: #{tpu_custom_call.1} parent=1 // pred_check_branch
      %118 = sbr.rel (0) target = $region49
    $region48: #{tpu_custom_call.1} parent=1 // pred_region
      _
    $region49: #{tpu_custom_call.1} parent=1 // pred_fallthru
      _
    // Predicated region
    $region50: #{tpu_custom_call.1} parent=1 // pred_check
      _
    $region51: #{tpu_custom_call.1} parent=1 // pred_check_branch
      %120 = sbr.rel (0) target = $region53
    $region52: #{tpu_custom_call.1} parent=1 // pred_region
      %121 = dma.done [#allocation4], 512
    $region53: #{tpu_custom_call.1} parent=1 // pred_fallthru
      _
    // Predicated region
    $region54: #{tpu_custom_call.1} parent=1 // pred_check
      _
    $region55: #{tpu_custom_call.1} parent=1 // pred_check_branch
      %123 = sbr.rel (0) target = $region57
    $region56: #{tpu_custom_call.1} parent=1 // pred_region
      %124 = dma.done [#allocation7], 256
    $region57: #{tpu_custom_call.1} parent=1 // pred_fallthru
      _
    // Predicated region
    $region58: #{tpu_custom_call.1} parent=1 // pred_check
      _
    $region59: #{tpu_custom_call.1} parent=1 // pred_check_branch
      %126 = sbr.rel (0) target = $region61
    $region60: #{tpu_custom_call.1} parent=1 // pred_region
      %127 = dma.done [#allocation7], 3072
    $region61: #{tpu_custom_call.1} parent=1 // pred_fallthru
      _
    // Predicated region
    $region62: #{tpu_custom_call.1} parent=1 // pred_check
      _
    $region63: #{tpu_custom_call.1} parent=1 // pred_check_branch
      %129 = sbr.rel (0) target = $region65
    $region64: #{tpu_custom_call.1} parent=1 // pred_region
      %130 = dma.done [#allocation10], 3072
    $region65: #{tpu_custom_call.1} parent=1 // pred_fallthru
      _
    // Predicated region
    $region66: #{tpu_custom_call.1} parent=1 // pred_check
      _
    $region67: #{tpu_custom_call.1} parent=1 // pred_check_branch
      %132 = sbr.rel (0) target = $region69
    $region68: #{tpu_custom_call.1} parent=1 // pred_region
      %133 = dma.done [#allocation10], 3072
    $region69: #{tpu_custom_call.1} parent=1 // pred_fallthru
      _
    // Predicated region
    $region70: #{tpu_custom_call.1} parent=1 // pred_check
      _
    $region71: #{tpu_custom_call.1} parent=1 // pred_check_branch
      %135 = sbr.rel (0) target = $region73
    $region72: #{tpu_custom_call.1} parent=1 // pred_region
      %136 = dma.done [#allocation13], 3072
    $region73: #{tpu_custom_call.1} parent=1 // pred_fallthru
      _
    // Predicated region
    $region74: #{tpu_custom_call.1} parent=1 // pred_check
      _
    $region75: #{tpu_custom_call.1} parent=1 // pred_check_branch
      %138 = sbr.rel (0) target = $region77
    $region76: #{tpu_custom_call.1} parent=1 // pred_region
      %139 = dma.done [#allocation13], 1024
    $region77: #{tpu_custom_call.1} parent=1 // pred_fallthru
      _
    %v141 = vld [vmem:[#allocation3] sm:$0xf]
    %v142 = vld [vmem:[#allocation3 + $0x4] sm:$0xf]
    %v143 = vld [vmem:[#allocation3 + $0x8] sm:$0xf]
    %v144 = vld [vmem:[#allocation3 + $0xc] sm:$0xf]
    %v145 = vld [vmem:[#allocation3 + $0x10] sm:$0xf]
    %v146 = vld [vmem:[#allocation3 + $0x14] sm:$0xf]
    %v147 = vld [vmem:[#allocation3 + $0x18] sm:$0xf]
    %v148 = vld [vmem:[#allocation3 + $0x1c] sm:$0xf]
    %v149 = vld [vmem:[#allocation8] sm:$0xff]
    %v150 = vld [vmem:[#allocation8 + $0x8] sm:$0xf]
    %v151 = vld [vmem:[#allocation8 + $0xc] sm:$0xff]
    %v152 = vld [vmem:[#allocation8 + $0x14] sm:$0xf]
    %v153 = vld [vmem:[#allocation8 + $0x18] sm:$0xff]
    %v154 = vld [vmem:[#allocation8 + $0x20] sm:$0xf]
    %v155 = vld [vmem:[#allocation8 + $0x24] sm:$0xff]
    %v156 = vld [vmem:[#allocation8 + $0x2c] sm:$0xf]
    %v157 = vld [vmem:[#allocation8 + $0x30] sm:$0xff]
    %v158 = vld [vmem:[#allocation8 + $0x38] sm:$0xf]
    %v159 = vld [vmem:[#allocation8 + $0x3c] sm:$0xff]
    %v160 = vld [vmem:[#allocation8 + $0x44] sm:$0xf]
    %v161 = vld [vmem:[#allocation8 + $0x48] sm:$0xff]
    %v162 = vld [vmem:[#allocation8 + $0x50] sm:$0xf]
    %v163 = vld [vmem:[#allocation8 + $0x54] sm:$0xff]
    %v164 = vld [vmem:[#allocation8 + $0x5c] sm:$0xf]
    %v165 = vld [vmem:[#allocation8 + $0x60] sm:$0xff]
    %v166 = vld [vmem:[#allocation8 + $0x68] sm:$0xf]
    %v167 = vld [vmem:[#allocation8 + $0x6c] sm:$0xff]
    %v168 = vld [vmem:[#allocation8 + $0x74] sm:$0xf]
    %v169 = vld [vmem:[#allocation8 + $0x78] sm:$0xff]
    %v170 = vld [vmem:[#allocation8 + $0x80] sm:$0xf]
    %v171 = vld [vmem:[#allocation8 + $0x84] sm:$0xff]
    %v172 = vld [vmem:[#allocation8 + $0x8c] sm:$0xf]
    %v173 = vld [vmem:[#allocation8 + $0x90] sm:$0xff]
    %v174 = vld [vmem:[#allocation8 + $0x98] sm:$0xf]
    %v175 = vld [vmem:[#allocation8 + $0x9c] sm:$0xff]
    %v176 = vld [vmem:[#allocation8 + $0xa4] sm:$0xf]
    %v177 = vld [vmem:[#allocation8 + $0xa8] sm:$0xff]
    %v178 = vld [vmem:[#allocation8 + $0xb0] sm:$0xf]
    %v179 = vld [vmem:[#allocation8 + $0xb4] sm:$0xff]
    %v180 = vld [vmem:[#allocation8 + $0xbc] sm:$0xf]
    %v181 = vld [vmem:[%s4] sm:$0x7]
    %v183 = vlaneseq
    %v184 = vshrl.u32 %v183, 7
    %v185 = vsub.s32 0, %v184
    %v186 = vrot.slane %v181, %v185
    %v187 = vlaneseq
    %v188 = vshrl.u32 %v187, 7
    %v189 = vsub.s32 1, %v188
    %v190 = vrot.slane %v181, %v189
    %v191 = vlaneseq
    %v192 = vshrl.u32 %v191, 7
    %v193 = vsub.s32 2, %v192
    %v194 = vrot.slane %v181, %v193
    %v206 = vunpack.c.l.b16 %v141
    %v207 = vunpack.c.l.b16 %v142
    %v208 = vunpack.c.l.b16 %v143
    %v209 = vunpack.c.l.b16 %v144
    %v210 = vunpack.c.l.b16 %v145
    %v211 = vunpack.c.l.b16 %v146
    %v212 = vunpack.c.l.b16 %v147
    %v213 = vunpack.c.l.b16 %v148
    %v214 = vpack.c.b16 %v207, %v206
    %v215 = vpack.c.b16 %v209, %v208
    %v216 = vpack.c.b16 %v211, %v210
    %v217 = vpack.c.b16 %v213, %v212
    %v254 = vunpack.c.l.b16 %v149
    %v255 = vunpack.c.h.b16 %v149
    %v256 = vunpack.c.l.b16 %v150
    %v257 = vunpack.c.l.b16 %v151
    %v258 = vunpack.c.h.b16 %v151
    %v259 = vunpack.c.l.b16 %v152
    %v260 = vunpack.c.l.b16 %v153
    %v261 = vunpack.c.h.b16 %v153
    %v262 = vunpack.c.l.b16 %v154
    %v263 = vunpack.c.l.b16 %v155
    %v264 = vunpack.c.h.b16 %v155
    %v265 = vunpack.c.l.b16 %v156
    %v266 = vunpack.c.l.b16 %v157
    %v267 = vunpack.c.h.b16 %v157
    %v268 = vunpack.c.l.b16 %v158
    %v269 = vunpack.c.l.b16 %v159
    %v270 = vunpack.c.h.b16 %v159
    %v271 = vunpack.c.l.b16 %v160
    %v272 = vunpack.c.l.b16 %v161
    %v273 = vunpack.c.h.b16 %v161
    %v274 = vunpack.c.l.b16 %v162
    %v275 = vunpack.c.l.b16 %v163
    %v276 = vunpack.c.h.b16 %v163
    %v277 = vunpack.c.l.b16 %v164
    %v278 = vunpack.c.l.b16 %v165
    %v279 = vunpack.c.h.b16 %v165
    %v280 = vunpack.c.l.b16 %v166
    %v281 = vunpack.c.l.b16 %v167
    %v282 = vunpack.c.h.b16 %v167
    %v283 = vunpack.c.l.b16 %v168
    %v284 = vunpack.c.l.b16 %v169
    %v285 = vunpack.c.h.b16 %v169
    %v286 = vunpack.c.l.b16 %v170
    %v287 = vunpack.c.l.b16 %v171
    %v288 = vunpack.c.h.b16 %v171
    %v289 = vunpack.c.l.b16 %v172
    %v290 = vunpack.c.l.b16 %v173
    %v291 = vunpack.c.h.b16 %v173
    %v292 = vunpack.c.l.b16 %v174
    %v293 = vunpack.c.l.b16 %v175
    %v294 = vunpack.c.h.b16 %v175
    %v295 = vunpack.c.l.b16 %v176
    %v296 = vunpack.c.l.b16 %v177
    %v297 = vunpack.c.h.b16 %v177
    %v298 = vunpack.c.l.b16 %v178
    %v299 = vunpack.c.l.b16 %v179
    %v300 = vunpack.c.h.b16 %v179
    %v301 = vunpack.c.l.b16 %v180
    %v302 = vpack.c.b16 %v257, %v254
    %v303 = vpack.c.b16 %v258, %v255
    %v304 = vpack.c.b16 %v259, %v256
    %v305 = vpack.c.b16 %v263, %v260
    %v306 = vpack.c.b16 %v264, %v261
    %v307 = vpack.c.b16 %v265, %v262
    %v308 = vpack.c.b16 %v269, %v266
    %v309 = vpack.c.b16 %v270, %v267
    %v310 = vpack.c.b16 %v271, %v268
    %v311 = vpack.c.b16 %v275, %v272
    %v312 = vpack.c.b16 %v276, %v273
    %v313 = vpack.c.b16 %v277, %v274
    %v314 = vpack.c.b16 %v281, %v278
    %v315 = vpack.c.b16 %v282, %v279
    %v316 = vpack.c.b16 %v283, %v280
    %v317 = vpack.c.b16 %v287, %v284
    %v318 = vpack.c.b16 %v288, %v285
    %v319 = vpack.c.b16 %v289, %v286
    %v320 = vpack.c.b16 %v293, %v290
    %v321 = vpack.c.b16 %v294, %v291
    %v322 = vpack.c.b16 %v295, %v292
    %v323 = vpack.c.b16 %v299, %v296
    %v324 = vpack.c.b16 %v300, %v297
    %v325 = vpack.c.b16 %v301, %v298
    %350 = vmatprep.subr.bf16.mxu0 %v303
    %351 = vmatpush1.bf16.msra.mxu0 %v302
    %352 = vmatprep.subr.bf16.mxu0 %v306
    %353 = vmatpush1.bf16.msra.mxu0 %v305
    %354 = vmatprep.subr.bf16.mxu0 %v309
    %355 = vmatpush1.bf16.msra.mxu0 %v308
    %356 = vmatprep.subr.bf16.mxu0 %v312
    %357 = vmatpush1.bf16.msra.mxu0 %v311
    %358 = vmatprep.subr.bf16.mxu0 %v315
    %359 = vmatpush1.bf16.msra.mxu0 %v314
    %360 = vmatprep.subr.bf16.mxu0 %v318
    %361 = vmatpush1.bf16.msra.mxu0 %v317
    %362 = vmatprep.subr.bf16.mxu0 %v321
    %363 = vmatpush1.bf16.msra.mxu0 %v320
    %364 = vmatprep.subr.bf16.mxu0 %v324
    %365 = vmatpush1.bf16.msra.mxu0 %v323
    %366 = vmatprep.subr.bf16.mxu0 0
    %367 = vmatpush1.bf16.msra.mxu0 0
    %368 = vmatprep.subr.bf16.mxu0 0
    %369 = vmatpush1.bf16.msra.mxu0 0
    %370 = vmatprep.subr.bf16.mxu0 0
    %371 = vmatpush1.bf16.msra.mxu0 0
    %372 = vmatprep.subr.bf16.mxu0 0
    %373 = vmatpush1.bf16.msra.mxu0 0
    %374 = vmatprep.subr.bf16.mxu0 0
    %375 = vmatpush1.bf16.msra.mxu0 0
    %376 = vmatprep.subr.bf16.mxu0 0
    %377 = vmatpush1.bf16.msra.mxu0 0
    %378 = vmatprep.subr.bf16.mxu0 0
    %379 = vmatpush1.bf16.msra.mxu0 0
    %380 = vmatprep.subr.bf16.mxu0 0
    %381 = vmatpush1.bf16.msra.mxu0 0
    %382 = vmatprep.mubr.bf16.mxu0 0
    %383 = vmatmul.mubr.bf16.gmra.mrb[0].mxu0 %v214
    %v384 = vpop.f32.mrb[0].mxu0
    %v385 = vadd.f32 %v186, %v384
    %v386 = vpop.f32.mrb[0].mxu0
    %v387 = vadd.f32 %v190, %v386
    %v388 = vpop.f32.mrb[0].mxu0
    %v389 = vadd.f32 %v186, %v388
    %v390 = vpop.f32.mrb[0].mxu0
    %v391 = vadd.f32 %v190, %v390
    %392 = vmatprep.mubr.bf16.mxu0 0
    %393 = vmatmul.mubr.bf16.gmra.mrb[0].mxu0 %v215
    %v394 = vpop.f32.mrb[0].mxu0
    %v395 = vadd.f32 %v186, %v394
    %v396 = vpop.f32.mrb[0].mxu0
    %v397 = vadd.f32 %v190, %v396
    %v398 = vpop.f32.mrb[0].mxu0
    %v399 = vadd.f32 %v186, %v398
    %v400 = vpop.f32.mrb[0].mxu0
    %v401 = vadd.f32 %v190, %v400
    %402 = vmatprep.mubr.bf16.mxu0 0
    %403 = vmatmul.mubr.bf16.gmra.mrb[0].mxu0 %v216
    %v404 = vpop.f32.mrb[0].mxu0
    %v405 = vadd.f32 %v186, %v404
    %v406 = vpop.f32.mrb[0].mxu0
    %v407 = vadd.f32 %v190, %v406
    %v408 = vpop.f32.mrb[0].mxu0
    %v409 = vadd.f32 %v186, %v408
    %v410 = vpop.f32.mrb[0].mxu0
    %v411 = vadd.f32 %v190, %v410
    %412 = vmatprep.mubr.bf16.mxu0 0
    %413 = vmatmul.mubr.bf16.gmra.mrb[0].mxu0 %v217
    %v414 = vpop.f32.mrb[0].mxu0
    %v415 = vadd.f32 %v186, %v414
    %v416 = vpop.f32.mrb[0].mxu0
    %v417 = vadd.f32 %v190, %v416
    %v418 = vpop.f32.mrb[0].mxu0
    %v419 = vadd.f32 %v186, %v418
    %v420 = vpop.f32.mrb[0].mxu0
    %v421 = vadd.f32 %v190, %v420
    %422 = vdwg.mxu0
    %423 = vmatprep.subr.bf16.mxu0 0
    %424 = vmatpush1.bf16.msra.mxu0 %v304
    %425 = vmatprep.subr.bf16.mxu0 0
    %426 = vmatpush1.bf16.msra.mxu0 %v307
    %427 = vmatprep.subr.bf16.mxu0 0
    %428 = vmatpush1.bf16.msra.mxu0 %v310
    %429 = vmatprep.subr.bf16.mxu0 0
    %430 = vmatpush1.bf16.msra.mxu0 %v313
    %431 = vmatprep.subr.bf16.mxu0 0
    %432 = vmatpush1.bf16.msra.mxu0 %v316
    %433 = vmatprep.subr.bf16.mxu0 0
    %434 = vmatpush1.bf16.msra.mxu0 %v319
    %435 = vmatprep.subr.bf16.mxu0 0
    %436 = vmatpush1.bf16.msra.mxu0 %v322
    %437 = vmatprep.subr.bf16.mxu0 0
    %438 = vmatpush1.bf16.msra.mxu0 %v325
    %439 = vmatprep.subr.bf16.mxu0 0
    %440 = vmatpush1.bf16.msra.mxu0 0
    %441 = vmatprep.subr.bf16.mxu0 0
    %442 = vmatpush1.bf16.msra.mxu0 0
    %443 = vmatprep.subr.bf16.mxu0 0
    %444 = vmatpush1.bf16.msra.mxu0 0
    %445 = vmatprep.subr.bf16.mxu0 0
    %446 = vmatpush1.bf16.msra.mxu0 0
    %447 = vmatprep.subr.bf16.mxu0 0
    %448 = vmatpush1.bf16.msra.mxu0 0
    %449 = vmatprep.subr.bf16.mxu0 0
    %450 = vmatpush1.bf16.msra.mxu0 0
    %451 = vmatprep.subr.bf16.mxu0 0
    %452 = vmatpush1.bf16.msra.mxu0 0
    %453 = vmatprep.subr.bf16.mxu0 0
    %454 = vmatpush1.bf16.msra.mxu0 0
    %455 = vmatprep.mubr.bf16.mxu0 0
    %456 = vmatmul.mubr.bf16.gmra.mrb[0].mxu0 %v214
    %v457 = vpop.f32.mrb[0].mxu0
    %v458 = vadd.f32 %v194, %v457
    %v459 = vpop.f32.mrb[0].mxu0
    %v460 = vpop.f32.mrb[0].mxu0
    %v461 = vadd.f32 %v194, %v460
    %v462 = vpop.f32.mrb[0].mxu0
    %463 = vmatprep.mubr.bf16.mxu0 0
    %464 = vmatmul.mubr.bf16.gmra.mrb[0].mxu0 %v215
    %v465 = vpop.f32.mrb[0].mxu0
    %v466 = vadd.f32 %v194, %v465
    %v467 = vpop.f32.mrb[0].mxu0
    %v468 = vpop.f32.mrb[0].mxu0
    %v469 = vadd.f32 %v194, %v468
    %v470 = vpop.f32.mrb[0].mxu0
    %471 = vmatprep.mubr.bf16.mxu0 0
    %472 = vmatmul.mubr.bf16.gmra.mrb[0].mxu0 %v216
    %v473 = vpop.f32.mrb[0].mxu0
    %v474 = vadd.f32 %v194, %v473
    %v475 = vpop.f32.mrb[0].mxu0
    %v476 = vpop.f32.mrb[0].mxu0
    %v477 = vadd.f32 %v194, %v476
    %v478 = vpop.f32.mrb[0].mxu0
    %479 = vmatprep.mubr.bf16.mxu0 0
    %480 = vmatmul.mubr.bf16.gmra.mrb[0].mxu0 %v217
    %v481 = vpop.f32.mrb[0].mxu0
    %v482 = vadd.f32 %v194, %v481
    %v483 = vpop.f32.mrb[0].mxu0
    %v484 = vpop.f32.mrb[0].mxu0
    %v485 = vadd.f32 %v194, %v484
    %v486 = vpop.f32.mrb[0].mxu0
    %487 = vdwg.mxu0
    %488 = vst [vmem:[#allocation2] sm:$0xff] %v385
    %489 = vst [vmem:[#allocation2 + $0x8] sm:$0xff] %v387
    %490 = vst [vmem:[#allocation2 + $0x10] sm:$0xff] %v458
    %491 = vst [vmem:[#allocation2 + $0x18] sm:$0xff] %v389
    %492 = vst [vmem:[#allocation2 + $0x20] sm:$0xff] %v391
    %493 = vst [vmem:[#allocation2 + $0x28] sm:$0xff] %v461
    %494 = vst [vmem:[#allocation2 + $0x30] sm:$0xff] %v395
    %495 = vst [vmem:[#allocation2 + $0x38] sm:$0xff] %v397
    %496 = vst [vmem:[#allocation2 + $0x40] sm:$0xff] %v466
    %497 = vst [vmem:[#allocation2 + $0x48] sm:$0xff] %v399
    %498 = vst [vmem:[#allocation2 + $0x50] sm:$0xff] %v401
    %499 = vst [vmem:[#allocation2 + $0x58] sm:$0xff] %v469
    %500 = vst [vmem:[#allocation2 + $0x60] sm:$0xff] %v405
    %501 = vst [vmem:[#allocation2 + $0x68] sm:$0xff] %v407
    %502 = vst [vmem:[#allocation2 + $0x70] sm:$0xff] %v474
    %503 = vst [vmem:[#allocation2 + $0x78] sm:$0xff] %v409
    %504 = vst [vmem:[#allocation2 + $0x80] sm:$0xff] %v411
    %505 = vst [vmem:[#allocation2 + $0x88] sm:$0xff] %v477
    %506 = vst [vmem:[#allocation2 + $0x90] sm:$0xff] %v415
    %507 = vst [vmem:[#allocation2 + $0x98] sm:$0xff] %v417
    %508 = vst [vmem:[#allocation2 + $0xa0] sm:$0xff] %v482
    %509 = vst [vmem:[#allocation2 + $0xa8] sm:$0xff] %v419
    %510 = vst [vmem:[#allocation2 + $0xb0] sm:$0xff] %v421
    %511 = vst [vmem:[#allocation2 + $0xb8] sm:$0xff] %v485
    %v512 = vld [vmem:[%s5] sm:$0x1]
    %v514 = vlaneseq
    %v515 = vshrl.u32 %v514, 7
    %v516 = vsub.s32 0, %v515
    %v517 = vrot.slane %v512, %v516
    %v519 = vld [vmem:[%s8] sm:$0x7]
    %v521 = vlaneseq
    %v522 = vshrl.u32 %v521, 7
    %v523 = vsub.s32 0, %v522
    %v524 = vrot.slane %v519, %v523
    %v525 = vlaneseq
    %v526 = vshrl.u32 %v525, 7
    %v527 = vsub.s32 1, %v526
    %v528 = vrot.slane %v519, %v527
    %v529 = vlaneseq
    %v530 = vshrl.u32 %v529, 7
    %v531 = vsub.s32 2, %v530
    %v532 = vrot.slane %v519, %v531
    %v536 = vld [vmem:[%s9] sm:$0x1]
    %v538 = vlaneseq
    %v539 = vshrl.u32 %v538, 7
    %v540 = vsub.s32 0, %v539
    %v541 = vrot.slane %v536, %v540
    %v543 = vld [vmem:[#allocation6] sm:$0xff]
    %s544 = scalar_lea.vmem [#allocation6], 8
    %v545 = vld [vmem:[%s544] sm:$0xff]
    %v546 = vpack.c.bf16 %v543, %v543
    %v547 = vld [vmem:[#allocation9] sm:$0xff]
    %v548 = vld [vmem:[#allocation9 + $0x8] sm:$0xf]
    %v549 = vld [vmem:[#allocation9 + $0xc] sm:$0xff]
    %v550 = vld [vmem:[#allocation9 + $0x14] sm:$0xf]
    %v551 = vld [vmem:[#allocation9 + $0x18] sm:$0xff]
    %v552 = vld [vmem:[#allocation9 + $0x20] sm:$0xf]
    %v553 = vld [vmem:[#allocation9 + $0x24] sm:$0xff]
    %v554 = vld [vmem:[#allocation9 + $0x2c] sm:$0xf]
    %v555 = vld [vmem:[#allocation9 + $0x30] sm:$0xff]
    %v556 = vld [vmem:[#allocation9 + $0x38] sm:$0xf]
    %v557 = vld [vmem:[#allocation9 + $0x3c] sm:$0xff]
    %v558 = vld [vmem:[#allocation9 + $0x44] sm:$0xf]
    %v559 = vld [vmem:[#allocation9 + $0x48] sm:$0xff]
    %v560 = vld [vmem:[#allocation9 + $0x50] sm:$0xf]
    %v561 = vld [vmem:[#allocation9 + $0x54] sm:$0xff]
    %v562 = vld [vmem:[#allocation9 + $0x5c] sm:$0xf]
    %v563 = vld [vmem:[#allocation9 + $0x60] sm:$0xff]
    %v564 = vld [vmem:[#allocation9 + $0x68] sm:$0xf]
    %v565 = vld [vmem:[#allocation9 + $0x6c] sm:$0xff]
    %v566 = vld [vmem:[#allocation9 + $0x74] sm:$0xf]
    %v567 = vld [vmem:[#allocation9 + $0x78] sm:$0xff]
    %v568 = vld [vmem:[#allocation9 + $0x80] sm:$0xf]
    %v569 = vld [vmem:[#allocation9 + $0x84] sm:$0xff]
    %v570 = vld [vmem:[#allocation9 + $0x8c] sm:$0xf]
    %v571 = vld [vmem:[#allocation9 + $0x90] sm:$0xff]
    %v572 = vld [vmem:[#allocation9 + $0x98] sm:$0xf]
    %v573 = vld [vmem:[#allocation9 + $0x9c] sm:$0xff]
    %v574 = vld [vmem:[#allocation9 + $0xa4] sm:$0xf]
    %v575 = vld [vmem:[#allocation9 + $0xa8] sm:$0xff]
    %v576 = vld [vmem:[#allocation9 + $0xb0] sm:$0xf]
    %v577 = vld [vmem:[#allocation9 + $0xb4] sm:$0xff]
    %v578 = vld [vmem:[#allocation9 + $0xbc] sm:$0xf]
    %v611 = vunpack.c.l.b16 %v547
    %v612 = vunpack.c.h.b16 %v547
    %v613 = vunpack.c.l.b16 %v548
    %v614 = vunpack.c.l.b16 %v549
    %v615 = vunpack.c.h.b16 %v549
    %v616 = vunpack.c.l.b16 %v550
    %v617 = vunpack.c.l.b16 %v551
    %v618 = vunpack.c.h.b16 %v551
    %v619 = vunpack.c.l.b16 %v552
    %v620 = vunpack.c.l.b16 %v553
    %v621 = vunpack.c.h.b16 %v553
    %v622 = vunpack.c.l.b16 %v554
    %v623 = vunpack.c.l.b16 %v555
    %v624 = vunpack.c.h.b16 %v555
    %v625 = vunpack.c.l.b16 %v556
    %v626 = vunpack.c.l.b16 %v557
    %v627 = vunpack.c.h.b16 %v557
    %v628 = vunpack.c.l.b16 %v558
    %v629 = vunpack.c.l.b16 %v559
    %v630 = vunpack.c.h.b16 %v559
    %v631 = vunpack.c.l.b16 %v560
    %v632 = vunpack.c.l.b16 %v561
    %v633 = vunpack.c.h.b16 %v561
    %v634 = vunpack.c.l.b16 %v562
    %v635 = vunpack.c.l.b16 %v563
    %v636 = vunpack.c.h.b16 %v563
    %v637 = vunpack.c.l.b16 %v564
    %v638 = vunpack.c.l.b16 %v565
    %v639 = vunpack.c.h.b16 %v565
    %v640 = vunpack.c.l.b16 %v566
    %v641 = vunpack.c.l.b16 %v567
    %v642 = vunpack.c.h.b16 %v567
    %v643 = vunpack.c.l.b16 %v568
    %v644 = vunpack.c.l.b16 %v569
    %v645 = vunpack.c.h.b16 %v569
    %v646 = vunpack.c.l.b16 %v570
    %v647 = vunpack.c.l.b16 %v571
    %v648 = vunpack.c.h.b16 %v571
    %v649 = vunpack.c.l.b16 %v572
    %v650 = vunpack.c.l.b16 %v573
    %v651 = vunpack.c.h.b16 %v573
    %v652 = vunpack.c.l.b16 %v574
    %v653 = vunpack.c.l.b16 %v575
    %v654 = vunpack.c.h.b16 %v575
    %v655 = vunpack.c.l.b16 %v576
    %v656 = vunpack.c.l.b16 %v577
    %v657 = vunpack.c.h.b16 %v577
    %v658 = vunpack.c.l.b16 %v578
    %v659 = vpack.c.b16 %v614, %v611
    %v660 = vpack.c.b16 %v615, %v612
    %v661 = vpack.c.b16 %v616, %v613
    %v662 = vpack.c.b16 %v620, %v617
    %v663 = vpack.c.b16 %v621, %v618
    %v664 = vpack.c.b16 %v622, %v619
    %v665 = vpack.c.b16 %v626, %v623
    %v666 = vpack.c.b16 %v627, %v624
    %v667 = vpack.c.b16 %v628, %v625
    %v668 = vpack.c.b16 %v632, %v629
    %v669 = vpack.c.b16 %v633, %v630
    %v670 = vpack.c.b16 %v634, %v631
    %v671 = vpack.c.b16 %v638, %v635
    %v672 = vpack.c.b16 %v639, %v636
    %v673 = vpack.c.b16 %v640, %v637
    %v674 = vpack.c.b16 %v644, %v641
    %v675 = vpack.c.b16 %v645, %v642
    %v676 = vpack.c.b16 %v646, %v643
    %v677 = vpack.c.b16 %v650, %v647
    %v678 = vpack.c.b16 %v651, %v648
    %v679 = vpack.c.b16 %v652, %v649
    %v680 = vpack.c.b16 %v656, %v653
    %v681 = vpack.c.b16 %v657, %v654
    %v682 = vpack.c.b16 %v658, %v655
    %707 = vmatprep.subr.bf16.mxu0 %v660
    %708 = vmatpush1.bf16.msra.mxu0 %v659
    %709 = vmatprep.subr.bf16.mxu0 %v663
    %710 = vmatpush1.bf16.msra.mxu0 %v662
    %711 = vmatprep.subr.bf16.mxu0 %v666
    %712 = vmatpush1.bf16.msra.mxu0 %v665
    %713 = vmatprep.subr.bf16.mxu0 %v669
    %714 = vmatpush1.bf16.msra.mxu0 %v668
    %715 = vmatprep.subr.bf16.mxu0 %v672
    %716 = vmatpush1.bf16.msra.mxu0 %v671
    %717 = vmatprep.subr.bf16.mxu0 %v675
    %718 = vmatpush1.bf16.msra.mxu0 %v674
    %719 = vmatprep.subr.bf16.mxu0 %v678
    %720 = vmatpush1.bf16.msra.mxu0 %v677
    %721 = vmatprep.subr.bf16.mxu0 %v681
    %722 = vmatpush1.bf16.msra.mxu0 %v680
    %723 = vmatprep.subr.bf16.mxu0 0
    %724 = vmatpush1.bf16.msra.mxu0 0
    %725 = vmatprep.subr.bf16.mxu0 0
    %726 = vmatpush1.bf16.msra.mxu0 0
    %727 = vmatprep.subr.bf16.mxu0 0
    %728 = vmatpush1.bf16.msra.mxu0 0
    %729 = vmatprep.subr.bf16.mxu0 0
    %730 = vmatpush1.bf16.msra.mxu0 0
    %731 = vmatprep.subr.bf16.mxu0 0
    %732 = vmatpush1.bf16.msra.mxu0 0
    %733 = vmatprep.subr.bf16.mxu0 0
    %734 = vmatpush1.bf16.msra.mxu0 0
    %735 = vmatprep.subr.bf16.mxu0 0
    %736 = vmatpush1.bf16.msra.mxu0 0
    %737 = vmatprep.subr.bf16.mxu0 0
    %738 = vmatpush1.bf16.msra.mxu0 0
    %739 = vmatprep.mubr.bf16.mxu0 0
    %740 = vmatmul.mubr.bf16.gmra.mrb[0].mxu0 %v546
    %v741 = vpop.f32.mrb[0].mxu0
    %v742 = vadd.f32 0.0, %v741
    %v743 = vpop.f32.mrb[0].mxu0
    %v744 = vadd.f32 0.0, %v743
    %v745 = vpop.f32.mrb[0].mxu0
    %v746 = vpop.f32.mrb[0].mxu0
    %747 = vdwg.mxu0
    %748 = vmatprep.subr.bf16.mxu0 0
    %749 = vmatpush1.bf16.msra.mxu0 %v661
    %750 = vmatprep.subr.bf16.mxu0 0
    %751 = vmatpush1.bf16.msra.mxu0 %v664
    %752 = vmatprep.subr.bf16.mxu0 0
    %753 = vmatpush1.bf16.msra.mxu0 %v667
    %754 = vmatprep.subr.bf16.mxu0 0
    %755 = vmatpush1.bf16.msra.mxu0 %v670
    %756 = vmatprep.subr.bf16.mxu0 0
    %757 = vmatpush1.bf16.msra.mxu0 %v673
    %758 = vmatprep.subr.bf16.mxu0 0
    %759 = vmatpush1.bf16.msra.mxu0 %v676
    %760 = vmatprep.subr.bf16.mxu0 0
    %761 = vmatpush1.bf16.msra.mxu0 %v679
    %762 = vmatprep.subr.bf16.mxu0 0
    %763 = vmatpush1.bf16.msra.mxu0 %v682
    %764 = vmatprep.subr.bf16.mxu0 0
    %765 = vmatpush1.bf16.msra.mxu0 0
    %766 = vmatprep.subr.bf16.mxu0 0
    %767 = vmatpush1.bf16.msra.mxu0 0
    %768 = vmatprep.subr.bf16.mxu0 0
    %769 = vmatpush1.bf16.msra.mxu0 0
    %770 = vmatprep.subr.bf16.mxu0 0
    %771 = vmatpush1.bf16.msra.mxu0 0
    %772 = vmatprep.subr.bf16.mxu0 0
    %773 = vmatpush1.bf16.msra.mxu0 0
    %774 = vmatprep.subr.bf16.mxu0 0
    %775 = vmatpush1.bf16.msra.mxu0 0
    %776 = vmatprep.subr.bf16.mxu0 0
    %777 = vmatpush1.bf16.msra.mxu0 0
    %778 = vmatprep.subr.bf16.mxu0 0
    %779 = vmatpush1.bf16.msra.mxu0 0
    %780 = vmatprep.mubr.bf16.mxu0 0
    %781 = vmatmul.mubr.bf16.gmra.mrb[0].mxu0 %v546
    %v782 = vpop.f32.mrb[0].mxu0
    %v783 = vadd.f32 0.0, %v782
    %v784 = vpop.f32.mrb[0].mxu0
    %v785 = vpop.f32.mrb[0].mxu0
    %v786 = vpop.f32.mrb[0].mxu0
    %787 = vdwg.mxu0
    %v788 = vld [vmem:[#allocation2] sm:$0xff]
    %v789 = vld [vmem:[#allocation2 + $0x8] sm:$0xff]
    %v790 = vld [vmem:[#allocation2 + $0x10] sm:$0xff]
    %v791 = vadd.f32 %v788, %v742
    %v792 = vxor.u32 %v791, 2147483648
    %v793 = vmul.f32 %v792, 1.442695
    %v794 = vpow.pop %v793
    %v795 = vadd.f32 %v794, 1.0
    %v796 = vrcp.pop %v795
    %v797 = vmul.f32 1.0, %v796
    %v798 = vadd.f32 %v789, %v744
    %v799 = vxor.u32 %v798, 2147483648
    %v800 = vmul.f32 %v799, 1.442695
    %v801 = vpow.pop %v800
    %v802 = vadd.f32 %v801, 1.0
    %v803 = vrcp.pop %v802
    %v804 = vmul.f32 1.0, %v803
    %v805 = vadd.f32 %v783, %v517
    %v806 = vmul.f32 %v797, %v805
    %v807 = vadd.f32 %v790, %v806
    %v808 = vtanh.pop %v807
    %v809 = vsub.f32 %v543, %v808
    %v810 = vmul.f32 %v804, %v809
    %v811 = vadd.f32 %v808, %v810
    %v812 = vpack.c.bf16 %v811, %v811
    %813 = vmatprep.subr.bf16.mxu0 %v660
    %814 = vmatpush1.bf16.msra.mxu0 %v659
    %815 = vmatprep.subr.bf16.mxu0 %v663
    %816 = vmatpush1.bf16.msra.mxu0 %v662
    %817 = vmatprep.subr.bf16.mxu0 %v666
    %818 = vmatpush1.bf16.msra.mxu0 %v665
    %819 = vmatprep.subr.bf16.mxu0 %v669
    %820 = vmatpush1.bf16.msra.mxu0 %v668
    %821 = vmatprep.subr.bf16.mxu0 %v672
    %822 = vmatpush1.bf16.msra.mxu0 %v671
    %823 = vmatprep.subr.bf16.mxu0 %v675
    %824 = vmatpush1.bf16.msra.mxu0 %v674
    %825 = vmatprep.subr.bf16.mxu0 %v678
    %826 = vmatpush1.bf16.msra.mxu0 %v677
    %827 = vmatprep.subr.bf16.mxu0 %v681
    %828 = vmatpush1.bf16.msra.mxu0 %v680
    %829 = vmatprep.subr.bf16.mxu0 0
    %830 = vmatpush1.bf16.msra.mxu0 0
    %831 = vmatprep.subr.bf16.mxu0 0
    %832 = vmatpush1.bf16.msra.mxu0 0
    %833 = vmatprep.subr.bf16.mxu0 0
    %834 = vmatpush1.bf16.msra.mxu0 0
    %835 = vmatprep.subr.bf16.mxu0 0
    %836 = vmatpush1.bf16.msra.mxu0 0
    %837 = vmatprep.subr.bf16.mxu0 0
    %838 = vmatpush1.bf16.msra.mxu0 0
    %839 = vmatprep.subr.bf16.mxu0 0
    %840 = vmatpush1.bf16.msra.mxu0 0
    %841 = vmatprep.subr.bf16.mxu0 0
    %842 = vmatpush1.bf16.msra.mxu0 0
    %843 = vmatprep.subr.bf16.mxu0 0
    %844 = vmatpush1.bf16.msra.mxu0 0
    %845 = vmatprep.mubr.bf16.mxu0 0
    %846 = vmatmul.mubr.bf16.gmra.mrb[0].mxu0 %v812
    %v847 = vpop.f32.mrb[0].mxu0
    %v848 = vadd.f32 0.0, %v847
    %v849 = vpop.f32.mrb[0].mxu0
    %v850 = vadd.f32 0.0, %v849
    %v851 = vpop.f32.mrb[0].mxu0
    %v852 = vpop.f32.mrb[0].mxu0
    %853 = vdwg.mxu0
    %854 = vmatprep.subr.bf16.mxu0 0
    %855 = vmatpush1.bf16.msra.mxu0 %v661
    %856 = vmatprep.subr.bf16.mxu0 0
    %857 = vmatpush1.bf16.msra.mxu0 %v664
    %858 = vmatprep.subr.bf16.mxu0 0
    %859 = vmatpush1.bf16.msra.mxu0 %v667
    %860 = vmatprep.subr.bf16.mxu0 0
    %861 = vmatpush1.bf16.msra.mxu0 %v670
    %862 = vmatprep.subr.bf16.mxu0 0
    %863 = vmatpush1.bf16.msra.mxu0 %v673
    %864 = vmatprep.subr.bf16.mxu0 0
    %865 = vmatpush1.bf16.msra.mxu0 %v676
    %866 = vmatprep.subr.bf16.mxu0 0
    %867 = vmatpush1.bf16.msra.mxu0 %v679
    %868 = vmatprep.subr.bf16.mxu0 0
    %869 = vmatpush1.bf16.msra.mxu0 %v682
    %870 = vmatprep.subr.bf16.mxu0 0
    %871 = vmatpush1.bf16.msra.mxu0 0
    %872 = vmatprep.subr.bf16.mxu0 0
    %873 = vmatpush1.bf16.msra.mxu0 0
    %874 = vmatprep.subr.bf16.mxu0 0
    %875 = vmatpush1.bf16.msra.mxu0 0
    %876 = vmatprep.subr.bf16.mxu0 0
    %877 = vmatpush1.bf16.msra.mxu0 0
    %878 = vmatprep.subr.bf16.mxu0 0
    %879 = vmatpush1.bf16.msra.mxu0 0
    %880 = vmatprep.subr.bf16.mxu0 0
    %881 = vmatpush1.bf16.msra.mxu0 0
    %882 = vmatprep.subr.bf16.mxu0 0
    %883 = vmatpush1.bf16.msra.mxu0 0
    %884 = vmatprep.subr.bf16.mxu0 0
    %885 = vmatpush1.bf16.msra.mxu0 0
    %886 = vmatprep.mubr.bf16.mxu0 0
    %887 = vmatmul.mubr.bf16.gmra.mrb[0].mxu0 %v812
    %v888 = vpop.f32.mrb[0].mxu0
    %v889 = vadd.f32 0.0, %v888
    %v890 = vpop.f32.mrb[0].mxu0
    %v891 = vpop.f32.mrb[0].mxu0
    %v892 = vpop.f32.mrb[0].mxu0
    %893 = vdwg.mxu0
    %v894 = vld [vmem:[#allocation11] sm:$0xff]
    %v895 = vld [vmem:[#allocation11 + $0x8] sm:$0xf]
    %v896 = vld [vmem:[#allocation11 + $0xc] sm:$0xff]
    %v897 = vld [vmem:[#allocation11 + $0x14] sm:$0xf]
    %v898 = vld [vmem:[#allocation11 + $0x18] sm:$0xff]
    %v899 = vld [vmem:[#allocation11 + $0x20] sm:$0xf]
    %v900 = vld [vmem:[#allocation11 + $0x24] sm:$0xff]
    %v901 = vld [vmem:[#allocation11 + $0x2c] sm:$0xf]
    %v902 = vld [vmem:[#allocation11 + $0x30] sm:$0xff]
    %v903 = vld [vmem:[#allocation11 + $0x38] sm:$0xf]
    %v904 = vld [vmem:[#allocation11 + $0x3c] sm:$0xff]
    %v905 = vld [vmem:[#allocation11 + $0x44] sm:$0xf]
    %v906 = vld [vmem:[#allocation11 + $0x48] sm:$0xff]
    %v907 = vld [vmem:[#allocation11 + $0x50] sm:$0xf]
    %v908 = vld [vmem:[#allocation11 + $0x54] sm:$0xff]
    %v909 = vld [vmem:[#allocation11 + $0x5c] sm:$0xf]
    %v910 = vld [vmem:[#allocation11 + $0x60] sm:$0xff]
    %v911 = vld [vmem:[#allocation11 + $0x68] sm:$0xf]
    %v912 = vld [vmem:[#allocation11 + $0x6c] sm:$0xff]
    %v913 = vld [vmem:[#allocation11 + $0x74] sm:$0xf]
    %v914 = vld [vmem:[#allocation11 + $0x78] sm:$0xff]
    %v915 = vld [vmem:[#allocation11 + $0x80] sm:$0xf]
    %v916 = vld [vmem:[#allocation11 + $0x84] sm:$0xff]
    %v917 = vld [vmem:[#allocation11 + $0x8c] sm:$0xf]
    %v918 = vld [vmem:[#allocation11 + $0x90] sm:$0xff]
    %v919 = vld [vmem:[#allocation11 + $0x98] sm:$0xf]
    %v920 = vld [vmem:[#allocation11 + $0x9c] sm:$0xff]
    %v921 = vld [vmem:[#allocation11 + $0xa4] sm:$0xf]
    %v922 = vld [vmem:[#allocation11 + $0xa8] sm:$0xff]
    %v923 = vld [vmem:[#allocation11 + $0xb0] sm:$0xf]
    %v924 = vld [vmem:[#allocation11 + $0xb4] sm:$0xff]
    %v925 = vld [vmem:[#allocation11 + $0xbc] sm:$0xf]
    %v926 = vpack.c.bf16 %v545, %v545
    %v927 = vld [vmem:[#allocation12] sm:$0xff]
    %v928 = vld [vmem:[#allocation12 + $0x8] sm:$0xf]
    %v929 = vld [vmem:[#allocation12 + $0xc] sm:$0xff]
    %v930 = vld [vmem:[#allocation12 + $0x14] sm:$0xf]
    %v931 = vld [vmem:[#allocation12 + $0x18] sm:$0xff]
    %v932 = vld [vmem:[#allocation12 + $0x20] sm:$0xf]
    %v933 = vld [vmem:[#allocation12 + $0x24] sm:$0xff]
    %v934 = vld [vmem:[#allocation12 + $0x2c] sm:$0xf]
    %v935 = vld [vmem:[#allocation12 + $0x30] sm:$0xff]
    %v936 = vld [vmem:[#allocation12 + $0x38] sm:$0xf]
    %v937 = vld [vmem:[#allocation12 + $0x3c] sm:$0xff]
    %v938 = vld [vmem:[#allocation12 + $0x44] sm:$0xf]
    %v939 = vld [vmem:[#allocation12 + $0x48] sm:$0xff]
    %v940 = vld [vmem:[#allocation12 + $0x50] sm:$0xf]
    %v941 = vld [vmem:[#allocation12 + $0x54] sm:$0xff]
    %v942 = vld [vmem:[#allocation12 + $0x5c] sm:$0xf]
    %v943 = vld [vmem:[#allocation12 + $0x60] sm:$0xff]
    %v944 = vld [vmem:[#allocation12 + $0x68] sm:$0xf]
    %v945 = vld [vmem:[#allocation12 + $0x6c] sm:$0xff]
    %v946 = vld [vmem:[#allocation12 + $0x74] sm:$0xf]
    %v947 = vld [vmem:[#allocation12 + $0x78] sm:$0xff]
    %v948 = vld [vmem:[#allocation12 + $0x80] sm:$0xf]
    %v949 = vld [vmem:[#allocation12 + $0x84] sm:$0xff]
    %v950 = vld [vmem:[#allocation12 + $0x8c] sm:$0xf]
    %v951 = vld [vmem:[#allocation12 + $0x90] sm:$0xff]
    %v952 = vld [vmem:[#allocation12 + $0x98] sm:$0xf]
    %v953 = vld [vmem:[#allocation12 + $0x9c] sm:$0xff]
    %v954 = vld [vmem:[#allocation12 + $0xa4] sm:$0xf]
    %v955 = vld [vmem:[#allocation12 + $0xa8] sm:$0xff]
    %v956 = vld [vmem:[#allocation12 + $0xb0] sm:$0xf]
    %v957 = vld [vmem:[#allocation12 + $0xb4] sm:$0xff]
    %v958 = vld [vmem:[#allocation12 + $0xbc] sm:$0xf]
    %v991 = vunpack.c.l.b16 %v927
    %v992 = vunpack.c.h.b16 %v927
    %v993 = vunpack.c.l.b16 %v928
    %v994 = vunpack.c.l.b16 %v929
    %v995 = vunpack.c.h.b16 %v929
    %v996 = vunpack.c.l.b16 %v930
    %v997 = vunpack.c.l.b16 %v931
    %v998 = vunpack.c.h.b16 %v931
    %v999 = vunpack.c.l.b16 %v932
    %v1000 = vunpack.c.l.b16 %v933
    %v1001 = vunpack.c.h.b16 %v933
    %v1002 = vunpack.c.l.b16 %v934
    %v1003 = vunpack.c.l.b16 %v935
    %v1004 = vunpack.c.h.b16 %v935
    %v1005 = vunpack.c.l.b16 %v936
    %v1006 = vunpack.c.l.b16 %v937
    %v1007 = vunpack.c.h.b16 %v937
    %v1008 = vunpack.c.l.b16 %v938
    %v1009 = vunpack.c.l.b16 %v939
    %v1010 = vunpack.c.h.b16 %v939
    %v1011 = vunpack.c.l.b16 %v940
    %v1012 = vunpack.c.l.b16 %v941
    %v1013 = vunpack.c.h.b16 %v941
    %v1014 = vunpack.c.l.b16 %v942
    %v1015 = vunpack.c.l.b16 %v943
    %v1016 = vunpack.c.h.b16 %v943
    %v1017 = vunpack.c.l.b16 %v944
    %v1018 = vunpack.c.l.b16 %v945
    %v1019 = vunpack.c.h.b16 %v945
    %v1020 = vunpack.c.l.b16 %v946
    %v1021 = vunpack.c.l.b16 %v947
    %v1022 = vunpack.c.h.b16 %v947
    %v1023 = vunpack.c.l.b16 %v948
    %v1024 = vunpack.c.l.b16 %v949
    %v1025 = vunpack.c.h.b16 %v949
    %v1026 = vunpack.c.l.b16 %v950
    %v1027 = vunpack.c.l.b16 %v951
    %v1028 = vunpack.c.h.b16 %v951
    %v1029 = vunpack.c.l.b16 %v952
    %v1030 = vunpack.c.l.b16 %v953
    %v1031 = vunpack.c.h.b16 %v953
    %v1032 = vunpack.c.l.b16 %v954
    %v1033 = vunpack.c.l.b16 %v955
    %v1034 = vunpack.c.h.b16 %v955
    %v1035 = vunpack.c.l.b16 %v956
    %v1036 = vunpack.c.l.b16 %v957
    %v1037 = vunpack.c.h.b16 %v957
    %v1038 = vunpack.c.l.b16 %v958
    %v1039 = vpack.c.b16 %v994, %v991
    %v1040 = vpack.c.b16 %v995, %v992
    %v1041 = vpack.c.b16 %v996, %v993
    %v1042 = vpack.c.b16 %v1000, %v997
    %v1043 = vpack.c.b16 %v1001, %v998
    %v1044 = vpack.c.b16 %v1002, %v999
    %v1045 = vpack.c.b16 %v1006, %v1003
    %v1046 = vpack.c.b16 %v1007, %v1004
    %v1047 = vpack.c.b16 %v1008, %v1005
    %v1048 = vpack.c.b16 %v1012, %v1009
    %v1049 = vpack.c.b16 %v1013, %v1010
    %v1050 = vpack.c.b16 %v1014, %v1011
    %v1051 = vpack.c.b16 %v1018, %v1015
    %v1052 = vpack.c.b16 %v1019, %v1016
    %v1053 = vpack.c.b16 %v1020, %v1017
    %v1054 = vpack.c.b16 %v1024, %v1021
    %v1055 = vpack.c.b16 %v1025, %v1022
    %v1056 = vpack.c.b16 %v1026, %v1023
    %v1057 = vpack.c.b16 %v1030, %v1027
    %v1058 = vpack.c.b16 %v1031, %v1028
    %v1059 = vpack.c.b16 %v1032, %v1029
    %v1060 = vpack.c.b16 %v1036, %v1033
    %v1061 = vpack.c.b16 %v1037, %v1034
    %v1062 = vpack.c.b16 %v1038, %v1035
    %1087 = vmatprep.subr.bf16.mxu0 %v1040
    %1088 = vmatpush1.bf16.msra.mxu0 %v1039
    %1089 = vmatprep.subr.bf16.mxu0 %v1043
    %1090 = vmatpush1.bf16.msra.mxu0 %v1042
    %1091 = vmatprep.subr.bf16.mxu0 %v1046
    %1092 = vmatpush1.bf16.msra.mxu0 %v1045
    %1093 = vmatprep.subr.bf16.mxu0 %v1049
    %1094 = vmatpush1.bf16.msra.mxu0 %v1048
    %1095 = vmatprep.subr.bf16.mxu0 %v1052
    %1096 = vmatpush1.bf16.msra.mxu0 %v1051
    %1097 = vmatprep.subr.bf16.mxu0 %v1055
    %1098 = vmatpush1.bf16.msra.mxu0 %v1054
    %1099 = vmatprep.subr.bf16.mxu0 %v1058
    %1100 = vmatpush1.bf16.msra.mxu0 %v1057
    %1101 = vmatprep.subr.bf16.mxu0 %v1061
    %1102 = vmatpush1.bf16.msra.mxu0 %v1060
    %1103 = vmatprep.subr.bf16.mxu0 0
    %1104 = vmatpush1.bf16.msra.mxu0 0
    %1105 = vmatprep.subr.bf16.mxu0 0
    %1106 = vmatpush1.bf16.msra.mxu0 0
    %1107 = vmatprep.subr.bf16.mxu0 0
    %1108 = vmatpush1.bf16.msra.mxu0 0
    %1109 = vmatprep.subr.bf16.mxu0 0
    %1110 = vmatpush1.bf16.msra.mxu0 0
    %1111 = vmatprep.subr.bf16.mxu0 0
    %1112 = vmatpush1.bf16.msra.mxu0 0
    %1113 = vmatprep.subr.bf16.mxu0 0
    %1114 = vmatpush1.bf16.msra.mxu0 0
    %1115 = vmatprep.subr.bf16.mxu0 0
    %1116 = vmatpush1.bf16.msra.mxu0 0
    %1117 = vmatprep.subr.bf16.mxu0 0
    %1118 = vmatpush1.bf16.msra.mxu0 0
    %1119 = vmatprep.mubr.bf16.mxu0 0
    %1120 = vmatmul.mubr.bf16.gmra.mrb[0].mxu0 %v926
    %v1121 = vpop.f32.mrb[0].mxu0
    %v1122 = vadd.f32 0.0, %v1121
    %v1123 = vpop.f32.mrb[0].mxu0
    %v1124 = vadd.f32 0.0, %v1123
    %v1125 = vpop.f32.mrb[0].mxu0
    %v1126 = vpop.f32.mrb[0].mxu0
    %1127 = vdwg.mxu0
    %1128 = vmatprep.subr.bf16.mxu0 0
    %1129 = vmatpush1.bf16.msra.mxu0 %v1041
    %1130 = vmatprep.subr.bf16.mxu0 0
    %1131 = vmatpush1.bf16.msra.mxu0 %v1044
    %1132 = vmatprep.subr.bf16.mxu0 0
    %1133 = vmatpush1.bf16.msra.mxu0 %v1047
    %1134 = vmatprep.subr.bf16.mxu0 0
    %1135 = vmatpush1.bf16.msra.mxu0 %v1050
    %1136 = vmatprep.subr.bf16.mxu0 0
    %1137 = vmatpush1.bf16.msra.mxu0 %v1053
    %1138 = vmatprep.subr.bf16.mxu0 0
    %1139 = vmatpush1.bf16.msra.mxu0 %v1056
    %1140 = vmatprep.subr.bf16.mxu0 0
    %1141 = vmatpush1.bf16.msra.mxu0 %v1059
    %1142 = vmatprep.subr.bf16.mxu0 0
    %1143 = vmatpush1.bf16.msra.mxu0 %v1062
    %1144 = vmatprep.subr.bf16.mxu0 0
    %1145 = vmatpush1.bf16.msra.mxu0 0
    %1146 = vmatprep.subr.bf16.mxu0 0
    %1147 = vmatpush1.bf16.msra.mxu0 0
    %1148 = vmatprep.subr.bf16.mxu0 0
    %1149 = vmatpush1.bf16.msra.mxu0 0
    %1150 = vmatprep.subr.bf16.mxu0 0
    %1151 = vmatpush1.bf16.msra.mxu0 0
    %1152 = vmatprep.subr.bf16.mxu0 0
    %1153 = vmatpush1.bf16.msra.mxu0 0
    %1154 = vmatprep.subr.bf16.mxu0 0
    %1155 = vmatpush1.bf16.msra.mxu0 0
    %1156 = vmatprep.subr.bf16.mxu0 0
    %1157 = vmatpush1.bf16.msra.mxu0 0
    %1158 = vmatprep.subr.bf16.mxu0 0
    %1159 = vmatpush1.bf16.msra.mxu0 0
    %1160 = vmatprep.mubr.bf16.mxu0 0
    %1161 = vmatmul.mubr.bf16.gmra.mrb[0].mxu0 %v926
    %v1162 = vpop.f32.mrb[0].mxu0
    %v1163 = vadd.f32 0.0, %v1162
    %v1164 = vpop.f32.mrb[0].mxu0
    %v1165 = vpop.f32.mrb[0].mxu0
    %v1166 = vpop.f32.mrb[0].mxu0
    %1167 = vdwg.mxu0
    %v1168 = vld [vmem:[#allocation2 + $0x18] sm:$0xff]
    %v1169 = vld [vmem:[#allocation2 + $0x20] sm:$0xff]
    %v1170 = vld [vmem:[#allocation2 + $0x28] sm:$0xff]
    %v1171 = vadd.f32 %v1168, %v848
    %v1172 = vxor.u32 %v1171, 2147483648
    %v1173 = vmul.f32 %v1172, 1.442695
    %v1174 = vpow.pop %v1173
    %v1175 = vadd.f32 %v1174, 1.0
    %v1176 = vrcp.pop %v1175
    %v1177 = vmul.f32 1.0, %v1176
    %v1178 = vadd.f32 %v1169, %v850
    %v1179 = vxor.u32 %v1178, 2147483648
    %v1180 = vmul.f32 %v1179, 1.442695
    %v1181 = vpow.pop %v1180
    %v1182 = vadd.f32 %v1181, 1.0
    %v1183 = vrcp.pop %v1182
    %v1184 = vmul.f32 1.0, %v1183
    %v1185 = vadd.f32 %v889, %v517
    %v1186 = vmul.f32 %v1177, %v1185
    %v1187 = vadd.f32 %v1170, %v1186
    %v1188 = vtanh.pop %v1187
    %v1189 = vsub.f32 %v811, %v1188
    %v1190 = vmul.f32 %v1184, %v1189
    %v1191 = vadd.f32 %v1188, %v1190
    %v1224 = vunpack.c.l.b16 %v894
    %v1225 = vunpack.c.h.b16 %v894
    %v1226 = vunpack.c.l.b16 %v895
    %v1227 = vunpack.c.l.b16 %v896
    %v1228 = vunpack.c.h.b16 %v896
    %v1229 = vunpack.c.l.b16 %v897
    %v1230 = vunpack.c.l.b16 %v898
    %v1231 = vunpack.c.h.b16 %v898
    %v1232 = vunpack.c.l.b16 %v899
    %v1233 = vunpack.c.l.b16 %v900
    %v1234 = vunpack.c.h.b16 %v900
    %v1235 = vunpack.c.l.b16 %v901
    %v1236 = vunpack.c.l.b16 %v902
    %v1237 = vunpack.c.h.b16 %v902
    %v1238 = vunpack.c.l.b16 %v903
    %v1239 = vunpack.c.l.b16 %v904
    %v1240 = vunpack.c.h.b16 %v904
    %v1241 = vunpack.c.l.b16 %v905
    %v1242 = vunpack.c.l.b16 %v906
    %v1243 = vunpack.c.h.b16 %v906
    %v1244 = vunpack.c.l.b16 %v907
    %v1245 = vunpack.c.l.b16 %v908
    %v1246 = vunpack.c.h.b16 %v908
    %v1247 = vunpack.c.l.b16 %v909
    %v1248 = vunpack.c.l.b16 %v910
    %v1249 = vunpack.c.h.b16 %v910
    %v1250 = vunpack.c.l.b16 %v911
    %v1251 = vunpack.c.l.b16 %v912
    %v1252 = vunpack.c.h.b16 %v912
    %v1253 = vunpack.c.l.b16 %v913
    %v1254 = vunpack.c.l.b16 %v914
    %v1255 = vunpack.c.h.b16 %v914
    %v1256 = vunpack.c.l.b16 %v915
    %v1257 = vunpack.c.l.b16 %v916
    %v1258 = vunpack.c.h.b16 %v916
    %v1259 = vunpack.c.l.b16 %v917
    %v1260 = vunpack.c.l.b16 %v918
    %v1261 = vunpack.c.h.b16 %v918
    %v1262 = vunpack.c.l.b16 %v919
    %v1263 = vunpack.c.l.b16 %v920
    %v1264 = vunpack.c.h.b16 %v920
    %v1265 = vunpack.c.l.b16 %v921
    %v1266 = vunpack.c.l.b16 %v922
    %v1267 = vunpack.c.h.b16 %v922
    %v1268 = vunpack.c.l.b16 %v923
    %v1269 = vunpack.c.l.b16 %v924
    %v1270 = vunpack.c.h.b16 %v924
    %v1271 = vunpack.c.l.b16 %v925
    %v1272 = vpack.c.b16 %v1227, %v1224
    %v1273 = vpack.c.b16 %v1228, %v1225
    %v1274 = vpack.c.b16 %v1229, %v1226
    %v1275 = vpack.c.b16 %v1233, %v1230
    %v1276 = vpack.c.b16 %v1234, %v1231
    %v1277 = vpack.c.b16 %v1235, %v1232
    %v1278 = vpack.c.b16 %v1239, %v1236
    %v1279 = vpack.c.b16 %v1240, %v1237
    %v1280 = vpack.c.b16 %v1241, %v1238
    %v1281 = vpack.c.b16 %v1245, %v1242
    %v1282 = vpack.c.b16 %v1246, %v1243
    %v1283 = vpack.c.b16 %v1247, %v1244
    %v1284 = vpack.c.b16 %v1251, %v1248
    %v1285 = vpack.c.b16 %v1252, %v1249
    %v1286 = vpack.c.b16 %v1253, %v1250
    %v1287 = vpack.c.b16 %v1257, %v1254
    %v1288 = vpack.c.b16 %v1258, %v1255
    %v1289 = vpack.c.b16 %v1259, %v1256
    %v1290 = vpack.c.b16 %v1263, %v1260
    %v1291 = vpack.c.b16 %v1264, %v1261
    %v1292 = vpack.c.b16 %v1265, %v1262
    %v1293 = vpack.c.b16 %v1269, %v1266
    %v1294 = vpack.c.b16 %v1270, %v1267
    %v1295 = vpack.c.b16 %v1271, %v1268
    %1320 = vmatprep.subr.bf16.mxu0 %v1273
    %1321 = vmatpush1.bf16.msra.mxu0 %v1272
    %1322 = vmatprep.subr.bf16.mxu0 %v1276
    %1323 = vmatpush1.bf16.msra.mxu0 %v1275
    %1324 = vmatprep.subr.bf16.mxu0 %v1279
    %1325 = vmatpush1.bf16.msra.mxu0 %v1278
    %1326 = vmatprep.subr.bf16.mxu0 %v1282
    %1327 = vmatpush1.bf16.msra.mxu0 %v1281
    %1328 = vmatprep.subr.bf16.mxu0 %v1285
    %1329 = vmatpush1.bf16.msra.mxu0 %v1284
    %1330 = vmatprep.subr.bf16.mxu0 %v1288
    %1331 = vmatpush1.bf16.msra.mxu0 %v1287
    %1332 = vmatprep.subr.bf16.mxu0 %v1291
    %1333 = vmatpush1.bf16.msra.mxu0 %v1290
    %1334 = vmatprep.subr.bf16.mxu0 %v1294
    %1335 = vmatpush1.bf16.msra.mxu0 %v1293
    %1336 = vmatprep.subr.bf16.mxu0 0
    %1337 = vmatpush1.bf16.msra.mxu0 0
    %1338 = vmatprep.subr.bf16.mxu0 0
    %1339 = vmatpush1.bf16.msra.mxu0 0
    %1340 = vmatprep.subr.bf16.mxu0 0
    %1341 = vmatpush1.bf16.msra.mxu0 0
    %1342 = vmatprep.subr.bf16.mxu0 0
    %1343 = vmatpush1.bf16.msra.mxu0 0
    %1344 = vmatprep.subr.bf16.mxu0 0
    %1345 = vmatpush1.bf16.msra.mxu0 0
    %1346 = vmatprep.subr.bf16.mxu0 0
    %1347 = vmatpush1.bf16.msra.mxu0 0
    %1348 = vmatprep.subr.bf16.mxu0 0
    %1349 = vmatpush1.bf16.msra.mxu0 0
    %1350 = vmatprep.subr.bf16.mxu0 0
    %1351 = vmatpush1.bf16.msra.mxu0 0
    %1352 = vmatprep.mubr.bf16.mxu0 0
    %1353 = vmatmul.mubr.bf16.gmra.mrb[0].mxu0 %v812
    %v1354 = vpop.f32.mrb[0].mxu0
    %v1355 = vadd.f32 %v524, %v1354
    %v1356 = vpop.f32.mrb[0].mxu0
    %v1357 = vadd.f32 %v528, %v1356
    %v1358 = vpop.f32.mrb[0].mxu0
    %v1359 = vpop.f32.mrb[0].mxu0
    %1360 = vdwg.mxu0
    %1361 = vmatprep.subr.bf16.mxu0 0
    %1362 = vmatpush1.bf16.msra.mxu0 %v1274
    %1363 = vmatprep.subr.bf16.mxu0 0
    %1364 = vmatpush1.bf16.msra.mxu0 %v1277
    %1365 = vmatprep.subr.bf16.mxu0 0
    %1366 = vmatpush1.bf16.msra.mxu0 %v1280
    %1367 = vmatprep.subr.bf16.mxu0 0
    %1368 = vmatpush1.bf16.msra.mxu0 %v1283
    %1369 = vmatprep.subr.bf16.mxu0 0
    %1370 = vmatpush1.bf16.msra.mxu0 %v1286
    %1371 = vmatprep.subr.bf16.mxu0 0
    %1372 = vmatpush1.bf16.msra.mxu0 %v1289
    %1373 = vmatprep.subr.bf16.mxu0 0
    %1374 = vmatpush1.bf16.msra.mxu0 %v1292
    %1375 = vmatprep.subr.bf16.mxu0 0
    %1376 = vmatpush1.bf16.msra.mxu0 %v1295
    %1377 = vmatprep.subr.bf16.mxu0 0
    %1378 = vmatpush1.bf16.msra.mxu0 0
    %1379 = vmatprep.subr.bf16.mxu0 0
    %1380 = vmatpush1.bf16.msra.mxu0 0
    %1381 = vmatprep.subr.bf16.mxu0 0
    %1382 = vmatpush1.bf16.msra.mxu0 0
    %1383 = vmatprep.subr.bf16.mxu0 0
    %1384 = vmatpush1.bf16.msra.mxu0 0
    %1385 = vmatprep.subr.bf16.mxu0 0
    %1386 = vmatpush1.bf16.msra.mxu0 0
    %1387 = vmatprep.subr.bf16.mxu0 0
    %1388 = vmatpush1.bf16.msra.mxu0 0
    %1389 = vmatprep.subr.bf16.mxu0 0
    %1390 = vmatpush1.bf16.msra.mxu0 0
    %1391 = vmatprep.subr.bf16.mxu0 0
    %1392 = vmatpush1.bf16.msra.mxu0 0
    %1393 = vmatprep.mubr.bf16.mxu0 0
    %1394 = vmatmul.mubr.bf16.gmra.mrb[0].mxu0 %v812
    %v1395 = vpop.f32.mrb[0].mxu0
    %v1396 = vadd.f32 %v532, %v1395
    %v1397 = vpop.f32.mrb[0].mxu0
    %v1398 = vpop.f32.mrb[0].mxu0
    %v1399 = vpop.f32.mrb[0].mxu0
    %1400 = vdwg.mxu0
    %v1401 = vadd.f32 %v1355, %v1122
    %v1402 = vxor.u32 %v1401, 2147483648
    %v1403 = vmul.f32 %v1402, 1.442695
    %v1404 = vpow.pop %v1403
    %v1405 = vadd.f32 %v1404, 1.0
    %v1406 = vrcp.pop %v1405
    %v1407 = vmul.f32 1.0, %v1406
    %v1408 = vadd.f32 %v1357, %v1124
    %v1409 = vxor.u32 %v1408, 2147483648
    %v1410 = vmul.f32 %v1409, 1.442695
    %v1411 = vpow.pop %v1410
    %v1412 = vadd.f32 %v1411, 1.0
    %v1413 = vrcp.pop %v1412
    %v1414 = vmul.f32 1.0, %v1413
    %v1415 = vadd.f32 %v1163, %v541
    %v1416 = vmul.f32 %v1407, %v1415
    %v1417 = vadd.f32 %v1396, %v1416
    %v1418 = vtanh.pop %v1417
    %v1419 = vsub.f32 %v545, %v1418
    %v1420 = vmul.f32 %v1414, %v1419
    %v1421 = vadd.f32 %v1418, %v1420
    %v1422 = vpack.c.bf16 %v1191, %v1191
    %1423 = vmatprep.subr.bf16.mxu0 %v660
    %1424 = vmatpush1.bf16.msra.mxu0 %v659
    %1425 = vmatprep.subr.bf16.mxu0 %v663
    %1426 = vmatpush1.bf16.msra.mxu0 %v662
    %1427 = vmatprep.subr.bf16.mxu0 %v666
    %1428 = vmatpush1.bf16.msra.mxu0 %v665
    %1429 = vmatprep.subr.bf16.mxu0 %v669
    %1430 = vmatpush1.bf16.msra.mxu0 %v668
    %1431 = vmatprep.subr.bf16.mxu0 %v672
    %1432 = vmatpush1.bf16.msra.mxu0 %v671
    %1433 = vmatprep.subr.bf16.mxu0 %v675
    %1434 = vmatpush1.bf16.msra.mxu0 %v674
    %1435 = vmatprep.subr.bf16.mxu0 %v678
    %1436 = vmatpush1.bf16.msra.mxu0 %v677
    %1437 = vmatprep.subr.bf16.mxu0 %v681
    %1438 = vmatpush1.bf16.msra.mxu0 %v680
    %1439 = vmatprep.subr.bf16.mxu0 0
    %1440 = vmatpush1.bf16.msra.mxu0 0
    %1441 = vmatprep.subr.bf16.mxu0 0
    %1442 = vmatpush1.bf16.msra.mxu0 0
    %1443 = vmatprep.subr.bf16.mxu0 0
    %1444 = vmatpush1.bf16.msra.mxu0 0
    %1445 = vmatprep.subr.bf16.mxu0 0
    %1446 = vmatpush1.bf16.msra.mxu0 0
    %1447 = vmatprep.subr.bf16.mxu0 0
    %1448 = vmatpush1.bf16.msra.mxu0 0
    %1449 = vmatprep.subr.bf16.mxu0 0
    %1450 = vmatpush1.bf16.msra.mxu0 0
    %1451 = vmatprep.subr.bf16.mxu0 0
    %1452 = vmatpush1.bf16.msra.mxu0 0
    %1453 = vmatprep.subr.bf16.mxu0 0
    %1454 = vmatpush1.bf16.msra.mxu0 0
    %1455 = vmatprep.mubr.bf16.mxu0 0
    %1456 = vmatmul.mubr.bf16.gmra.mrb[0].mxu0 %v1422
    %v1457 = vpop.f32.mrb[0].mxu0
    %v1458 = vadd.f32 0.0, %v1457
    %v1459 = vpop.f32.mrb[0].mxu0
    %v1460 = vadd.f32 0.0, %v1459
    %v1461 = vpop.f32.mrb[0].mxu0
    %v1462 = vpop.f32.mrb[0].mxu0
    %1463 = vdwg.mxu0
    %1464 = vmatprep.subr.bf16.mxu0 0
    %1465 = vmatpush1.bf16.msra.mxu0 %v661
    %1466 = vmatprep.subr.bf16.mxu0 0
    %1467 = vmatpush1.bf16.msra.mxu0 %v664
    %1468 = vmatprep.subr.bf16.mxu0 0
    %1469 = vmatpush1.bf16.msra.mxu0 %v667
    %1470 = vmatprep.subr.bf16.mxu0 0
    %1471 = vmatpush1.bf16.msra.mxu0 %v670
    %1472 = vmatprep.subr.bf16.mxu0 0
    %1473 = vmatpush1.bf16.msra.mxu0 %v673
    %1474 = vmatprep.subr.bf16.mxu0 0
    %1475 = vmatpush1.bf16.msra.mxu0 %v676
    %1476 = vmatprep.subr.bf16.mxu0 0
    %1477 = vmatpush1.bf16.msra.mxu0 %v679
    %1478 = vmatprep.subr.bf16.mxu0 0
    %1479 = vmatpush1.bf16.msra.mxu0 %v682
    %1480 = vmatprep.subr.bf16.mxu0 0
    %1481 = vmatpush1.bf16.msra.mxu0 0
    %1482 = vmatprep.subr.bf16.mxu0 0
    %1483 = vmatpush1.bf16.msra.mxu0 0
    %1484 = vmatprep.subr.bf16.mxu0 0
    %1485 = vmatpush1.bf16.msra.mxu0 0
    %1486 = vmatprep.subr.bf16.mxu0 0
    %1487 = vmatpush1.bf16.msra.mxu0 0
    %1488 = vmatprep.subr.bf16.mxu0 0
    %1489 = vmatpush1.bf16.msra.mxu0 0
    %1490 = vmatprep.subr.bf16.mxu0 0
    %1491 = vmatpush1.bf16.msra.mxu0 0
    %1492 = vmatprep.subr.bf16.mxu0 0
    %1493 = vmatpush1.bf16.msra.mxu0 0
    %1494 = vmatprep.subr.bf16.mxu0 0
    %1495 = vmatpush1.bf16.msra.mxu0 0
    %1496 = vmatprep.mubr.bf16.mxu0 0
    %1497 = vmatmul.mubr.bf16.gmra.mrb[0].mxu0 %v1422
    %v1498 = vpop.f32.mrb[0].mxu0
    %v1499 = vadd.f32 0.0, %v1498
    %v1500 = vpop.f32.mrb[0].mxu0
    %v1501 = vpop.f32.mrb[0].mxu0
    %v1502 = vpop.f32.mrb[0].mxu0
    %1503 = vdwg.mxu0
    %v1504 = vpack.c.bf16 %v1421, %v1421
    %1505 = vmatprep.subr.bf16.mxu0 %v1040
    %1506 = vmatpush1.bf16.msra.mxu0 %v1039
    %1507 = vmatprep.subr.bf16.mxu0 %v1043
    %1508 = vmatpush1.bf16.msra.mxu0 %v1042
    %1509 = vmatprep.subr.bf16.mxu0 %v1046
    %1510 = vmatpush1.bf16.msra.mxu0 %v1045
    %1511 = vmatprep.subr.bf16.mxu0 %v1049
    %1512 = vmatpush1.bf16.msra.mxu0 %v1048
    %1513 = vmatprep.subr.bf16.mxu0 %v1052
    %1514 = vmatpush1.bf16.msra.mxu0 %v1051
    %1515 = vmatprep.subr.bf16.mxu0 %v1055
    %1516 = vmatpush1.bf16.msra.mxu0 %v1054
    %1517 = vmatprep.subr.bf16.mxu0 %v1058
    %1518 = vmatpush1.bf16.msra.mxu0 %v1057
    %1519 = vmatprep.subr.bf16.mxu0 %v1061
    %1520 = vmatpush1.bf16.msra.mxu0 %v1060
    %1521 = vmatprep.subr.bf16.mxu0 0
    %1522 = vmatpush1.bf16.msra.mxu0 0
    %1523 = vmatprep.subr.bf16.mxu0 0
    %1524 = vmatpush1.bf16.msra.mxu0 0
    %1525 = vmatprep.subr.bf16.mxu0 0
    %1526 = vmatpush1.bf16.msra.mxu0 0
    %1527 = vmatprep.subr.bf16.mxu0 0
    %1528 = vmatpush1.bf16.msra.mxu0 0
    %1529 = vmatprep.subr.bf16.mxu0 0
    %1530 = vmatpush1.bf16.msra.mxu0 0
    %1531 = vmatprep.subr.bf16.mxu0 0
    %1532 = vmatpush1.bf16.msra.mxu0 0
    %1533 = vmatprep.subr.bf16.mxu0 0
    %1534 = vmatpush1.bf16.msra.mxu0 0
    %1535 = vmatprep.subr.bf16.mxu0 0
    %1536 = vmatpush1.bf16.msra.mxu0 0
    %1537 = vmatprep.mubr.bf16.mxu0 0
    %1538 = vmatmul.mubr.bf16.gmra.mrb[0].mxu0 %v1504
    %v1539 = vpop.f32.mrb[0].mxu0
    %v1540 = vadd.f32 0.0, %v1539
    %v1541 = vpop.f32.mrb[0].mxu0
    %v1542 = vadd.f32 0.0, %v1541
    %v1543 = vpop.f32.mrb[0].mxu0
    %v1544 = vpop.f32.mrb[0].mxu0
    %1545 = vdwg.mxu0
    %1546 = vmatprep.subr.bf16.mxu0 0
    %1547 = vmatpush1.bf16.msra.mxu0 %v1041
    %1548 = vmatprep.subr.bf16.mxu0 0
    %1549 = vmatpush1.bf16.msra.mxu0 %v1044
    %1550 = vmatprep.subr.bf16.mxu0 0
    %1551 = vmatpush1.bf16.msra.mxu0 %v1047
    %1552 = vmatprep.subr.bf16.mxu0 0
    %1553 = vmatpush1.bf16.msra.mxu0 %v1050
    %1554 = vmatprep.subr.bf16.mxu0 0
    %1555 = vmatpush1.bf16.msra.mxu0 %v1053
    %1556 = vmatprep.subr.bf16.mxu0 0
    %1557 = vmatpush1.bf16.msra.mxu0 %v1056
    %1558 = vmatprep.subr.bf16.mxu0 0
    %1559 = vmatpush1.bf16.msra.mxu0 %v1059
    %1560 = vmatprep.subr.bf16.mxu0 0
    %1561 = vmatpush1.bf16.msra.mxu0 %v1062
    %1562 = vmatprep.subr.bf16.mxu0 0
    %1563 = vmatpush1.bf16.msra.mxu0 0
    %1564 = vmatprep.subr.bf16.mxu0 0
    %1565 = vmatpush1.bf16.msra.mxu0 0
    %1566 = vmatprep.subr.bf16.mxu0 0
    %1567 = vmatpush1.bf16.msra.mxu0 0
    %1568 = vmatprep.subr.bf16.mxu0 0
    %1569 = vmatpush1.bf16.msra.mxu0 0
    %1570 = vmatprep.subr.bf16.mxu0 0
    %1571 = vmatpush1.bf16.msra.mxu0 0
    %1572 = vmatprep.subr.bf16.mxu0 0
    %1573 = vmatpush1.bf16.msra.mxu0 0
    %1574 = vmatprep.subr.bf16.mxu0 0
    %1575 = vmatpush1.bf16.msra.mxu0 0
    %1576 = vmatprep.subr.bf16.mxu0 0
    %1577 = vmatpush1.bf16.msra.mxu0 0
    %1578 = vmatprep.mubr.bf16.mxu0 0
    %1579 = vmatmul.mubr.bf16.gmra.mrb[0].mxu0 %v1504
    %v1580 = vpop.f32.mrb[0].mxu0
    %v1581 = vadd.f32 0.0, %v1580
    %v1582 = vpop.f32.mrb[0].mxu0
    %v1583 = vpop.f32.mrb[0].mxu0
    %v1584 = vpop.f32.mrb[0].mxu0
    %1585 = vdwg.mxu0
    %v1586 = vld [vmem:[#allocation2 + $0x30] sm:$0xff]
    %v1587 = vld [vmem:[#allocation2 + $0x38] sm:$0xff]
    %v1588 = vld [vmem:[#allocation2 + $0x40] sm:$0xff]
    %v1589 = vadd.f32 %v1586, %v1458
    %v1590 = vxor.u32 %v1589, 2147483648
    %v1591 = vmul.f32 %v1590, 1.442695
    %v1592 = vpow.pop %v1591
    %v1593 = vadd.f32 %v1592, 1.0
    %v1594 = vrcp.pop %v1593
    %v1595 = vmul.f32 1.0, %v1594
    %v1596 = vadd.f32 %v1587, %v1460
    %v1597 = vxor.u32 %v1596, 2147483648
    %v1598 = vmul.f32 %v1597, 1.442695
    %v1599 = vpow.pop %v1598
    %v1600 = vadd.f32 %v1599, 1.0
    %v1601 = vrcp.pop %v1600
    %v1602 = vmul.f32 1.0, %v1601
    %v1603 = vadd.f32 %v1499, %v517
    %v1604 = vmul.f32 %v1595, %v1603
    %v1605 = vadd.f32 %v1588, %v1604
    %v1606 = vtanh.pop %v1605
    %v1607 = vsub.f32 %v1191, %v1606
    %v1608 = vmul.f32 %v1602, %v1607
    %v1609 = vadd.f32 %v1606, %v1608
    %1610 = vmatprep.subr.bf16.mxu0 %v1273
    %1611 = vmatpush1.bf16.msra.mxu0 %v1272
    %1612 = vmatprep.subr.bf16.mxu0 %v1276
    %1613 = vmatpush1.bf16.msra.mxu0 %v1275
    %1614 = vmatprep.subr.bf16.mxu0 %v1279
    %1615 = vmatpush1.bf16.msra.mxu0 %v1278
    %1616 = vmatprep.subr.bf16.mxu0 %v1282
    %1617 = vmatpush1.bf16.msra.mxu0 %v1281
    %1618 = vmatprep.subr.bf16.mxu0 %v1285
    %1619 = vmatpush1.bf16.msra.mxu0 %v1284
    %1620 = vmatprep.subr.bf16.mxu0 %v1288
    %1621 = vmatpush1.bf16.msra.mxu0 %v1287
    %1622 = vmatprep.subr.bf16.mxu0 %v1291
    %1623 = vmatpush1.bf16.msra.mxu0 %v1290
    %1624 = vmatprep.subr.bf16.mxu0 %v1294
    %1625 = vmatpush1.bf16.msra.mxu0 %v1293
    %1626 = vmatprep.subr.bf16.mxu0 0
    %1627 = vmatpush1.bf16.msra.mxu0 0
    %1628 = vmatprep.subr.bf16.mxu0 0
    %1629 = vmatpush1.bf16.msra.mxu0 0
    %1630 = vmatprep.subr.bf16.mxu0 0
    %1631 = vmatpush1.bf16.msra.mxu0 0
    %1632 = vmatprep.subr.bf16.mxu0 0
    %1633 = vmatpush1.bf16.msra.mxu0 0
    %1634 = vmatprep.subr.bf16.mxu0 0
    %1635 = vmatpush1.bf16.msra.mxu0 0
    %1636 = vmatprep.subr.bf16.mxu0 0
    %1637 = vmatpush1.bf16.msra.mxu0 0
    %1638 = vmatprep.subr.bf16.mxu0 0
    %1639 = vmatpush1.bf16.msra.mxu0 0
    %1640 = vmatprep.subr.bf16.mxu0 0
    %1641 = vmatpush1.bf16.msra.mxu0 0
    %1642 = vmatprep.mubr.bf16.mxu0 0
    %1643 = vmatmul.mubr.bf16.gmra.mrb[0].mxu0 %v1422
    %v1644 = vpop.f32.mrb[0].mxu0
    %v1645 = vadd.f32 %v524, %v1644
    %v1646 = vpop.f32.mrb[0].mxu0
    %v1647 = vadd.f32 %v528, %v1646
    %v1648 = vpop.f32.mrb[0].mxu0
    %v1649 = vpop.f32.mrb[0].mxu0
    %1650 = vdwg.mxu0
    %1651 = vmatprep.subr.bf16.mxu0 0
    %1652 = vmatpush1.bf16.msra.mxu0 %v1274
    %1653 = vmatprep.subr.bf16.mxu0 0
    %1654 = vmatpush1.bf16.msra.mxu0 %v1277
    %1655 = vmatprep.subr.bf16.mxu0 0
    %1656 = vmatpush1.bf16.msra.mxu0 %v1280
    %1657 = vmatprep.subr.bf16.mxu0 0
    %1658 = vmatpush1.bf16.msra.mxu0 %v1283
    %1659 = vmatprep.subr.bf16.mxu0 0
    %1660 = vmatpush1.bf16.msra.mxu0 %v1286
    %1661 = vmatprep.subr.bf16.mxu0 0
    %1662 = vmatpush1.bf16.msra.mxu0 %v1289
    %1663 = vmatprep.subr.bf16.mxu0 0
    %1664 = vmatpush1.bf16.msra.mxu0 %v1292
    %1665 = vmatprep.subr.bf16.mxu0 0
    %1666 = vmatpush1.bf16.msra.mxu0 %v1295
    %1667 = vmatprep.subr.bf16.mxu0 0
    %1668 = vmatpush1.bf16.msra.mxu0 0
    %1669 = vmatprep.subr.bf16.mxu0 0
    %1670 = vmatpush1.bf16.msra.mxu0 0
    %1671 = vmatprep.subr.bf16.mxu0 0
    %1672 = vmatpush1.bf16.msra.mxu0 0
    %1673 = vmatprep.subr.bf16.mxu0 0
    %1674 = vmatpush1.bf16.msra.mxu0 0
    %1675 = vmatprep.subr.bf16.mxu0 0
    %1676 = vmatpush1.bf16.msra.mxu0 0
    %1677 = vmatprep.subr.bf16.mxu0 0
    %1678 = vmatpush1.bf16.msra.mxu0 0
    %1679 = vmatprep.subr.bf16.mxu0 0
    %1680 = vmatpush1.bf16.msra.mxu0 0
    %1681 = vmatprep.subr.bf16.mxu0 0
    %1682 = vmatpush1.bf16.msra.mxu0 0
    %1683 = vmatprep.mubr.bf16.mxu0 0
    %1684 = vmatmul.mubr.bf16.gmra.mrb[0].mxu0 %v1422
    %v1685 = vpop.f32.mrb[0].mxu0
    %v1686 = vadd.f32 %v532, %v1685
    %v1687 = vpop.f32.mrb[0].mxu0
    %v1688 = vpop.f32.mrb[0].mxu0
    %v1689 = vpop.f32.mrb[0].mxu0
    %1690 = vdwg.mxu0
    %v1691 = vadd.f32 %v1645, %v1540
    %v1692 = vxor.u32 %v1691, 2147483648
    %v1693 = vmul.f32 %v1692, 1.442695
    %v1694 = vpow.pop %v1693
    %v1695 = vadd.f32 %v1694, 1.0
    %v1696 = vrcp.pop %v1695
    %v1697 = vmul.f32 1.0, %v1696
    %v1698 = vadd.f32 %v1647, %v1542
    %v1699 = vxor.u32 %v1698, 2147483648
    %v1700 = vmul.f32 %v1699, 1.442695
    %v1701 = vpow.pop %v1700
    %v1702 = vadd.f32 %v1701, 1.0
    %v1703 = vrcp.pop %v1702
    %v1704 = vmul.f32 1.0, %v1703
    %v1705 = vadd.f32 %v1581, %v541
    %v1706 = vmul.f32 %v1697, %v1705
    %v1707 = vadd.f32 %v1686, %v1706
    %v1708 = vtanh.pop %v1707
    %v1709 = vsub.f32 %v1421, %v1708
    %v1710 = vmul.f32 %v1704, %v1709
    %v1711 = vadd.f32 %v1708, %v1710
    %v1712 = vpack.c.bf16 %v1609, %v1609
    %1713 = vmatprep.subr.bf16.mxu0 %v660
    %1714 = vmatpush1.bf16.msra.mxu0 %v659
    %1715 = vmatprep.subr.bf16.mxu0 %v663
    %1716 = vmatpush1.bf16.msra.mxu0 %v662
    %1717 = vmatprep.subr.bf16.mxu0 %v666
    %1718 = vmatpush1.bf16.msra.mxu0 %v665
    %1719 = vmatprep.subr.bf16.mxu0 %v669
    %1720 = vmatpush1.bf16.msra.mxu0 %v668
    %1721 = vmatprep.subr.bf16.mxu0 %v672
    %1722 = vmatpush1.bf16.msra.mxu0 %v671
    %1723 = vmatprep.subr.bf16.mxu0 %v675
    %1724 = vmatpush1.bf16.msra.mxu0 %v674
    %1725 = vmatprep.subr.bf16.mxu0 %v678
    %1726 = vmatpush1.bf16.msra.mxu0 %v677
    %1727 = vmatprep.subr.bf16.mxu0 %v681
    %1728 = vmatpush1.bf16.msra.mxu0 %v680
    %1729 = vmatprep.subr.bf16.mxu0 0
    %1730 = vmatpush1.bf16.msra.mxu0 0
    %1731 = vmatprep.subr.bf16.mxu0 0
    %1732 = vmatpush1.bf16.msra.mxu0 0
    %1733 = vmatprep.subr.bf16.mxu0 0
    %1734 = vmatpush1.bf16.msra.mxu0 0
    %1735 = vmatprep.subr.bf16.mxu0 0
    %1736 = vmatpush1.bf16.msra.mxu0 0
    %1737 = vmatprep.subr.bf16.mxu0 0
    %1738 = vmatpush1.bf16.msra.mxu0 0
    %1739 = vmatprep.subr.bf16.mxu0 0
    %1740 = vmatpush1.bf16.msra.mxu0 0
    %1741 = vmatprep.subr.bf16.mxu0 0
    %1742 = vmatpush1.bf16.msra.mxu0 0
    %1743 = vmatprep.subr.bf16.mxu0 0
    %1744 = vmatpush1.bf16.msra.mxu0 0
    %1745 = vmatprep.mubr.bf16.mxu0 0
    %1746 = vmatmul.mubr.bf16.gmra.mrb[0].mxu0 %v1712
    %v1747 = vpop.f32.mrb[0].mxu0
    %v1748 = vadd.f32 0.0, %v1747
    %v1749 = vpop.f32.mrb[0].mxu0
    %v1750 = vadd.f32 0.0, %v1749
    %v1751 = vpop.f32.mrb[0].mxu0
    %v1752 = vpop.f32.mrb[0].mxu0
    %1753 = vdwg.mxu0
    %1754 = vmatprep.subr.bf16.mxu0 0
    %1755 = vmatpush1.bf16.msra.mxu0 %v661
    %1756 = vmatprep.subr.bf16.mxu0 0
    %1757 = vmatpush1.bf16.msra.mxu0 %v664
    %1758 = vmatprep.subr.bf16.mxu0 0
    %1759 = vmatpush1.bf16.msra.mxu0 %v667
    %1760 = vmatprep.subr.bf16.mxu0 0
    %1761 = vmatpush1.bf16.msra.mxu0 %v670
    %1762 = vmatprep.subr.bf16.mxu0 0
    %1763 = vmatpush1.bf16.msra.mxu0 %v673
    %1764 = vmatprep.subr.bf16.mxu0 0
    %1765 = vmatpush1.bf16.msra.mxu0 %v676
    %1766 = vmatprep.subr.bf16.mxu0 0
    %1767 = vmatpush1.bf16.msra.mxu0 %v679
    %1768 = vmatprep.subr.bf16.mxu0 0
    %1769 = vmatpush1.bf16.msra.mxu0 %v682
    %1770 = vmatprep.subr.bf16.mxu0 0
    %1771 = vmatpush1.bf16.msra.mxu0 0
    %1772 = vmatprep.subr.bf16.mxu0 0
    %1773 = vmatpush1.bf16.msra.mxu0 0
    %1774 = vmatprep.subr.bf16.mxu0 0
    %1775 = vmatpush1.bf16.msra.mxu0 0
    %1776 = vmatprep.subr.bf16.mxu0 0
    %1777 = vmatpush1.bf16.msra.mxu0 0
    %1778 = vmatprep.subr.bf16.mxu0 0
    %1779 = vmatpush1.bf16.msra.mxu0 0
    %1780 = vmatprep.subr.bf16.mxu0 0
    %1781 = vmatpush1.bf16.msra.mxu0 0
    %1782 = vmatprep.subr.bf16.mxu0 0
    %1783 = vmatpush1.bf16.msra.mxu0 0
    %1784 = vmatprep.subr.bf16.mxu0 0
    %1785 = vmatpush1.bf16.msra.mxu0 0
    %1786 = vmatprep.mubr.bf16.mxu0 0
    %1787 = vmatmul.mubr.bf16.gmra.mrb[0].mxu0 %v1712
    %v1788 = vpop.f32.mrb[0].mxu0
    %v1789 = vadd.f32 0.0, %v1788
    %v1790 = vpop.f32.mrb[0].mxu0
    %v1791 = vpop.f32.mrb[0].mxu0
    %v1792 = vpop.f32.mrb[0].mxu0
    %1793 = vdwg.mxu0
    %v1794 = vpack.c.bf16 %v1711, %v1711
    %1795 = vmatprep.subr.bf16.mxu0 %v1040
    %1796 = vmatpush1.bf16.msra.mxu0 %v1039
    %1797 = vmatprep.subr.bf16.mxu0 %v1043
    %1798 = vmatpush1.bf16.msra.mxu0 %v1042
    %1799 = vmatprep.subr.bf16.mxu0 %v1046
    %1800 = vmatpush1.bf16.msra.mxu0 %v1045
    %1801 = vmatprep.subr.bf16.mxu0 %v1049
    %1802 = vmatpush1.bf16.msra.mxu0 %v1048
    %1803 = vmatprep.subr.bf16.mxu0 %v1052
    %1804 = vmatpush1.bf16.msra.mxu0 %v1051
    %1805 = vmatprep.subr.bf16.mxu0 %v1055
    %1806 = vmatpush1.bf16.msra.mxu0 %v1054
    %1807 = vmatprep.subr.bf16.mxu0 %v1058
    %1808 = vmatpush1.bf16.msra.mxu0 %v1057
    %1809 = vmatprep.subr.bf16.mxu0 %v1061
    %1810 = vmatpush1.bf16.msra.mxu0 %v1060
    %1811 = vmatprep.subr.bf16.mxu0 0
    %1812 = vmatpush1.bf16.msra.mxu0 0
    %1813 = vmatprep.subr.bf16.mxu0 0
    %1814 = vmatpush1.bf16.msra.mxu0 0
    %1815 = vmatprep.subr.bf16.mxu0 0
    %1816 = vmatpush1.bf16.msra.mxu0 0
    %1817 = vmatprep.subr.bf16.mxu0 0
    %1818 = vmatpush1.bf16.msra.mxu0 0
    %1819 = vmatprep.subr.bf16.mxu0 0
    %1820 = vmatpush1.bf16.msra.mxu0 0
    %1821 = vmatprep.subr.bf16.mxu0 0
    %1822 = vmatpush1.bf16.msra.mxu0 0
    %1823 = vmatprep.subr.bf16.mxu0 0
    %1824 = vmatpush1.bf16.msra.mxu0 0
    %1825 = vmatprep.subr.bf16.mxu0 0
    %1826 = vmatpush1.bf16.msra.mxu0 0
    %1827 = vmatprep.mubr.bf16.mxu0 0
    %1828 = vmatmul.mubr.bf16.gmra.mrb[0].mxu0 %v1794
    %v1829 = vpop.f32.mrb[0].mxu0
    %v1830 = vadd.f32 0.0, %v1829
    %v1831 = vpop.f32.mrb[0].mxu0
    %v1832 = vadd.f32 0.0, %v1831
    %v1833 = vpop.f32.mrb[0].mxu0
    %v1834 = vpop.f32.mrb[0].mxu0
    %1835 = vdwg.mxu0
    %1836 = vmatprep.subr.bf16.mxu0 0
    %1837 = vmatpush1.bf16.msra.mxu0 %v1041
    %1838 = vmatprep.subr.bf16.mxu0 0
    %1839 = vmatpush1.bf16.msra.mxu0 %v1044
    %1840 = vmatprep.subr.bf16.mxu0 0
    %1841 = vmatpush1.bf16.msra.mxu0 %v1047
    %1842 = vmatprep.subr.bf16.mxu0 0
    %1843 = vmatpush1.bf16.msra.mxu0 %v1050
    %1844 = vmatprep.subr.bf16.mxu0 0
    %1845 = vmatpush1.bf16.msra.mxu0 %v1053
    %1846 = vmatprep.subr.bf16.mxu0 0
    %1847 = vmatpush1.bf16.msra.mxu0 %v1056
    %1848 = vmatprep.subr.bf16.mxu0 0
    %1849 = vmatpush1.bf16.msra.mxu0 %v1059
    %1850 = vmatprep.subr.bf16.mxu0 0
    %1851 = vmatpush1.bf16.msra.mxu0 %v1062
    %1852 = vmatprep.subr.bf16.mxu0 0
    %1853 = vmatpush1.bf16.msra.mxu0 0
    %1854 = vmatprep.subr.bf16.mxu0 0
    %1855 = vmatpush1.bf16.msra.mxu0 0
    %1856 = vmatprep.subr.bf16.mxu0 0
    %1857 = vmatpush1.bf16.msra.mxu0 0
    %1858 = vmatprep.subr.bf16.mxu0 0
    %1859 = vmatpush1.bf16.msra.mxu0 0
    %1860 = vmatprep.subr.bf16.mxu0 0
    %1861 = vmatpush1.bf16.msra.mxu0 0
    %1862 = vmatprep.subr.bf16.mxu0 0
    %1863 = vmatpush1.bf16.msra.mxu0 0
    %1864 = vmatprep.subr.bf16.mxu0 0
    %1865 = vmatpush1.bf16.msra.mxu0 0
    %1866 = vmatprep.subr.bf16.mxu0 0
    %1867 = vmatpush1.bf16.msra.mxu0 0
    %1868 = vmatprep.mubr.bf16.mxu0 0
    %1869 = vmatmul.mubr.bf16.gmra.mrb[0].mxu0 %v1794
    %v1870 = vpop.f32.mrb[0].mxu0
    %v1871 = vadd.f32 0.0, %v1870
    %v1872 = vpop.f32.mrb[0].mxu0
    %v1873 = vpop.f32.mrb[0].mxu0
    %v1874 = vpop.f32.mrb[0].mxu0
    %1875 = vdwg.mxu0
    %v1876 = vld [vmem:[#allocation2 + $0x48] sm:$0xff]
    %v1877 = vld [vmem:[#allocation2 + $0x50] sm:$0xff]
    %v1878 = vld [vmem:[#allocation2 + $0x58] sm:$0xff]
    %v1879 = vadd.f32 %v1876, %v1748
    %v1880 = vxor.u32 %v1879, 2147483648
    %v1881 = vmul.f32 %v1880, 1.442695
    %v1882 = vpow.pop %v1881
    %v1883 = vadd.f32 %v1882, 1.0
    %v1884 = vrcp.pop %v1883
    %v1885 = vmul.f32 1.0, %v1884
    %v1886 = vadd.f32 %v1877, %v1750
    %v1887 = vxor.u32 %v1886, 2147483648
    %v1888 = vmul.f32 %v1887, 1.442695
    %v1889 = vpow.pop %v1888
    %v1890 = vadd.f32 %v1889, 1.0
    %v1891 = vrcp.pop %v1890
    %v1892 = vmul.f32 1.0, %v1891
    %v1893 = vadd.f32 %v1789, %v517
    %v1894 = vmul.f32 %v1885, %v1893
    %v1895 = vadd.f32 %v1878, %v1894
    %v1896 = vtanh.pop %v1895
    %v1897 = vsub.f32 %v1609, %v1896
    %v1898 = vmul.f32 %v1892, %v1897
    %v1899 = vadd.f32 %v1896, %v1898
    %1900 = vmatprep.subr.bf16.mxu0 %v1273
    %1901 = vmatpush1.bf16.msra.mxu0 %v1272
    %1902 = vmatprep.subr.bf16.mxu0 %v1276
    %1903 = vmatpush1.bf16.msra.mxu0 %v1275
    %1904 = vmatprep.subr.bf16.mxu0 %v1279
    %1905 = vmatpush1.bf16.msra.mxu0 %v1278
    %1906 = vmatprep.subr.bf16.mxu0 %v1282
    %1907 = vmatpush1.bf16.msra.mxu0 %v1281
    %1908 = vmatprep.subr.bf16.mxu0 %v1285
    %1909 = vmatpush1.bf16.msra.mxu0 %v1284
    %1910 = vmatprep.subr.bf16.mxu0 %v1288
    %1911 = vmatpush1.bf16.msra.mxu0 %v1287
    %1912 = vmatprep.subr.bf16.mxu0 %v1291
    %1913 = vmatpush1.bf16.msra.mxu0 %v1290
    %1914 = vmatprep.subr.bf16.mxu0 %v1294
    %1915 = vmatpush1.bf16.msra.mxu0 %v1293
    %1916 = vmatprep.subr.bf16.mxu0 0
    %1917 = vmatpush1.bf16.msra.mxu0 0
    %1918 = vmatprep.subr.bf16.mxu0 0
    %1919 = vmatpush1.bf16.msra.mxu0 0
    %1920 = vmatprep.subr.bf16.mxu0 0
    %1921 = vmatpush1.bf16.msra.mxu0 0
    %1922 = vmatprep.subr.bf16.mxu0 0
    %1923 = vmatpush1.bf16.msra.mxu0 0
    %1924 = vmatprep.subr.bf16.mxu0 0
    %1925 = vmatpush1.bf16.msra.mxu0 0
    %1926 = vmatprep.subr.bf16.mxu0 0
    %1927 = vmatpush1.bf16.msra.mxu0 0
    %1928 = vmatprep.subr.bf16.mxu0 0
    %1929 = vmatpush1.bf16.msra.mxu0 0
    %1930 = vmatprep.subr.bf16.mxu0 0
    %1931 = vmatpush1.bf16.msra.mxu0 0
    %1932 = vmatprep.mubr.bf16.mxu0 0
    %1933 = vmatmul.mubr.bf16.gmra.mrb[0].mxu0 %v1712
    %v1934 = vpop.f32.mrb[0].mxu0
    %v1935 = vadd.f32 %v524, %v1934
    %v1936 = vpop.f32.mrb[0].mxu0
    %v1937 = vadd.f32 %v528, %v1936
    %v1938 = vpop.f32.mrb[0].mxu0
    %v1939 = vpop.f32.mrb[0].mxu0
    %1940 = vdwg.mxu0
    %1941 = vmatprep.subr.bf16.mxu0 0
    %1942 = vmatpush1.bf16.msra.mxu0 %v1274
    %1943 = vmatprep.subr.bf16.mxu0 0
    %1944 = vmatpush1.bf16.msra.mxu0 %v1277
    %1945 = vmatprep.subr.bf16.mxu0 0
    %1946 = vmatpush1.bf16.msra.mxu0 %v1280
    %1947 = vmatprep.subr.bf16.mxu0 0
    %1948 = vmatpush1.bf16.msra.mxu0 %v1283
    %1949 = vmatprep.subr.bf16.mxu0 0
    %1950 = vmatpush1.bf16.msra.mxu0 %v1286
    %1951 = vmatprep.subr.bf16.mxu0 0
    %1952 = vmatpush1.bf16.msra.mxu0 %v1289
    %1953 = vmatprep.subr.bf16.mxu0 0
    %1954 = vmatpush1.bf16.msra.mxu0 %v1292
    %1955 = vmatprep.subr.bf16.mxu0 0
    %1956 = vmatpush1.bf16.msra.mxu0 %v1295
    %1957 = vmatprep.subr.bf16.mxu0 0
    %1958 = vmatpush1.bf16.msra.mxu0 0
    %1959 = vmatprep.subr.bf16.mxu0 0
    %1960 = vmatpush1.bf16.msra.mxu0 0
    %1961 = vmatprep.subr.bf16.mxu0 0
    %1962 = vmatpush1.bf16.msra.mxu0 0
    %1963 = vmatprep.subr.bf16.mxu0 0
    %1964 = vmatpush1.bf16.msra.mxu0 0
    %1965 = vmatprep.subr.bf16.mxu0 0
    %1966 = vmatpush1.bf16.msra.mxu0 0
    %1967 = vmatprep.subr.bf16.mxu0 0
    %1968 = vmatpush1.bf16.msra.mxu0 0
    %1969 = vmatprep.subr.bf16.mxu0 0
    %1970 = vmatpush1.bf16.msra.mxu0 0
    %1971 = vmatprep.subr.bf16.mxu0 0
    %1972 = vmatpush1.bf16.msra.mxu0 0
    %1973 = vmatprep.mubr.bf16.mxu0 0
    %1974 = vmatmul.mubr.bf16.gmra.mrb[0].mxu0 %v1712
    %v1975 = vpop.f32.mrb[0].mxu0
    %v1976 = vadd.f32 %v532, %v1975
    %v1977 = vpop.f32.mrb[0].mxu0
    %v1978 = vpop.f32.mrb[0].mxu0
    %v1979 = vpop.f32.mrb[0].mxu0
    %1980 = vdwg.mxu0
    %v1981 = vadd.f32 %v1935, %v1830
    %v1982 = vxor.u32 %v1981, 2147483648
    %v1983 = vmul.f32 %v1982, 1.442695
    %v1984 = vpow.pop %v1983
    %v1985 = vadd.f32 %v1984, 1.0
    %v1986 = vrcp.pop %v1985
    %v1987 = vmul.f32 1.0, %v1986
    %v1988 = vadd.f32 %v1937, %v1832
    %v1989 = vxor.u32 %v1988, 2147483648
    %v1990 = vmul.f32 %v1989, 1.442695
    %v1991 = vpow.pop %v1990
    %v1992 = vadd.f32 %v1991, 1.0
    %v1993 = vrcp.pop %v1992
    %v1994 = vmul.f32 1.0, %v1993
    %v1995 = vadd.f32 %v1871, %v541
    %v1996 = vmul.f32 %v1987, %v1995
    %v1997 = vadd.f32 %v1976, %v1996
    %v1998 = vtanh.pop %v1997
    %v1999 = vsub.f32 %v1711, %v1998
    %v2000 = vmul.f32 %v1994, %v1999
    %v2001 = vadd.f32 %v1998, %v2000
    %v2002 = vpack.c.bf16 %v1899, %v1899
    %2003 = vmatprep.subr.bf16.mxu0 %v660
    %2004 = vmatpush1.bf16.msra.mxu0 %v659
    %2005 = vmatprep.subr.bf16.mxu0 %v663
    %2006 = vmatpush1.bf16.msra.mxu0 %v662
    %2007 = vmatprep.subr.bf16.mxu0 %v666
    %2008 = vmatpush1.bf16.msra.mxu0 %v665
    %2009 = vmatprep.subr.bf16.mxu0 %v669
    %2010 = vmatpush1.bf16.msra.mxu0 %v668
    %2011 = vmatprep.subr.bf16.mxu0 %v672
    %2012 = vmatpush1.bf16.msra.mxu0 %v671
    %2013 = vmatprep.subr.bf16.mxu0 %v675
    %2014 = vmatpush1.bf16.msra.mxu0 %v674
    %2015 = vmatprep.subr.bf16.mxu0 %v678
    %2016 = vmatpush1.bf16.msra.mxu0 %v677
    %2017 = vmatprep.subr.bf16.mxu0 %v681
    %2018 = vmatpush1.bf16.msra.mxu0 %v680
    %2019 = vmatprep.subr.bf16.mxu0 0
    %2020 = vmatpush1.bf16.msra.mxu0 0
    %2021 = vmatprep.subr.bf16.mxu0 0
    %2022 = vmatpush1.bf16.msra.mxu0 0
    %2023 = vmatprep.subr.bf16.mxu0 0
    %2024 = vmatpush1.bf16.msra.mxu0 0
    %2025 = vmatprep.subr.bf16.mxu0 0
    %2026 = vmatpush1.bf16.msra.mxu0 0
    %2027 = vmatprep.subr.bf16.mxu0 0
    %2028 = vmatpush1.bf16.msra.mxu0 0
    %2029 = vmatprep.subr.bf16.mxu0 0
    %2030 = vmatpush1.bf16.msra.mxu0 0
    %2031 = vmatprep.subr.bf16.mxu0 0
    %2032 = vmatpush1.bf16.msra.mxu0 0
    %2033 = vmatprep.subr.bf16.mxu0 0
    %2034 = vmatpush1.bf16.msra.mxu0 0
    %2035 = vmatprep.mubr.bf16.mxu0 0
    %2036 = vmatmul.mubr.bf16.gmra.mrb[0].mxu0 %v2002
    %v2037 = vpop.f32.mrb[0].mxu0
    %v2038 = vadd.f32 0.0, %v2037
    %v2039 = vpop.f32.mrb[0].mxu0
    %v2040 = vadd.f32 0.0, %v2039
    %v2041 = vpop.f32.mrb[0].mxu0
    %v2042 = vpop.f32.mrb[0].mxu0
    %2043 = vdwg.mxu0
    %2044 = vmatprep.subr.bf16.mxu0 0
    %2045 = vmatpush1.bf16.msra.mxu0 %v661
    %2046 = vmatprep.subr.bf16.mxu0 0
    %2047 = vmatpush1.bf16.msra.mxu0 %v664
    %2048 = vmatprep.subr.bf16.mxu0 0
    %2049 = vmatpush1.bf16.msra.mxu0 %v667
    %2050 = vmatprep.subr.bf16.mxu0 0
    %2051 = vmatpush1.bf16.msra.mxu0 %v670
    %2052 = vmatprep.subr.bf16.mxu0 0
    %2053 = vmatpush1.bf16.msra.mxu0 %v673
    %2054 = vmatprep.subr.bf16.mxu0 0
    %2055 = vmatpush1.bf16.msra.mxu0 %v676
    %2056 = vmatprep.subr.bf16.mxu0 0
    %2057 = vmatpush1.bf16.msra.mxu0 %v679
    %2058 = vmatprep.subr.bf16.mxu0 0
    %2059 = vmatpush1.bf16.msra.mxu0 %v682
    %2060 = vmatprep.subr.bf16.mxu0 0
    %2061 = vmatpush1.bf16.msra.mxu0 0
    %2062 = vmatprep.subr.bf16.mxu0 0
    %2063 = vmatpush1.bf16.msra.mxu0 0
    %2064 = vmatprep.subr.bf16.mxu0 0
    %2065 = vmatpush1.bf16.msra.mxu0 0
    %2066 = vmatprep.subr.bf16.mxu0 0
    %2067 = vmatpush1.bf16.msra.mxu0 0
    %2068 = vmatprep.subr.bf16.mxu0 0
    %2069 = vmatpush1.bf16.msra.mxu0 0
    %2070 = vmatprep.subr.bf16.mxu0 0
    %2071 = vmatpush1.bf16.msra.mxu0 0
    %2072 = vmatprep.subr.bf16.mxu0 0
    %2073 = vmatpush1.bf16.msra.mxu0 0
    %2074 = vmatprep.subr.bf16.mxu0 0
    %2075 = vmatpush1.bf16.msra.mxu0 0
    %2076 = vmatprep.mubr.bf16.mxu0 0
    %2077 = vmatmul.mubr.bf16.gmra.mrb[0].mxu0 %v2002
    %v2078 = vpop.f32.mrb[0].mxu0
    %v2079 = vadd.f32 0.0, %v2078
    %v2080 = vpop.f32.mrb[0].mxu0
    %v2081 = vpop.f32.mrb[0].mxu0
    %v2082 = vpop.f32.mrb[0].mxu0
    %2083 = vdwg.mxu0
    %v2084 = vpack.c.bf16 %v2001, %v2001
    %2085 = vmatprep.subr.bf16.mxu0 %v1040
    %2086 = vmatpush1.bf16.msra.mxu0 %v1039
    %2087 = vmatprep.subr.bf16.mxu0 %v1043
    %2088 = vmatpush1.bf16.msra.mxu0 %v1042
    %2089 = vmatprep.subr.bf16.mxu0 %v1046
    %2090 = vmatpush1.bf16.msra.mxu0 %v1045
    %2091 = vmatprep.subr.bf16.mxu0 %v1049
    %2092 = vmatpush1.bf16.msra.mxu0 %v1048
    %2093 = vmatprep.subr.bf16.mxu0 %v1052
    %2094 = vmatpush1.bf16.msra.mxu0 %v1051
    %2095 = vmatprep.subr.bf16.mxu0 %v1055
    %2096 = vmatpush1.bf16.msra.mxu0 %v1054
    %2097 = vmatprep.subr.bf16.mxu0 %v1058
    %2098 = vmatpush1.bf16.msra.mxu0 %v1057
    %2099 = vmatprep.subr.bf16.mxu0 %v1061
    %2100 = vmatpush1.bf16.msra.mxu0 %v1060
    %2101 = vmatprep.subr.bf16.mxu0 0
    %2102 = vmatpush1.bf16.msra.mxu0 0
    %2103 = vmatprep.subr.bf16.mxu0 0
    %2104 = vmatpush1.bf16.msra.mxu0 0
    %2105 = vmatprep.subr.bf16.mxu0 0
    %2106 = vmatpush1.bf16.msra.mxu0 0
    %2107 = vmatprep.subr.bf16.mxu0 0
    %2108 = vmatpush1.bf16.msra.mxu0 0
    %2109 = vmatprep.subr.bf16.mxu0 0
    %2110 = vmatpush1.bf16.msra.mxu0 0
    %2111 = vmatprep.subr.bf16.mxu0 0
    %2112 = vmatpush1.bf16.msra.mxu0 0
    %2113 = vmatprep.subr.bf16.mxu0 0
    %2114 = vmatpush1.bf16.msra.mxu0 0
    %2115 = vmatprep.subr.bf16.mxu0 0
    %2116 = vmatpush1.bf16.msra.mxu0 0
    %2117 = vmatprep.mubr.bf16.mxu0 0
    %2118 = vmatmul.mubr.bf16.gmra.mrb[0].mxu0 %v2084
    %v2119 = vpop.f32.mrb[0].mxu0
    %v2120 = vadd.f32 0.0, %v2119
    %v2121 = vpop.f32.mrb[0].mxu0
    %v2122 = vadd.f32 0.0, %v2121
    %v2123 = vpop.f32.mrb[0].mxu0
    %v2124 = vpop.f32.mrb[0].mxu0
    %2125 = vdwg.mxu0
    %2126 = vmatprep.subr.bf16.mxu0 0
    %2127 = vmatpush1.bf16.msra.mxu0 %v1041
    %2128 = vmatprep.subr.bf16.mxu0 0
    %2129 = vmatpush1.bf16.msra.mxu0 %v1044
    %2130 = vmatprep.subr.bf16.mxu0 0
    %2131 = vmatpush1.bf16.msra.mxu0 %v1047
    %2132 = vmatprep.subr.bf16.mxu0 0
    %2133 = vmatpush1.bf16.msra.mxu0 %v1050
    %2134 = vmatprep.subr.bf16.mxu0 0
    %2135 = vmatpush1.bf16.msra.mxu0 %v1053
    %2136 = vmatprep.subr.bf16.mxu0 0
    %2137 = vmatpush1.bf16.msra.mxu0 %v1056
    %2138 = vmatprep.subr.bf16.mxu0 0
    %2139 = vmatpush1.bf16.msra.mxu0 %v1059
    %2140 = vmatprep.subr.bf16.mxu0 0
    %2141 = vmatpush1.bf16.msra.mxu0 %v1062
    %2142 = vmatprep.subr.bf16.mxu0 0
    %2143 = vmatpush1.bf16.msra.mxu0 0
    %2144 = vmatprep.subr.bf16.mxu0 0
    %2145 = vmatpush1.bf16.msra.mxu0 0
    %2146 = vmatprep.subr.bf16.mxu0 0
    %2147 = vmatpush1.bf16.msra.mxu0 0
    %2148 = vmatprep.subr.bf16.mxu0 0
    %2149 = vmatpush1.bf16.msra.mxu0 0
    %2150 = vmatprep.subr.bf16.mxu0 0
    %2151 = vmatpush1.bf16.msra.mxu0 0
    %2152 = vmatprep.subr.bf16.mxu0 0
    %2153 = vmatpush1.bf16.msra.mxu0 0
    %2154 = vmatprep.subr.bf16.mxu0 0
    %2155 = vmatpush1.bf16.msra.mxu0 0
    %2156 = vmatprep.subr.bf16.mxu0 0
    %2157 = vmatpush1.bf16.msra.mxu0 0
    %2158 = vmatprep.mubr.bf16.mxu0 0
    %2159 = vmatmul.mubr.bf16.gmra.mrb[0].mxu0 %v2084
    %v2160 = vpop.f32.mrb[0].mxu0
    %v2161 = vadd.f32 0.0, %v2160
    %v2162 = vpop.f32.mrb[0].mxu0
    %v2163 = vpop.f32.mrb[0].mxu0
    %v2164 = vpop.f32.mrb[0].mxu0
    %2165 = vdwg.mxu0
    %v2166 = vld [vmem:[#allocation2 + $0x60] sm:$0xff]
    %v2167 = vld [vmem:[#allocation2 + $0x68] sm:$0xff]
    %v2168 = vld [vmem:[#allocation2 + $0x70] sm:$0xff]
    %v2169 = vadd.f32 %v2166, %v2038
    %v2170 = vxor.u32 %v2169, 2147483648
    %v2171 = vmul.f32 %v2170, 1.442695
    %v2172 = vpow.pop %v2171
    %v2173 = vadd.f32 %v2172, 1.0
    %v2174 = vrcp.pop %v2173
    %v2175 = vmul.f32 1.0, %v2174
    %v2176 = vadd.f32 %v2167, %v2040
    %v2177 = vxor.u32 %v2176, 2147483648
    %v2178 = vmul.f32 %v2177, 1.442695
    %v2179 = vpow.pop %v2178
    %v2180 = vadd.f32 %v2179, 1.0
    %v2181 = vrcp.pop %v2180
    %v2182 = vmul.f32 1.0, %v2181
    %v2183 = vadd.f32 %v2079, %v517
    %v2184 = vmul.f32 %v2175, %v2183
    %v2185 = vadd.f32 %v2168, %v2184
    %v2186 = vtanh.pop %v2185
    %v2187 = vsub.f32 %v1899, %v2186
    %v2188 = vmul.f32 %v2182, %v2187
    %v2189 = vadd.f32 %v2186, %v2188
    %2190 = vmatprep.subr.bf16.mxu0 %v1273
    %2191 = vmatpush1.bf16.msra.mxu0 %v1272
    %2192 = vmatprep.subr.bf16.mxu0 %v1276
    %2193 = vmatpush1.bf16.msra.mxu0 %v1275
    %2194 = vmatprep.subr.bf16.mxu0 %v1279
    %2195 = vmatpush1.bf16.msra.mxu0 %v1278
    %2196 = vmatprep.subr.bf16.mxu0 %v1282
    %2197 = vmatpush1.bf16.msra.mxu0 %v1281
    %2198 = vmatprep.subr.bf16.mxu0 %v1285
    %2199 = vmatpush1.bf16.msra.mxu0 %v1284
    %2200 = vmatprep.subr.bf16.mxu0 %v1288
    %2201 = vmatpush1.bf16.msra.mxu0 %v1287
    %2202 = vmatprep.subr.bf16.mxu0 %v1291
    %2203 = vmatpush1.bf16.msra.mxu0 %v1290
    %2204 = vmatprep.subr.bf16.mxu0 %v1294
    %2205 = vmatpush1.bf16.msra.mxu0 %v1293
    %2206 = vmatprep.subr.bf16.mxu0 0
    %2207 = vmatpush1.bf16.msra.mxu0 0
    %2208 = vmatprep.subr.bf16.mxu0 0
    %2209 = vmatpush1.bf16.msra.mxu0 0
    %2210 = vmatprep.subr.bf16.mxu0 0
    %2211 = vmatpush1.bf16.msra.mxu0 0
    %2212 = vmatprep.subr.bf16.mxu0 0
    %2213 = vmatpush1.bf16.msra.mxu0 0
    %2214 = vmatprep.subr.bf16.mxu0 0
    %2215 = vmatpush1.bf16.msra.mxu0 0
    %2216 = vmatprep.subr.bf16.mxu0 0
    %2217 = vmatpush1.bf16.msra.mxu0 0
    %2218 = vmatprep.subr.bf16.mxu0 0
    %2219 = vmatpush1.bf16.msra.mxu0 0
    %2220 = vmatprep.subr.bf16.mxu0 0
    %2221 = vmatpush1.bf16.msra.mxu0 0
    %2222 = vmatprep.mubr.bf16.mxu0 0
    %2223 = vmatmul.mubr.bf16.gmra.mrb[0].mxu0 %v2002
    %v2224 = vpop.f32.mrb[0].mxu0
    %v2225 = vadd.f32 %v524, %v2224
    %v2226 = vpop.f32.mrb[0].mxu0
    %v2227 = vadd.f32 %v528, %v2226
    %v2228 = vpop.f32.mrb[0].mxu0
    %v2229 = vpop.f32.mrb[0].mxu0
    %2230 = vdwg.mxu0
    %2231 = vmatprep.subr.bf16.mxu0 0
    %2232 = vmatpush1.bf16.msra.mxu0 %v1274
    %2233 = vmatprep.subr.bf16.mxu0 0
    %2234 = vmatpush1.bf16.msra.mxu0 %v1277
    %2235 = vmatprep.subr.bf16.mxu0 0
    %2236 = vmatpush1.bf16.msra.mxu0 %v1280
    %2237 = vmatprep.subr.bf16.mxu0 0
    %2238 = vmatpush1.bf16.msra.mxu0 %v1283
    %2239 = vmatprep.subr.bf16.mxu0 0
    %2240 = vmatpush1.bf16.msra.mxu0 %v1286
    %2241 = vmatprep.subr.bf16.mxu0 0
    %2242 = vmatpush1.bf16.msra.mxu0 %v1289
    %2243 = vmatprep.subr.bf16.mxu0 0
    %2244 = vmatpush1.bf16.msra.mxu0 %v1292
    %2245 = vmatprep.subr.bf16.mxu0 0
    %2246 = vmatpush1.bf16.msra.mxu0 %v1295
    %2247 = vmatprep.subr.bf16.mxu0 0
    %2248 = vmatpush1.bf16.msra.mxu0 0
    %2249 = vmatprep.subr.bf16.mxu0 0
    %2250 = vmatpush1.bf16.msra.mxu0 0
    %2251 = vmatprep.subr.bf16.mxu0 0
    %2252 = vmatpush1.bf16.msra.mxu0 0
    %2253 = vmatprep.subr.bf16.mxu0 0
    %2254 = vmatpush1.bf16.msra.mxu0 0
    %2255 = vmatprep.subr.bf16.mxu0 0
    %2256 = vmatpush1.bf16.msra.mxu0 0
    %2257 = vmatprep.subr.bf16.mxu0 0
    %2258 = vmatpush1.bf16.msra.mxu0 0
    %2259 = vmatprep.subr.bf16.mxu0 0
    %2260 = vmatpush1.bf16.msra.mxu0 0
    %2261 = vmatprep.subr.bf16.mxu0 0
    %2262 = vmatpush1.bf16.msra.mxu0 0
    %2263 = vmatprep.mubr.bf16.mxu0 0
    %2264 = vmatmul.mubr.bf16.gmra.mrb[0].mxu0 %v2002
    %v2265 = vpop.f32.mrb[0].mxu0
    %v2266 = vadd.f32 %v532, %v2265
    %v2267 = vpop.f32.mrb[0].mxu0
    %v2268 = vpop.f32.mrb[0].mxu0
    %v2269 = vpop.f32.mrb[0].mxu0
    %2270 = vdwg.mxu0
    %v2271 = vadd.f32 %v2225, %v2120
    %v2272 = vxor.u32 %v2271, 2147483648
    %v2273 = vmul.f32 %v2272, 1.442695
    %v2274 = vpow.pop %v2273
    %v2275 = vadd.f32 %v2274, 1.0
    %v2276 = vrcp.pop %v2275
    %v2277 = vmul.f32 1.0, %v2276
    %v2278 = vadd.f32 %v2227, %v2122
    %v2279 = vxor.u32 %v2278, 2147483648
    %v2280 = vmul.f32 %v2279, 1.442695
    %v2281 = vpow.pop %v2280
    %v2282 = vadd.f32 %v2281, 1.0
    %v2283 = vrcp.pop %v2282
    %v2284 = vmul.f32 1.0, %v2283
    %v2285 = vadd.f32 %v2161, %v541
    %v2286 = vmul.f32 %v2277, %v2285
    %v2287 = vadd.f32 %v2266, %v2286
    %v2288 = vtanh.pop %v2287
    %v2289 = vsub.f32 %v2001, %v2288
    %v2290 = vmul.f32 %v2284, %v2289
    %v2291 = vadd.f32 %v2288, %v2290
    %v2292 = vpack.c.bf16 %v2189, %v2189
    %2293 = vmatprep.subr.bf16.mxu0 %v660
    %2294 = vmatpush1.bf16.msra.mxu0 %v659
    %2295 = vmatprep.subr.bf16.mxu0 %v663
    %2296 = vmatpush1.bf16.msra.mxu0 %v662
    %2297 = vmatprep.subr.bf16.mxu0 %v666
    %2298 = vmatpush1.bf16.msra.mxu0 %v665
    %2299 = vmatprep.subr.bf16.mxu0 %v669
    %2300 = vmatpush1.bf16.msra.mxu0 %v668
    %2301 = vmatprep.subr.bf16.mxu0 %v672
    %2302 = vmatpush1.bf16.msra.mxu0 %v671
    %2303 = vmatprep.subr.bf16.mxu0 %v675
    %2304 = vmatpush1.bf16.msra.mxu0 %v674
    %2305 = vmatprep.subr.bf16.mxu0 %v678
    %2306 = vmatpush1.bf16.msra.mxu0 %v677
    %2307 = vmatprep.subr.bf16.mxu0 %v681
    %2308 = vmatpush1.bf16.msra.mxu0 %v680
    %2309 = vmatprep.subr.bf16.mxu0 0
    %2310 = vmatpush1.bf16.msra.mxu0 0
    %2311 = vmatprep.subr.bf16.mxu0 0
    %2312 = vmatpush1.bf16.msra.mxu0 0
    %2313 = vmatprep.subr.bf16.mxu0 0
    %2314 = vmatpush1.bf16.msra.mxu0 0
    %2315 = vmatprep.subr.bf16.mxu0 0
    %2316 = vmatpush1.bf16.msra.mxu0 0
    %2317 = vmatprep.subr.bf16.mxu0 0
    %2318 = vmatpush1.bf16.msra.mxu0 0
    %2319 = vmatprep.subr.bf16.mxu0 0
    %2320 = vmatpush1.bf16.msra.mxu0 0
    %2321 = vmatprep.subr.bf16.mxu0 0
    %2322 = vmatpush1.bf16.msra.mxu0 0
    %2323 = vmatprep.subr.bf16.mxu0 0
    %2324 = vmatpush1.bf16.msra.mxu0 0
    %2325 = vmatprep.mubr.bf16.mxu0 0
    %2326 = vmatmul.mubr.bf16.gmra.mrb[0].mxu0 %v2292
    %v2327 = vpop.f32.mrb[0].mxu0
    %v2328 = vadd.f32 0.0, %v2327
    %v2329 = vpop.f32.mrb[0].mxu0
    %v2330 = vadd.f32 0.0, %v2329
    %v2331 = vpop.f32.mrb[0].mxu0
    %v2332 = vpop.f32.mrb[0].mxu0
    %2333 = vdwg.mxu0
    %2334 = vmatprep.subr.bf16.mxu0 0
    %2335 = vmatpush1.bf16.msra.mxu0 %v661
    %2336 = vmatprep.subr.bf16.mxu0 0
    %2337 = vmatpush1.bf16.msra.mxu0 %v664
    %2338 = vmatprep.subr.bf16.mxu0 0
    %2339 = vmatpush1.bf16.msra.mxu0 %v667
    %2340 = vmatprep.subr.bf16.mxu0 0
    %2341 = vmatpush1.bf16.msra.mxu0 %v670
    %2342 = vmatprep.subr.bf16.mxu0 0
    %2343 = vmatpush1.bf16.msra.mxu0 %v673
    %2344 = vmatprep.subr.bf16.mxu0 0
    %2345 = vmatpush1.bf16.msra.mxu0 %v676
    %2346 = vmatprep.subr.bf16.mxu0 0
    %2347 = vmatpush1.bf16.msra.mxu0 %v679
    %2348 = vmatprep.subr.bf16.mxu0 0
    %2349 = vmatpush1.bf16.msra.mxu0 %v682
    %2350 = vmatprep.subr.bf16.mxu0 0
    %2351 = vmatpush1.bf16.msra.mxu0 0
    %2352 = vmatprep.subr.bf16.mxu0 0
    %2353 = vmatpush1.bf16.msra.mxu0 0
    %2354 = vmatprep.subr.bf16.mxu0 0
    %2355 = vmatpush1.bf16.msra.mxu0 0
    %2356 = vmatprep.subr.bf16.mxu0 0
    %2357 = vmatpush1.bf16.msra.mxu0 0
    %2358 = vmatprep.subr.bf16.mxu0 0
    %2359 = vmatpush1.bf16.msra.mxu0 0
    %2360 = vmatprep.subr.bf16.mxu0 0
    %2361 = vmatpush1.bf16.msra.mxu0 0
    %2362 = vmatprep.subr.bf16.mxu0 0
    %2363 = vmatpush1.bf16.msra.mxu0 0
    %2364 = vmatprep.subr.bf16.mxu0 0
    %2365 = vmatpush1.bf16.msra.mxu0 0
    %2366 = vmatprep.mubr.bf16.mxu0 0
    %2367 = vmatmul.mubr.bf16.gmra.mrb[0].mxu0 %v2292
    %v2368 = vpop.f32.mrb[0].mxu0
    %v2369 = vadd.f32 0.0, %v2368
    %v2370 = vpop.f32.mrb[0].mxu0
    %v2371 = vpop.f32.mrb[0].mxu0
    %v2372 = vpop.f32.mrb[0].mxu0
    %2373 = vdwg.mxu0
    %v2374 = vpack.c.bf16 %v2291, %v2291
    %2375 = vmatprep.subr.bf16.mxu0 %v1040
    %2376 = vmatpush1.bf16.msra.mxu0 %v1039
    %2377 = vmatprep.subr.bf16.mxu0 %v1043
    %2378 = vmatpush1.bf16.msra.mxu0 %v1042
    %2379 = vmatprep.subr.bf16.mxu0 %v1046
    %2380 = vmatpush1.bf16.msra.mxu0 %v1045
    %2381 = vmatprep.subr.bf16.mxu0 %v1049
    %2382 = vmatpush1.bf16.msra.mxu0 %v1048
    %2383 = vmatprep.subr.bf16.mxu0 %v1052
    %2384 = vmatpush1.bf16.msra.mxu0 %v1051
    %2385 = vmatprep.subr.bf16.mxu0 %v1055
    %2386 = vmatpush1.bf16.msra.mxu0 %v1054
    %2387 = vmatprep.subr.bf16.mxu0 %v1058
    %2388 = vmatpush1.bf16.msra.mxu0 %v1057
    %2389 = vmatprep.subr.bf16.mxu0 %v1061
    %2390 = vmatpush1.bf16.msra.mxu0 %v1060
    %2391 = vmatprep.subr.bf16.mxu0 0
    %2392 = vmatpush1.bf16.msra.mxu0 0
    %2393 = vmatprep.subr.bf16.mxu0 0
    %2394 = vmatpush1.bf16.msra.mxu0 0
    %2395 = vmatprep.subr.bf16.mxu0 0
    %2396 = vmatpush1.bf16.msra.mxu0 0
    %2397 = vmatprep.subr.bf16.mxu0 0
    %2398 = vmatpush1.bf16.msra.mxu0 0
    %2399 = vmatprep.subr.bf16.mxu0 0
    %2400 = vmatpush1.bf16.msra.mxu0 0
    %2401 = vmatprep.subr.bf16.mxu0 0
    %2402 = vmatpush1.bf16.msra.mxu0 0
    %2403 = vmatprep.subr.bf16.mxu0 0
    %2404 = vmatpush1.bf16.msra.mxu0 0
    %2405 = vmatprep.subr.bf16.mxu0 0
    %2406 = vmatpush1.bf16.msra.mxu0 0
    %2407 = vmatprep.mubr.bf16.mxu0 0
    %2408 = vmatmul.mubr.bf16.gmra.mrb[0].mxu0 %v2374
    %v2409 = vpop.f32.mrb[0].mxu0
    %v2410 = vadd.f32 0.0, %v2409
    %v2411 = vpop.f32.mrb[0].mxu0
    %v2412 = vadd.f32 0.0, %v2411
    %v2413 = vpop.f32.mrb[0].mxu0
    %v2414 = vpop.f32.mrb[0].mxu0
    %2415 = vdwg.mxu0
    %2416 = vmatprep.subr.bf16.mxu0 0
    %2417 = vmatpush1.bf16.msra.mxu0 %v1041
    %2418 = vmatprep.subr.bf16.mxu0 0
    %2419 = vmatpush1.bf16.msra.mxu0 %v1044
    %2420 = vmatprep.subr.bf16.mxu0 0
    %2421 = vmatpush1.bf16.msra.mxu0 %v1047
    %2422 = vmatprep.subr.bf16.mxu0 0
    %2423 = vmatpush1.bf16.msra.mxu0 %v1050
    %2424 = vmatprep.subr.bf16.mxu0 0
    %2425 = vmatpush1.bf16.msra.mxu0 %v1053
    %2426 = vmatprep.subr.bf16.mxu0 0
    %2427 = vmatpush1.bf16.msra.mxu0 %v1056
    %2428 = vmatprep.subr.bf16.mxu0 0
    %2429 = vmatpush1.bf16.msra.mxu0 %v1059
    %2430 = vmatprep.subr.bf16.mxu0 0
    %2431 = vmatpush1.bf16.msra.mxu0 %v1062
    %2432 = vmatprep.subr.bf16.mxu0 0
    %2433 = vmatpush1.bf16.msra.mxu0 0
    %2434 = vmatprep.subr.bf16.mxu0 0
    %2435 = vmatpush1.bf16.msra.mxu0 0
    %2436 = vmatprep.subr.bf16.mxu0 0
    %2437 = vmatpush1.bf16.msra.mxu0 0
    %2438 = vmatprep.subr.bf16.mxu0 0
    %2439 = vmatpush1.bf16.msra.mxu0 0
    %2440 = vmatprep.subr.bf16.mxu0 0
    %2441 = vmatpush1.bf16.msra.mxu0 0
    %2442 = vmatprep.subr.bf16.mxu0 0
    %2443 = vmatpush1.bf16.msra.mxu0 0
    %2444 = vmatprep.subr.bf16.mxu0 0
    %2445 = vmatpush1.bf16.msra.mxu0 0
    %2446 = vmatprep.subr.bf16.mxu0 0
    %2447 = vmatpush1.bf16.msra.mxu0 0
    %2448 = vmatprep.mubr.bf16.mxu0 0
    %2449 = vmatmul.mubr.bf16.gmra.mrb[0].mxu0 %v2374
    %v2450 = vpop.f32.mrb[0].mxu0
    %v2451 = vadd.f32 0.0, %v2450
    %v2452 = vpop.f32.mrb[0].mxu0
    %v2453 = vpop.f32.mrb[0].mxu0
    %v2454 = vpop.f32.mrb[0].mxu0
    %2455 = vdwg.mxu0
    %v2456 = vld [vmem:[#allocation2 + $0x78] sm:$0xff]
    %v2457 = vld [vmem:[#allocation2 + $0x80] sm:$0xff]
    %v2458 = vld [vmem:[#allocation2 + $0x88] sm:$0xff]
    %v2459 = vadd.f32 %v2456, %v2328
    %v2460 = vxor.u32 %v2459, 2147483648
    %v2461 = vmul.f32 %v2460, 1.442695
    %v2462 = vpow.pop %v2461
    %v2463 = vadd.f32 %v2462, 1.0
    %v2464 = vrcp.pop %v2463
    %v2465 = vmul.f32 1.0, %v2464
    %v2466 = vadd.f32 %v2457, %v2330
    %v2467 = vxor.u32 %v2466, 2147483648
    %v2468 = vmul.f32 %v2467, 1.442695
    %v2469 = vpow.pop %v2468
    %v2470 = vadd.f32 %v2469, 1.0
    %v2471 = vrcp.pop %v2470
    %v2472 = vmul.f32 1.0, %v2471
    %v2473 = vadd.f32 %v2369, %v517
    %v2474 = vmul.f32 %v2465, %v2473
    %v2475 = vadd.f32 %v2458, %v2474
    %v2476 = vtanh.pop %v2475
    %v2477 = vsub.f32 %v2189, %v2476
    %v2478 = vmul.f32 %v2472, %v2477
    %v2479 = vadd.f32 %v2476, %v2478
    %2480 = vmatprep.subr.bf16.mxu0 %v1273
    %2481 = vmatpush1.bf16.msra.mxu0 %v1272
    %2482 = vmatprep.subr.bf16.mxu0 %v1276
    %2483 = vmatpush1.bf16.msra.mxu0 %v1275
    %2484 = vmatprep.subr.bf16.mxu0 %v1279
    %2485 = vmatpush1.bf16.msra.mxu0 %v1278
    %2486 = vmatprep.subr.bf16.mxu0 %v1282
    %2487 = vmatpush1.bf16.msra.mxu0 %v1281
    %2488 = vmatprep.subr.bf16.mxu0 %v1285
    %2489 = vmatpush1.bf16.msra.mxu0 %v1284
    %2490 = vmatprep.subr.bf16.mxu0 %v1288
    %2491 = vmatpush1.bf16.msra.mxu0 %v1287
    %2492 = vmatprep.subr.bf16.mxu0 %v1291
    %2493 = vmatpush1.bf16.msra.mxu0 %v1290
    %2494 = vmatprep.subr.bf16.mxu0 %v1294
    %2495 = vmatpush1.bf16.msra.mxu0 %v1293
    %2496 = vmatprep.subr.bf16.mxu0 0
    %2497 = vmatpush1.bf16.msra.mxu0 0
    %2498 = vmatprep.subr.bf16.mxu0 0
    %2499 = vmatpush1.bf16.msra.mxu0 0
    %2500 = vmatprep.subr.bf16.mxu0 0
    %2501 = vmatpush1.bf16.msra.mxu0 0
    %2502 = vmatprep.subr.bf16.mxu0 0
    %2503 = vmatpush1.bf16.msra.mxu0 0
    %2504 = vmatprep.subr.bf16.mxu0 0
    %2505 = vmatpush1.bf16.msra.mxu0 0
    %2506 = vmatprep.subr.bf16.mxu0 0
    %2507 = vmatpush1.bf16.msra.mxu0 0
    %2508 = vmatprep.subr.bf16.mxu0 0
    %2509 = vmatpush1.bf16.msra.mxu0 0
    %2510 = vmatprep.subr.bf16.mxu0 0
    %2511 = vmatpush1.bf16.msra.mxu0 0
    %2512 = vmatprep.mubr.bf16.mxu0 0
    %2513 = vmatmul.mubr.bf16.gmra.mrb[0].mxu0 %v2292
    %v2514 = vpop.f32.mrb[0].mxu0
    %v2515 = vadd.f32 %v524, %v2514
    %v2516 = vpop.f32.mrb[0].mxu0
    %v2517 = vadd.f32 %v528, %v2516
    %v2518 = vpop.f32.mrb[0].mxu0
    %v2519 = vpop.f32.mrb[0].mxu0
    %2520 = vdwg.mxu0
    %2521 = vmatprep.subr.bf16.mxu0 0
    %2522 = vmatpush1.bf16.msra.mxu0 %v1274
    %2523 = vmatprep.subr.bf16.mxu0 0
    %2524 = vmatpush1.bf16.msra.mxu0 %v1277
    %2525 = vmatprep.subr.bf16.mxu0 0
    %2526 = vmatpush1.bf16.msra.mxu0 %v1280
    %2527 = vmatprep.subr.bf16.mxu0 0
    %2528 = vmatpush1.bf16.msra.mxu0 %v1283
    %2529 = vmatprep.subr.bf16.mxu0 0
    %2530 = vmatpush1.bf16.msra.mxu0 %v1286
    %2531 = vmatprep.subr.bf16.mxu0 0
    %2532 = vmatpush1.bf16.msra.mxu0 %v1289
    %2533 = vmatprep.subr.bf16.mxu0 0
    %2534 = vmatpush1.bf16.msra.mxu0 %v1292
    %2535 = vmatprep.subr.bf16.mxu0 0
    %2536 = vmatpush1.bf16.msra.mxu0 %v1295
    %2537 = vmatprep.subr.bf16.mxu0 0
    %2538 = vmatpush1.bf16.msra.mxu0 0
    %2539 = vmatprep.subr.bf16.mxu0 0
    %2540 = vmatpush1.bf16.msra.mxu0 0
    %2541 = vmatprep.subr.bf16.mxu0 0
    %2542 = vmatpush1.bf16.msra.mxu0 0
    %2543 = vmatprep.subr.bf16.mxu0 0
    %2544 = vmatpush1.bf16.msra.mxu0 0
    %2545 = vmatprep.subr.bf16.mxu0 0
    %2546 = vmatpush1.bf16.msra.mxu0 0
    %2547 = vmatprep.subr.bf16.mxu0 0
    %2548 = vmatpush1.bf16.msra.mxu0 0
    %2549 = vmatprep.subr.bf16.mxu0 0
    %2550 = vmatpush1.bf16.msra.mxu0 0
    %2551 = vmatprep.subr.bf16.mxu0 0
    %2552 = vmatpush1.bf16.msra.mxu0 0
    %2553 = vmatprep.mubr.bf16.mxu0 0
    %2554 = vmatmul.mubr.bf16.gmra.mrb[0].mxu0 %v2292
    %v2555 = vpop.f32.mrb[0].mxu0
    %v2556 = vadd.f32 %v532, %v2555
    %v2557 = vpop.f32.mrb[0].mxu0
    %v2558 = vpop.f32.mrb[0].mxu0
    %v2559 = vpop.f32.mrb[0].mxu0
    %2560 = vdwg.mxu0
    %v2561 = vadd.f32 %v2515, %v2410
    %v2562 = vxor.u32 %v2561, 2147483648
    %v2563 = vmul.f32 %v2562, 1.442695
    %v2564 = vpow.pop %v2563
    %v2565 = vadd.f32 %v2564, 1.0
    %v2566 = vrcp.pop %v2565
    %v2567 = vmul.f32 1.0, %v2566
    %v2568 = vadd.f32 %v2517, %v2412
    %v2569 = vxor.u32 %v2568, 2147483648
    %v2570 = vmul.f32 %v2569, 1.442695
    %v2571 = vpow.pop %v2570
    %v2572 = vadd.f32 %v2571, 1.0
    %v2573 = vrcp.pop %v2572
    %v2574 = vmul.f32 1.0, %v2573
    %v2575 = vadd.f32 %v2451, %v541
    %v2576 = vmul.f32 %v2567, %v2575
    %v2577 = vadd.f32 %v2556, %v2576
    %v2578 = vtanh.pop %v2577
    %v2579 = vsub.f32 %v2291, %v2578
    %v2580 = vmul.f32 %v2574, %v2579
    %v2581 = vadd.f32 %v2578, %v2580
    %v2582 = vpack.c.bf16 %v2479, %v2479
    %2583 = vmatprep.subr.bf16.mxu0 %v660
    %2584 = vmatpush1.bf16.msra.mxu0 %v659
    %2585 = vmatprep.subr.bf16.mxu0 %v663
    %2586 = vmatpush1.bf16.msra.mxu0 %v662
    %2587 = vmatprep.subr.bf16.mxu0 %v666
    %2588 = vmatpush1.bf16.msra.mxu0 %v665
    %2589 = vmatprep.subr.bf16.mxu0 %v669
    %2590 = vmatpush1.bf16.msra.mxu0 %v668
    %2591 = vmatprep.subr.bf16.mxu0 %v672
    %2592 = vmatpush1.bf16.msra.mxu0 %v671
    %2593 = vmatprep.subr.bf16.mxu0 %v675
    %2594 = vmatpush1.bf16.msra.mxu0 %v674
    %2595 = vmatprep.subr.bf16.mxu0 %v678
    %2596 = vmatpush1.bf16.msra.mxu0 %v677
    %2597 = vmatprep.subr.bf16.mxu0 %v681
    %2598 = vmatpush1.bf16.msra.mxu0 %v680
    %2599 = vmatprep.subr.bf16.mxu0 0
    %2600 = vmatpush1.bf16.msra.mxu0 0
    %2601 = vmatprep.subr.bf16.mxu0 0
    %2602 = vmatpush1.bf16.msra.mxu0 0
    %2603 = vmatprep.subr.bf16.mxu0 0
    %2604 = vmatpush1.bf16.msra.mxu0 0
    %2605 = vmatprep.subr.bf16.mxu0 0
    %2606 = vmatpush1.bf16.msra.mxu0 0
    %2607 = vmatprep.subr.bf16.mxu0 0
    %2608 = vmatpush1.bf16.msra.mxu0 0
    %2609 = vmatprep.subr.bf16.mxu0 0
    %2610 = vmatpush1.bf16.msra.mxu0 0
    %2611 = vmatprep.subr.bf16.mxu0 0
    %2612 = vmatpush1.bf16.msra.mxu0 0
    %2613 = vmatprep.subr.bf16.mxu0 0
    %2614 = vmatpush1.bf16.msra.mxu0 0
    %2615 = vmatprep.mubr.bf16.mxu0 0
    %2616 = vmatmul.mubr.bf16.gmra.mrb[0].mxu0 %v2582
    %v2617 = vpop.f32.mrb[0].mxu0
    %v2618 = vadd.f32 0.0, %v2617
    %v2619 = vpop.f32.mrb[0].mxu0
    %v2620 = vadd.f32 0.0, %v2619
    %v2621 = vpop.f32.mrb[0].mxu0
    %v2622 = vpop.f32.mrb[0].mxu0
    %2623 = vdwg.mxu0
    %2624 = vmatprep.subr.bf16.mxu0 0
    %2625 = vmatpush1.bf16.msra.mxu0 %v661
    %2626 = vmatprep.subr.bf16.mxu0 0
    %2627 = vmatpush1.bf16.msra.mxu0 %v664
    %2628 = vmatprep.subr.bf16.mxu0 0
    %2629 = vmatpush1.bf16.msra.mxu0 %v667
    %2630 = vmatprep.subr.bf16.mxu0 0
    %2631 = vmatpush1.bf16.msra.mxu0 %v670
    %2632 = vmatprep.subr.bf16.mxu0 0
    %2633 = vmatpush1.bf16.msra.mxu0 %v673
    %2634 = vmatprep.subr.bf16.mxu0 0
    %2635 = vmatpush1.bf16.msra.mxu0 %v676
    %2636 = vmatprep.subr.bf16.mxu0 0
    %2637 = vmatpush1.bf16.msra.mxu0 %v679
    %2638 = vmatprep.subr.bf16.mxu0 0
    %2639 = vmatpush1.bf16.msra.mxu0 %v682
    %2640 = vmatprep.subr.bf16.mxu0 0
    %2641 = vmatpush1.bf16.msra.mxu0 0
    %2642 = vmatprep.subr.bf16.mxu0 0
    %2643 = vmatpush1.bf16.msra.mxu0 0
    %2644 = vmatprep.subr.bf16.mxu0 0
    %2645 = vmatpush1.bf16.msra.mxu0 0
    %2646 = vmatprep.subr.bf16.mxu0 0
    %2647 = vmatpush1.bf16.msra.mxu0 0
    %2648 = vmatprep.subr.bf16.mxu0 0
    %2649 = vmatpush1.bf16.msra.mxu0 0
    %2650 = vmatprep.subr.bf16.mxu0 0
    %2651 = vmatpush1.bf16.msra.mxu0 0
    %2652 = vmatprep.subr.bf16.mxu0 0
    %2653 = vmatpush1.bf16.msra.mxu0 0
    %2654 = vmatprep.subr.bf16.mxu0 0
    %2655 = vmatpush1.bf16.msra.mxu0 0
    %2656 = vmatprep.mubr.bf16.mxu0 0
    %2657 = vmatmul.mubr.bf16.gmra.mrb[0].mxu0 %v2582
    %v2658 = vpop.f32.mrb[0].mxu0
    %v2659 = vadd.f32 0.0, %v2658
    %v2660 = vpop.f32.mrb[0].mxu0
    %v2661 = vpop.f32.mrb[0].mxu0
    %v2662 = vpop.f32.mrb[0].mxu0
    %2663 = vdwg.mxu0
    %v2664 = vpack.c.bf16 %v2581, %v2581
    %2665 = vmatprep.subr.bf16.mxu0 %v1040
    %2666 = vmatpush1.bf16.msra.mxu0 %v1039
    %2667 = vmatprep.subr.bf16.mxu0 %v1043
    %2668 = vmatpush1.bf16.msra.mxu0 %v1042
    %2669 = vmatprep.subr.bf16.mxu0 %v1046
    %2670 = vmatpush1.bf16.msra.mxu0 %v1045
    %2671 = vmatprep.subr.bf16.mxu0 %v1049
    %2672 = vmatpush1.bf16.msra.mxu0 %v1048
    %2673 = vmatprep.subr.bf16.mxu0 %v1052
    %2674 = vmatpush1.bf16.msra.mxu0 %v1051
    %2675 = vmatprep.subr.bf16.mxu0 %v1055
    %2676 = vmatpush1.bf16.msra.mxu0 %v1054
    %2677 = vmatprep.subr.bf16.mxu0 %v1058
    %2678 = vmatpush1.bf16.msra.mxu0 %v1057
    %2679 = vmatprep.subr.bf16.mxu0 %v1061
    %2680 = vmatpush1.bf16.msra.mxu0 %v1060
    %2681 = vmatprep.subr.bf16.mxu0 0
    %2682 = vmatpush1.bf16.msra.mxu0 0
    %2683 = vmatprep.subr.bf16.mxu0 0
    %2684 = vmatpush1.bf16.msra.mxu0 0
    %2685 = vmatprep.subr.bf16.mxu0 0
    %2686 = vmatpush1.bf16.msra.mxu0 0
    %2687 = vmatprep.subr.bf16.mxu0 0
    %2688 = vmatpush1.bf16.msra.mxu0 0
    %2689 = vmatprep.subr.bf16.mxu0 0
    %2690 = vmatpush1.bf16.msra.mxu0 0
    %2691 = vmatprep.subr.bf16.mxu0 0
    %2692 = vmatpush1.bf16.msra.mxu0 0
    %2693 = vmatprep.subr.bf16.mxu0 0
    %2694 = vmatpush1.bf16.msra.mxu0 0
    %2695 = vmatprep.subr.bf16.mxu0 0
    %2696 = vmatpush1.bf16.msra.mxu0 0
    %2697 = vmatprep.mubr.bf16.mxu0 0
    %2698 = vmatmul.mubr.bf16.gmra.mrb[0].mxu0 %v2664
    %v2699 = vpop.f32.mrb[0].mxu0
    %v2700 = vadd.f32 0.0, %v2699
    %v2701 = vpop.f32.mrb[0].mxu0
    %v2702 = vadd.f32 0.0, %v2701
    %v2703 = vpop.f32.mrb[0].mxu0
    %v2704 = vpop.f32.mrb[0].mxu0
    %2705 = vdwg.mxu0
    %2706 = vmatprep.subr.bf16.mxu0 0
    %2707 = vmatpush1.bf16.msra.mxu0 %v1041
    %2708 = vmatprep.subr.bf16.mxu0 0
    %2709 = vmatpush1.bf16.msra.mxu0 %v1044
    %2710 = vmatprep.subr.bf16.mxu0 0
    %2711 = vmatpush1.bf16.msra.mxu0 %v1047
    %2712 = vmatprep.subr.bf16.mxu0 0
    %2713 = vmatpush1.bf16.msra.mxu0 %v1050
    %2714 = vmatprep.subr.bf16.mxu0 0
    %2715 = vmatpush1.bf16.msra.mxu0 %v1053
    %2716 = vmatprep.subr.bf16.mxu0 0
    %2717 = vmatpush1.bf16.msra.mxu0 %v1056
    %2718 = vmatprep.subr.bf16.mxu0 0
    %2719 = vmatpush1.bf16.msra.mxu0 %v1059
    %2720 = vmatprep.subr.bf16.mxu0 0
    %2721 = vmatpush1.bf16.msra.mxu0 %v1062
    %2722 = vmatprep.subr.bf16.mxu0 0
    %2723 = vmatpush1.bf16.msra.mxu0 0
    %2724 = vmatprep.subr.bf16.mxu0 0
    %2725 = vmatpush1.bf16.msra.mxu0 0
    %2726 = vmatprep.subr.bf16.mxu0 0
    %2727 = vmatpush1.bf16.msra.mxu0 0
    %2728 = vmatprep.subr.bf16.mxu0 0
    %2729 = vmatpush1.bf16.msra.mxu0 0
    %2730 = vmatprep.subr.bf16.mxu0 0
    %2731 = vmatpush1.bf16.msra.mxu0 0
    %2732 = vmatprep.subr.bf16.mxu0 0
    %2733 = vmatpush1.bf16.msra.mxu0 0
    %2734 = vmatprep.subr.bf16.mxu0 0
    %2735 = vmatpush1.bf16.msra.mxu0 0
    %2736 = vmatprep.subr.bf16.mxu0 0
    %2737 = vmatpush1.bf16.msra.mxu0 0
    %2738 = vmatprep.mubr.bf16.mxu0 0
    %2739 = vmatmul.mubr.bf16.gmra.mrb[0].mxu0 %v2664
    %v2740 = vpop.f32.mrb[0].mxu0
    %v2741 = vadd.f32 0.0, %v2740
    %v2742 = vpop.f32.mrb[0].mxu0
    %v2743 = vpop.f32.mrb[0].mxu0
    %v2744 = vpop.f32.mrb[0].mxu0
    %2745 = vdwg.mxu0
    %v2746 = vld [vmem:[#allocation2 + $0x90] sm:$0xff]
    %v2747 = vld [vmem:[#allocation2 + $0x98] sm:$0xff]
    %v2748 = vld [vmem:[#allocation2 + $0xa0] sm:$0xff]
    %v2749 = vadd.f32 %v2746, %v2618
    %v2750 = vxor.u32 %v2749, 2147483648
    %v2751 = vmul.f32 %v2750, 1.442695
    %v2752 = vpow.pop %v2751
    %v2753 = vadd.f32 %v2752, 1.0
    %v2754 = vrcp.pop %v2753
    %v2755 = vmul.f32 1.0, %v2754
    %v2756 = vadd.f32 %v2747, %v2620
    %v2757 = vxor.u32 %v2756, 2147483648
    %v2758 = vmul.f32 %v2757, 1.442695
    %v2759 = vpow.pop %v2758
    %v2760 = vadd.f32 %v2759, 1.0
    %v2761 = vrcp.pop %v2760
    %v2762 = vmul.f32 1.0, %v2761
    %v2763 = vadd.f32 %v2659, %v517
    %v2764 = vmul.f32 %v2755, %v2763
    %v2765 = vadd.f32 %v2748, %v2764
    %v2766 = vtanh.pop %v2765
    %v2767 = vsub.f32 %v2479, %v2766
    %v2768 = vmul.f32 %v2762, %v2767
    %v2769 = vadd.f32 %v2766, %v2768
    %2770 = vmatprep.subr.bf16.mxu0 %v1273
    %2771 = vmatpush1.bf16.msra.mxu0 %v1272
    %2772 = vmatprep.subr.bf16.mxu0 %v1276
    %2773 = vmatpush1.bf16.msra.mxu0 %v1275
    %2774 = vmatprep.subr.bf16.mxu0 %v1279
    %2775 = vmatpush1.bf16.msra.mxu0 %v1278
    %2776 = vmatprep.subr.bf16.mxu0 %v1282
    %2777 = vmatpush1.bf16.msra.mxu0 %v1281
    %2778 = vmatprep.subr.bf16.mxu0 %v1285
    %2779 = vmatpush1.bf16.msra.mxu0 %v1284
    %2780 = vmatprep.subr.bf16.mxu0 %v1288
    %2781 = vmatpush1.bf16.msra.mxu0 %v1287
    %2782 = vmatprep.subr.bf16.mxu0 %v1291
    %2783 = vmatpush1.bf16.msra.mxu0 %v1290
    %2784 = vmatprep.subr.bf16.mxu0 %v1294
    %2785 = vmatpush1.bf16.msra.mxu0 %v1293
    %2786 = vmatprep.subr.bf16.mxu0 0
    %2787 = vmatpush1.bf16.msra.mxu0 0
    %2788 = vmatprep.subr.bf16.mxu0 0
    %2789 = vmatpush1.bf16.msra.mxu0 0
    %2790 = vmatprep.subr.bf16.mxu0 0
    %2791 = vmatpush1.bf16.msra.mxu0 0
    %2792 = vmatprep.subr.bf16.mxu0 0
    %2793 = vmatpush1.bf16.msra.mxu0 0
    %2794 = vmatprep.subr.bf16.mxu0 0
    %2795 = vmatpush1.bf16.msra.mxu0 0
    %2796 = vmatprep.subr.bf16.mxu0 0
    %2797 = vmatpush1.bf16.msra.mxu0 0
    %2798 = vmatprep.subr.bf16.mxu0 0
    %2799 = vmatpush1.bf16.msra.mxu0 0
    %2800 = vmatprep.subr.bf16.mxu0 0
    %2801 = vmatpush1.bf16.msra.mxu0 0
    %2802 = vmatprep.mubr.bf16.mxu0 0
    %2803 = vmatmul.mubr.bf16.gmra.mrb[0].mxu0 %v2582
    %v2804 = vpop.f32.mrb[0].mxu0
    %v2805 = vadd.f32 %v524, %v2804
    %v2806 = vpop.f32.mrb[0].mxu0
    %v2807 = vadd.f32 %v528, %v2806
    %v2808 = vpop.f32.mrb[0].mxu0
    %v2809 = vpop.f32.mrb[0].mxu0
    %2810 = vdwg.mxu0
    %2811 = vmatprep.subr.bf16.mxu0 0
    %2812 = vmatpush1.bf16.msra.mxu0 %v1274
    %2813 = vmatprep.subr.bf16.mxu0 0
    %2814 = vmatpush1.bf16.msra.mxu0 %v1277
    %2815 = vmatprep.subr.bf16.mxu0 0
    %2816 = vmatpush1.bf16.msra.mxu0 %v1280
    %2817 = vmatprep.subr.bf16.mxu0 0
    %2818 = vmatpush1.bf16.msra.mxu0 %v1283
    %2819 = vmatprep.subr.bf16.mxu0 0
    %2820 = vmatpush1.bf16.msra.mxu0 %v1286
    %2821 = vmatprep.subr.bf16.mxu0 0
    %2822 = vmatpush1.bf16.msra.mxu0 %v1289
    %2823 = vmatprep.subr.bf16.mxu0 0
    %2824 = vmatpush1.bf16.msra.mxu0 %v1292
    %2825 = vmatprep.subr.bf16.mxu0 0
    %2826 = vmatpush1.bf16.msra.mxu0 %v1295
    %2827 = vmatprep.subr.bf16.mxu0 0
    %2828 = vmatpush1.bf16.msra.mxu0 0
    %2829 = vmatprep.subr.bf16.mxu0 0
    %2830 = vmatpush1.bf16.msra.mxu0 0
    %2831 = vmatprep.subr.bf16.mxu0 0
    %2832 = vmatpush1.bf16.msra.mxu0 0
    %2833 = vmatprep.subr.bf16.mxu0 0
    %2834 = vmatpush1.bf16.msra.mxu0 0
    %2835 = vmatprep.subr.bf16.mxu0 0
    %2836 = vmatpush1.bf16.msra.mxu0 0
    %2837 = vmatprep.subr.bf16.mxu0 0
    %2838 = vmatpush1.bf16.msra.mxu0 0
    %2839 = vmatprep.subr.bf16.mxu0 0
    %2840 = vmatpush1.bf16.msra.mxu0 0
    %2841 = vmatprep.subr.bf16.mxu0 0
    %2842 = vmatpush1.bf16.msra.mxu0 0
    %2843 = vmatprep.mubr.bf16.mxu0 0
    %2844 = vmatmul.mubr.bf16.gmra.mrb[0].mxu0 %v2582
    %v2845 = vpop.f32.mrb[0].mxu0
    %v2846 = vadd.f32 %v532, %v2845
    %v2847 = vpop.f32.mrb[0].mxu0
    %v2848 = vpop.f32.mrb[0].mxu0
    %v2849 = vpop.f32.mrb[0].mxu0
    %2850 = vdwg.mxu0
    %v2851 = vadd.f32 %v2805, %v2700
    %v2852 = vxor.u32 %v2851, 2147483648
    %v2853 = vmul.f32 %v2852, 1.442695
    %v2854 = vpow.pop %v2853
    %v2855 = vadd.f32 %v2854, 1.0
    %v2856 = vrcp.pop %v2855
    %v2857 = vmul.f32 1.0, %v2856
    %v2858 = vadd.f32 %v2807, %v2702
    %v2859 = vxor.u32 %v2858, 2147483648
    %v2860 = vmul.f32 %v2859, 1.442695
    %v2861 = vpow.pop %v2860
    %v2862 = vadd.f32 %v2861, 1.0
    %v2863 = vrcp.pop %v2862
    %v2864 = vmul.f32 1.0, %v2863
    %v2865 = vadd.f32 %v2741, %v541
    %v2866 = vmul.f32 %v2857, %v2865
    %v2867 = vadd.f32 %v2846, %v2866
    %v2868 = vtanh.pop %v2867
    %v2869 = vsub.f32 %v2581, %v2868
    %v2870 = vmul.f32 %v2864, %v2869
    %v2871 = vadd.f32 %v2868, %v2870
    %v2872 = vpack.c.bf16 %v2769, %v2769
    %2873 = vmatprep.subr.bf16.mxu0 %v660
    %2874 = vmatpush1.bf16.msra.mxu0 %v659
    %2875 = vmatprep.subr.bf16.mxu0 %v663
    %2876 = vmatpush1.bf16.msra.mxu0 %v662
    %2877 = vmatprep.subr.bf16.mxu0 %v666
    %2878 = vmatpush1.bf16.msra.mxu0 %v665
    %2879 = vmatprep.subr.bf16.mxu0 %v669
    %2880 = vmatpush1.bf16.msra.mxu0 %v668
    %2881 = vmatprep.subr.bf16.mxu0 %v672
    %2882 = vmatpush1.bf16.msra.mxu0 %v671
    %2883 = vmatprep.subr.bf16.mxu0 %v675
    %2884 = vmatpush1.bf16.msra.mxu0 %v674
    %2885 = vmatprep.subr.bf16.mxu0 %v678
    %2886 = vmatpush1.bf16.msra.mxu0 %v677
    %2887 = vmatprep.subr.bf16.mxu0 %v681
    %2888 = vmatpush1.bf16.msra.mxu0 %v680
    %2889 = vmatprep.subr.bf16.mxu0 0
    %2890 = vmatpush1.bf16.msra.mxu0 0
    %2891 = vmatprep.subr.bf16.mxu0 0
    %2892 = vmatpush1.bf16.msra.mxu0 0
    %2893 = vmatprep.subr.bf16.mxu0 0
    %2894 = vmatpush1.bf16.msra.mxu0 0
    %2895 = vmatprep.subr.bf16.mxu0 0
    %2896 = vmatpush1.bf16.msra.mxu0 0
    %2897 = vmatprep.subr.bf16.mxu0 0
    %2898 = vmatpush1.bf16.msra.mxu0 0
    %2899 = vmatprep.subr.bf16.mxu0 0
    %2900 = vmatpush1.bf16.msra.mxu0 0
    %2901 = vmatprep.subr.bf16.mxu0 0
    %2902 = vmatpush1.bf16.msra.mxu0 0
    %2903 = vmatprep.subr.bf16.mxu0 0
    %2904 = vmatpush1.bf16.msra.mxu0 0
    %2905 = vmatprep.mubr.bf16.mxu0 0
    %2906 = vmatmul.mubr.bf16.gmra.mrb[0].mxu0 %v2872
    %v2907 = vpop.f32.mrb[0].mxu0
    %v2908 = vadd.f32 0.0, %v2907
    %v2909 = vpop.f32.mrb[0].mxu0
    %v2910 = vadd.f32 0.0, %v2909
    %v2911 = vpop.f32.mrb[0].mxu0
    %v2912 = vpop.f32.mrb[0].mxu0
    %2913 = vdwg.mxu0
    %2914 = vmatprep.subr.bf16.mxu0 0
    %2915 = vmatpush1.bf16.msra.mxu0 %v661
    %2916 = vmatprep.subr.bf16.mxu0 0
    %2917 = vmatpush1.bf16.msra.mxu0 %v664
    %2918 = vmatprep.subr.bf16.mxu0 0
    %2919 = vmatpush1.bf16.msra.mxu0 %v667
    %2920 = vmatprep.subr.bf16.mxu0 0
    %2921 = vmatpush1.bf16.msra.mxu0 %v670
    %2922 = vmatprep.subr.bf16.mxu0 0
    %2923 = vmatpush1.bf16.msra.mxu0 %v673
    %2924 = vmatprep.subr.bf16.mxu0 0
    %2925 = vmatpush1.bf16.msra.mxu0 %v676
    %2926 = vmatprep.subr.bf16.mxu0 0
    %2927 = vmatpush1.bf16.msra.mxu0 %v679
    %2928 = vmatprep.subr.bf16.mxu0 0
    %2929 = vmatpush1.bf16.msra.mxu0 %v682
    %2930 = vmatprep.subr.bf16.mxu0 0
    %2931 = vmatpush1.bf16.msra.mxu0 0
    %2932 = vmatprep.subr.bf16.mxu0 0
    %2933 = vmatpush1.bf16.msra.mxu0 0
    %2934 = vmatprep.subr.bf16.mxu0 0
    %2935 = vmatpush1.bf16.msra.mxu0 0
    %2936 = vmatprep.subr.bf16.mxu0 0
    %2937 = vmatpush1.bf16.msra.mxu0 0
    %2938 = vmatprep.subr.bf16.mxu0 0
    %2939 = vmatpush1.bf16.msra.mxu0 0
    %2940 = vmatprep.subr.bf16.mxu0 0
    %2941 = vmatpush1.bf16.msra.mxu0 0
    %2942 = vmatprep.subr.bf16.mxu0 0
    %2943 = vmatpush1.bf16.msra.mxu0 0
    %2944 = vmatprep.subr.bf16.mxu0 0
    %2945 = vmatpush1.bf16.msra.mxu0 0
    %2946 = vmatprep.mubr.bf16.mxu0 0
    %2947 = vmatmul.mubr.bf16.gmra.mrb[0].mxu0 %v2872
    %v2948 = vpop.f32.mrb[0].mxu0
    %v2949 = vadd.f32 0.0, %v2948
    %v2950 = vpop.f32.mrb[0].mxu0
    %v2951 = vpop.f32.mrb[0].mxu0
    %v2952 = vpop.f32.mrb[0].mxu0
    %2953 = vdwg.mxu0
    %v2954 = vpack.c.bf16 %v2871, %v2871
    %2955 = vmatprep.subr.bf16.mxu0 %v1040
    %2956 = vmatpush1.bf16.msra.mxu0 %v1039
    %2957 = vmatprep.subr.bf16.mxu0 %v1043
    %2958 = vmatpush1.bf16.msra.mxu0 %v1042
    %2959 = vmatprep.subr.bf16.mxu0 %v1046
    %2960 = vmatpush1.bf16.msra.mxu0 %v1045
    %2961 = vmatprep.subr.bf16.mxu0 %v1049
    %2962 = vmatpush1.bf16.msra.mxu0 %v1048
    %2963 = vmatprep.subr.bf16.mxu0 %v1052
    %2964 = vmatpush1.bf16.msra.mxu0 %v1051
    %2965 = vmatprep.subr.bf16.mxu0 %v1055
    %2966 = vmatpush1.bf16.msra.mxu0 %v1054
    %2967 = vmatprep.subr.bf16.mxu0 %v1058
    %2968 = vmatpush1.bf16.msra.mxu0 %v1057
    %2969 = vmatprep.subr.bf16.mxu0 %v1061
    %2970 = vmatpush1.bf16.msra.mxu0 %v1060
    %2971 = vmatprep.subr.bf16.mxu0 0
    %2972 = vmatpush1.bf16.msra.mxu0 0
    %2973 = vmatprep.subr.bf16.mxu0 0
    %2974 = vmatpush1.bf16.msra.mxu0 0
    %2975 = vmatprep.subr.bf16.mxu0 0
    %2976 = vmatpush1.bf16.msra.mxu0 0
    %2977 = vmatprep.subr.bf16.mxu0 0
    %2978 = vmatpush1.bf16.msra.mxu0 0
    %2979 = vmatprep.subr.bf16.mxu0 0
    %2980 = vmatpush1.bf16.msra.mxu0 0
    %2981 = vmatprep.subr.bf16.mxu0 0
    %2982 = vmatpush1.bf16.msra.mxu0 0
    %2983 = vmatprep.subr.bf16.mxu0 0
    %2984 = vmatpush1.bf16.msra.mxu0 0
    %2985 = vmatprep.subr.bf16.mxu0 0
    %2986 = vmatpush1.bf16.msra.mxu0 0
    %2987 = vmatprep.mubr.bf16.mxu0 0
    %2988 = vmatmul.mubr.bf16.gmra.mrb[0].mxu0 %v2954
    %v2989 = vpop.f32.mrb[0].mxu0
    %v2990 = vadd.f32 0.0, %v2989
    %v2991 = vpop.f32.mrb[0].mxu0
    %v2992 = vadd.f32 0.0, %v2991
    %v2993 = vpop.f32.mrb[0].mxu0
    %v2994 = vpop.f32.mrb[0].mxu0
    %2995 = vdwg.mxu0
    %2996 = vmatprep.subr.bf16.mxu0 0
    %2997 = vmatpush1.bf16.msra.mxu0 %v1041
    %2998 = vmatprep.subr.bf16.mxu0 0
    %2999 = vmatpush1.bf16.msra.mxu0 %v1044
    %3000 = vmatprep.subr.bf16.mxu0 0
    %3001 = vmatpush1.bf16.msra.mxu0 %v1047
    %3002 = vmatprep.subr.bf16.mxu0 0
    %3003 = vmatpush1.bf16.msra.mxu0 %v1050
    %3004 = vmatprep.subr.bf16.mxu0 0
    %3005 = vmatpush1.bf16.msra.mxu0 %v1053
    %3006 = vmatprep.subr.bf16.mxu0 0
    %3007 = vmatpush1.bf16.msra.mxu0 %v1056
    %3008 = vmatprep.subr.bf16.mxu0 0
    %3009 = vmatpush1.bf16.msra.mxu0 %v1059
    %3010 = vmatprep.subr.bf16.mxu0 0
    %3011 = vmatpush1.bf16.msra.mxu0 %v1062
    %3012 = vmatprep.subr.bf16.mxu0 0
    %3013 = vmatpush1.bf16.msra.mxu0 0
    %3014 = vmatprep.subr.bf16.mxu0 0
    %3015 = vmatpush1.bf16.msra.mxu0 0
    %3016 = vmatprep.subr.bf16.mxu0 0
    %3017 = vmatpush1.bf16.msra.mxu0 0
    %3018 = vmatprep.subr.bf16.mxu0 0
    %3019 = vmatpush1.bf16.msra.mxu0 0
    %3020 = vmatprep.subr.bf16.mxu0 0
    %3021 = vmatpush1.bf16.msra.mxu0 0
    %3022 = vmatprep.subr.bf16.mxu0 0
    %3023 = vmatpush1.bf16.msra.mxu0 0
    %3024 = vmatprep.subr.bf16.mxu0 0
    %3025 = vmatpush1.bf16.msra.mxu0 0
    %3026 = vmatprep.subr.bf16.mxu0 0
    %3027 = vmatpush1.bf16.msra.mxu0 0
    %3028 = vmatprep.mubr.bf16.mxu0 0
    %3029 = vmatmul.mubr.bf16.gmra.mrb[0].mxu0 %v2954
    %v3030 = vpop.f32.mrb[0].mxu0
    %v3031 = vadd.f32 0.0, %v3030
    %v3032 = vpop.f32.mrb[0].mxu0
    %v3033 = vpop.f32.mrb[0].mxu0
    %v3034 = vpop.f32.mrb[0].mxu0
    %3035 = vdwg.mxu0
    %v3036 = vld [vmem:[#allocation2 + $0xa8] sm:$0xff]
    %v3037 = vld [vmem:[#allocation2 + $0xb0] sm:$0xff]
    %v3038 = vld [vmem:[#allocation2 + $0xb8] sm:$0xff]
    %v3039 = vadd.f32 %v3036, %v2908
    %v3040 = vxor.u32 %v3039, 2147483648
    %v3041 = vmul.f32 %v3040, 1.442695
    %v3042 = vpow.pop %v3041
    %v3043 = vadd.f32 %v3042, 1.0
    %v3044 = vrcp.pop %v3043
    %v3045 = vmul.f32 1.0, %v3044
    %v3046 = vadd.f32 %v3037, %v2910
    %v3047 = vxor.u32 %v3046, 2147483648
    %v3048 = vmul.f32 %v3047, 1.442695
    %v3049 = vpow.pop %v3048
    %v3050 = vadd.f32 %v3049, 1.0
    %v3051 = vrcp.pop %v3050
    %v3052 = vmul.f32 1.0, %v3051
    %v3053 = vadd.f32 %v2949, %v517
    %v3054 = vmul.f32 %v3045, %v3053
    %v3055 = vadd.f32 %v3038, %v3054
    %v3056 = vtanh.pop %v3055
    %v3057 = vsub.f32 %v2769, %v3056
    %v3058 = vmul.f32 %v3052, %v3057
    %v3059 = vadd.f32 %v3056, %v3058
    %3060 = vmatprep.subr.bf16.mxu0 %v1273
    %3061 = vmatpush1.bf16.msra.mxu0 %v1272
    %3062 = vmatprep.subr.bf16.mxu0 %v1276
    %3063 = vmatpush1.bf16.msra.mxu0 %v1275
    %3064 = vmatprep.subr.bf16.mxu0 %v1279
    %3065 = vmatpush1.bf16.msra.mxu0 %v1278
    %3066 = vmatprep.subr.bf16.mxu0 %v1282
    %3067 = vmatpush1.bf16.msra.mxu0 %v1281
    %3068 = vmatprep.subr.bf16.mxu0 %v1285
    %3069 = vmatpush1.bf16.msra.mxu0 %v1284
    %3070 = vmatprep.subr.bf16.mxu0 %v1288
    %3071 = vmatpush1.bf16.msra.mxu0 %v1287
    %3072 = vmatprep.subr.bf16.mxu0 %v1291
    %3073 = vmatpush1.bf16.msra.mxu0 %v1290
    %3074 = vmatprep.subr.bf16.mxu0 %v1294
    %3075 = vmatpush1.bf16.msra.mxu0 %v1293
    %3076 = vmatprep.subr.bf16.mxu0 0
    %3077 = vmatpush1.bf16.msra.mxu0 0
    %3078 = vmatprep.subr.bf16.mxu0 0
    %3079 = vmatpush1.bf16.msra.mxu0 0
    %3080 = vmatprep.subr.bf16.mxu0 0
    %3081 = vmatpush1.bf16.msra.mxu0 0
    %3082 = vmatprep.subr.bf16.mxu0 0
    %3083 = vmatpush1.bf16.msra.mxu0 0
    %3084 = vmatprep.subr.bf16.mxu0 0
    %3085 = vmatpush1.bf16.msra.mxu0 0
    %3086 = vmatprep.subr.bf16.mxu0 0
    %3087 = vmatpush1.bf16.msra.mxu0 0
    %3088 = vmatprep.subr.bf16.mxu0 0
    %3089 = vmatpush1.bf16.msra.mxu0 0
    %3090 = vmatprep.subr.bf16.mxu0 0
    %3091 = vmatpush1.bf16.msra.mxu0 0
    %3092 = vmatprep.mubr.bf16.mxu0 0
    %3093 = vmatmul.mubr.bf16.gmra.mrb[0].mxu0 %v2872
    %v3094 = vpop.f32.mrb[0].mxu0
    %v3095 = vadd.f32 %v524, %v3094
    %v3096 = vpop.f32.mrb[0].mxu0
    %v3097 = vadd.f32 %v528, %v3096
    %v3098 = vpop.f32.mrb[0].mxu0
    %v3099 = vpop.f32.mrb[0].mxu0
    %3100 = vdwg.mxu0
    %3101 = vmatprep.subr.bf16.mxu0 0
    %3102 = vmatpush1.bf16.msra.mxu0 %v1274
    %3103 = vmatprep.subr.bf16.mxu0 0
    %3104 = vmatpush1.bf16.msra.mxu0 %v1277
    %3105 = vmatprep.subr.bf16.mxu0 0
    %3106 = vmatpush1.bf16.msra.mxu0 %v1280
    %3107 = vmatprep.subr.bf16.mxu0 0
    %3108 = vmatpush1.bf16.msra.mxu0 %v1283
    %3109 = vmatprep.subr.bf16.mxu0 0
    %3110 = vmatpush1.bf16.msra.mxu0 %v1286
    %3111 = vmatprep.subr.bf16.mxu0 0
    %3112 = vmatpush1.bf16.msra.mxu0 %v1289
    %3113 = vmatprep.subr.bf16.mxu0 0
    %3114 = vmatpush1.bf16.msra.mxu0 %v1292
    %3115 = vmatprep.subr.bf16.mxu0 0
    %3116 = vmatpush1.bf16.msra.mxu0 %v1295
    %3117 = vmatprep.subr.bf16.mxu0 0
    %3118 = vmatpush1.bf16.msra.mxu0 0
    %3119 = vmatprep.subr.bf16.mxu0 0
    %3120 = vmatpush1.bf16.msra.mxu0 0
    %3121 = vmatprep.subr.bf16.mxu0 0
    %3122 = vmatpush1.bf16.msra.mxu0 0
    %3123 = vmatprep.subr.bf16.mxu0 0
    %3124 = vmatpush1.bf16.msra.mxu0 0
    %3125 = vmatprep.subr.bf16.mxu0 0
    %3126 = vmatpush1.bf16.msra.mxu0 0
    %3127 = vmatprep.subr.bf16.mxu0 0
    %3128 = vmatpush1.bf16.msra.mxu0 0
    %3129 = vmatprep.subr.bf16.mxu0 0
    %3130 = vmatpush1.bf16.msra.mxu0 0
    %3131 = vmatprep.subr.bf16.mxu0 0
    %3132 = vmatpush1.bf16.msra.mxu0 0
    %3133 = vmatprep.mubr.bf16.mxu0 0
    %3134 = vmatmul.mubr.bf16.gmra.mrb[0].mxu0 %v2872
    %v3135 = vpop.f32.mrb[0].mxu0
    %v3136 = vadd.f32 %v532, %v3135
    %v3137 = vpop.f32.mrb[0].mxu0
    %v3138 = vpop.f32.mrb[0].mxu0
    %v3139 = vpop.f32.mrb[0].mxu0
    %3140 = vdwg.mxu0
    %v3141 = vadd.f32 %v3095, %v2990
    %v3142 = vxor.u32 %v3141, 2147483648
    %v3143 = vmul.f32 %v3142, 1.442695
    %v3144 = vpow.pop %v3143
    %v3145 = vadd.f32 %v3144, 1.0
    %v3146 = vrcp.pop %v3145
    %v3147 = vmul.f32 1.0, %v3146
    %v3148 = vadd.f32 %v3097, %v2992
    %v3149 = vxor.u32 %v3148, 2147483648
    %v3150 = vmul.f32 %v3149, 1.442695
    %v3151 = vpow.pop %v3150
    %v3152 = vadd.f32 %v3151, 1.0
    %v3153 = vrcp.pop %v3152
    %v3154 = vmul.f32 1.0, %v3153
    %v3155 = vadd.f32 %v3031, %v541
    %v3156 = vmul.f32 %v3147, %v3155
    %v3157 = vadd.f32 %v3136, %v3156
    %v3158 = vtanh.pop %v3157
    %v3159 = vsub.f32 %v2871, %v3158
    %v3160 = vmul.f32 %v3154, %v3159
    %v3161 = vadd.f32 %v3158, %v3160
    %v3162 = vpack.c.bf16 %v3059, %v3059
    %v3163 = vpack.c.bf16 %v3161, %v3161
    %3164 = vmatprep.subr.bf16.mxu0 %v1040
    %3165 = vmatpush1.bf16.msra.mxu0 %v1039
    %3166 = vmatprep.subr.bf16.mxu0 %v1043
    %3167 = vmatpush1.bf16.msra.mxu0 %v1042
    %3168 = vmatprep.subr.bf16.mxu0 %v1046
    %3169 = vmatpush1.bf16.msra.mxu0 %v1045
    %3170 = vmatprep.subr.bf16.mxu0 %v1049
    %3171 = vmatpush1.bf16.msra.mxu0 %v1048
    %3172 = vmatprep.subr.bf16.mxu0 %v1052
    %3173 = vmatpush1.bf16.msra.mxu0 %v1051
    %3174 = vmatprep.subr.bf16.mxu0 %v1055
    %3175 = vmatpush1.bf16.msra.mxu0 %v1054
    %3176 = vmatprep.subr.bf16.mxu0 %v1058
    %3177 = vmatpush1.bf16.msra.mxu0 %v1057
    %3178 = vmatprep.subr.bf16.mxu0 %v1061
    %3179 = vmatpush1.bf16.msra.mxu0 %v1060
    %3180 = vmatprep.subr.bf16.mxu0 0
    %3181 = vmatpush1.bf16.msra.mxu0 0
    %3182 = vmatprep.subr.bf16.mxu0 0
    %3183 = vmatpush1.bf16.msra.mxu0 0
    %3184 = vmatprep.subr.bf16.mxu0 0
    %3185 = vmatpush1.bf16.msra.mxu0 0
    %3186 = vmatprep.subr.bf16.mxu0 0
    %3187 = vmatpush1.bf16.msra.mxu0 0
    %3188 = vmatprep.subr.bf16.mxu0 0
    %3189 = vmatpush1.bf16.msra.mxu0 0
    %3190 = vmatprep.subr.bf16.mxu0 0
    %3191 = vmatpush1.bf16.msra.mxu0 0
    %3192 = vmatprep.subr.bf16.mxu0 0
    %3193 = vmatpush1.bf16.msra.mxu0 0
    %3194 = vmatprep.subr.bf16.mxu0 0
    %3195 = vmatpush1.bf16.msra.mxu0 0
    %3196 = vmatprep.mubr.bf16.mxu0 0
    %3197 = vmatmul.mubr.bf16.gmra.mrb[0].mxu0 %v3163
    %v3198 = vpop.f32.mrb[0].mxu0
    %v3199 = vadd.f32 0.0, %v3198
    %v3200 = vpop.f32.mrb[0].mxu0
    %v3201 = vadd.f32 0.0, %v3200
    %v3202 = vpop.f32.mrb[0].mxu0
    %v3203 = vpop.f32.mrb[0].mxu0
    %3204 = vdwg.mxu0
    %3205 = vmatprep.subr.bf16.mxu0 0
    %3206 = vmatpush1.bf16.msra.mxu0 %v1041
    %3207 = vmatprep.subr.bf16.mxu0 0
    %3208 = vmatpush1.bf16.msra.mxu0 %v1044
    %3209 = vmatprep.subr.bf16.mxu0 0
    %3210 = vmatpush1.bf16.msra.mxu0 %v1047
    %3211 = vmatprep.subr.bf16.mxu0 0
    %3212 = vmatpush1.bf16.msra.mxu0 %v1050
    %3213 = vmatprep.subr.bf16.mxu0 0
    %3214 = vmatpush1.bf16.msra.mxu0 %v1053
    %3215 = vmatprep.subr.bf16.mxu0 0
    %3216 = vmatpush1.bf16.msra.mxu0 %v1056
    %3217 = vmatprep.subr.bf16.mxu0 0
    %3218 = vmatpush1.bf16.msra.mxu0 %v1059
    %3219 = vmatprep.subr.bf16.mxu0 0
    %3220 = vmatpush1.bf16.msra.mxu0 %v1062
    %3221 = vmatprep.subr.bf16.mxu0 0
    %3222 = vmatpush1.bf16.msra.mxu0 0
    %3223 = vmatprep.subr.bf16.mxu0 0
    %3224 = vmatpush1.bf16.msra.mxu0 0
    %3225 = vmatprep.subr.bf16.mxu0 0
    %3226 = vmatpush1.bf16.msra.mxu0 0
    %3227 = vmatprep.subr.bf16.mxu0 0
    %3228 = vmatpush1.bf16.msra.mxu0 0
    %3229 = vmatprep.subr.bf16.mxu0 0
    %3230 = vmatpush1.bf16.msra.mxu0 0
    %3231 = vmatprep.subr.bf16.mxu0 0
    %3232 = vmatpush1.bf16.msra.mxu0 0
    %3233 = vmatprep.subr.bf16.mxu0 0
    %3234 = vmatpush1.bf16.msra.mxu0 0
    %3235 = vmatprep.subr.bf16.mxu0 0
    %3236 = vmatpush1.bf16.msra.mxu0 0
    %3237 = vmatprep.mubr.bf16.mxu0 0
    %3238 = vmatmul.mubr.bf16.gmra.mrb[0].mxu0 %v3163
    %v3239 = vpop.f32.mrb[0].mxu0
    %v3240 = vadd.f32 0.0, %v3239
    %v3241 = vpop.f32.mrb[0].mxu0
    %v3242 = vpop.f32.mrb[0].mxu0
    %v3243 = vpop.f32.mrb[0].mxu0
    %3244 = vdwg.mxu0
    %3245 = vmatprep.subr.bf16.mxu0 %v1273
    %3246 = vmatpush1.bf16.msra.mxu0 %v1272
    %3247 = vmatprep.subr.bf16.mxu0 %v1276
    %3248 = vmatpush1.bf16.msra.mxu0 %v1275
    %3249 = vmatprep.subr.bf16.mxu0 %v1279
    %3250 = vmatpush1.bf16.msra.mxu0 %v1278
    %3251 = vmatprep.subr.bf16.mxu0 %v1282
    %3252 = vmatpush1.bf16.msra.mxu0 %v1281
    %3253 = vmatprep.subr.bf16.mxu0 %v1285
    %3254 = vmatpush1.bf16.msra.mxu0 %v1284
    %3255 = vmatprep.subr.bf16.mxu0 %v1288
    %3256 = vmatpush1.bf16.msra.mxu0 %v1287
    %3257 = vmatprep.subr.bf16.mxu0 %v1291
    %3258 = vmatpush1.bf16.msra.mxu0 %v1290
    %3259 = vmatprep.subr.bf16.mxu0 %v1294
    %3260 = vmatpush1.bf16.msra.mxu0 %v1293
    %3261 = vmatprep.subr.bf16.mxu0 0
    %3262 = vmatpush1.bf16.msra.mxu0 0
    %3263 = vmatprep.subr.bf16.mxu0 0
    %3264 = vmatpush1.bf16.msra.mxu0 0
    %3265 = vmatprep.subr.bf16.mxu0 0
    %3266 = vmatpush1.bf16.msra.mxu0 0
    %3267 = vmatprep.subr.bf16.mxu0 0
    %3268 = vmatpush1.bf16.msra.mxu0 0
    %3269 = vmatprep.subr.bf16.mxu0 0
    %3270 = vmatpush1.bf16.msra.mxu0 0
    %3271 = vmatprep.subr.bf16.mxu0 0
    %3272 = vmatpush1.bf16.msra.mxu0 0
    %3273 = vmatprep.subr.bf16.mxu0 0
    %3274 = vmatpush1.bf16.msra.mxu0 0
    %3275 = vmatprep.subr.bf16.mxu0 0
    %3276 = vmatpush1.bf16.msra.mxu0 0
    %3277 = vmatprep.mubr.bf16.mxu0 0
    %3278 = vmatmul.mubr.bf16.gmra.mrb[0].mxu0 %v3162
    %v3279 = vpop.f32.mrb[0].mxu0
    %v3280 = vadd.f32 %v524, %v3279
    %v3281 = vpop.f32.mrb[0].mxu0
    %v3282 = vadd.f32 %v528, %v3281
    %v3283 = vpop.f32.mrb[0].mxu0
    %v3284 = vpop.f32.mrb[0].mxu0
    %3285 = vdwg.mxu0
    %3286 = vmatprep.subr.bf16.mxu0 0
    %3287 = vmatpush1.bf16.msra.mxu0 %v1274
    %3288 = vmatprep.subr.bf16.mxu0 0
    %3289 = vmatpush1.bf16.msra.mxu0 %v1277
    %3290 = vmatprep.subr.bf16.mxu0 0
    %3291 = vmatpush1.bf16.msra.mxu0 %v1280
    %3292 = vmatprep.subr.bf16.mxu0 0
    %3293 = vmatpush1.bf16.msra.mxu0 %v1283
    %3294 = vmatprep.subr.bf16.mxu0 0
    %3295 = vmatpush1.bf16.msra.mxu0 %v1286
    %3296 = vmatprep.subr.bf16.mxu0 0
    %3297 = vmatpush1.bf16.msra.mxu0 %v1289
    %3298 = vmatprep.subr.bf16.mxu0 0
    %3299 = vmatpush1.bf16.msra.mxu0 %v1292
    %3300 = vmatprep.subr.bf16.mxu0 0
    %3301 = vmatpush1.bf16.msra.mxu0 %v1295
    %3302 = vmatprep.subr.bf16.mxu0 0
    %3303 = vmatpush1.bf16.msra.mxu0 0
    %3304 = vmatprep.subr.bf16.mxu0 0
    %3305 = vmatpush1.bf16.msra.mxu0 0
    %3306 = vmatprep.subr.bf16.mxu0 0
    %3307 = vmatpush1.bf16.msra.mxu0 0
    %3308 = vmatprep.subr.bf16.mxu0 0
    %3309 = vmatpush1.bf16.msra.mxu0 0
    %3310 = vmatprep.subr.bf16.mxu0 0
    %3311 = vmatpush1.bf16.msra.mxu0 0
    %3312 = vmatprep.subr.bf16.mxu0 0
    %3313 = vmatpush1.bf16.msra.mxu0 0
    %3314 = vmatprep.subr.bf16.mxu0 0
    %3315 = vmatpush1.bf16.msra.mxu0 0
    %3316 = vmatprep.subr.bf16.mxu0 0
    %3317 = vmatpush1.bf16.msra.mxu0 0
    %3318 = vmatprep.mubr.bf16.mxu0 0
    %3319 = vmatmul.mubr.bf16.gmra.mrb[0].mxu0 %v3162
    %v3320 = vpop.f32.mrb[0].mxu0
    %v3321 = vadd.f32 %v532, %v3320
    %v3322 = vpop.f32.mrb[0].mxu0
    %v3323 = vpop.f32.mrb[0].mxu0
    %v3324 = vpop.f32.mrb[0].mxu0
    %3325 = vdwg.mxu0
    %v3326 = vadd.f32 %v3280, %v3199
    %v3327 = vxor.u32 %v3326, 2147483648
    %v3328 = vmul.f32 %v3327, 1.442695
    %v3329 = vpow.pop %v3328
    %v3330 = vadd.f32 %v3329, 1.0
    %v3331 = vrcp.pop %v3330
    %v3332 = vmul.f32 1.0, %v3331
    %v3333 = vadd.f32 %v3282, %v3201
    %v3334 = vxor.u32 %v3333, 2147483648
    %v3335 = vmul.f32 %v3334, 1.442695
    %v3336 = vpow.pop %v3335
    %v3337 = vadd.f32 %v3336, 1.0
    %v3338 = vrcp.pop %v3337
    %v3339 = vmul.f32 1.0, %v3338
    %v3340 = vadd.f32 %v3240, %v541
    %v3341 = vmul.f32 %v3332, %v3340
    %v3342 = vadd.f32 %v3321, %v3341
    %v3343 = vtanh.pop %v3342
    %v3344 = vsub.f32 %v3161, %v3343
    %v3345 = vmul.f32 %v3339, %v3344
    %v3346 = vadd.f32 %v3343, %v3345
    %v3347 = vpack.c.bf16 %v3346, %v3346
    %v3348 = vld [vmem:[#allocation14] sm:$0xf]
    %v3349 = vld [vmem:[#allocation14 + $0x4] sm:$0xf]
    %v3350 = vld [vmem:[#allocation14 + $0x8] sm:$0xf]
    %v3351 = vld [vmem:[#allocation14 + $0xc] sm:$0xf]
    %v3352 = vld [vmem:[#allocation14 + $0x10] sm:$0xf]
    %v3353 = vld [vmem:[#allocation14 + $0x14] sm:$0xf]
    %v3354 = vld [vmem:[#allocation14 + $0x18] sm:$0xf]
    %v3355 = vld [vmem:[#allocation14 + $0x1c] sm:$0xf]
    %v3356 = vld [vmem:[#allocation14 + $0x20] sm:$0xf]
    %v3357 = vld [vmem:[#allocation14 + $0x24] sm:$0xf]
    %v3358 = vld [vmem:[#allocation14 + $0x28] sm:$0xf]
    %v3359 = vld [vmem:[#allocation14 + $0x2c] sm:$0xf]
    %v3360 = vld [vmem:[#allocation14 + $0x30] sm:$0xf]
    %v3361 = vld [vmem:[#allocation14 + $0x34] sm:$0xf]
    %v3362 = vld [vmem:[#allocation14 + $0x38] sm:$0xf]
    %v3363 = vld [vmem:[#allocation14 + $0x3c] sm:$0xf]
    %v3364 = vld [vmem:[%s11] sm:$0x1]
    %v3366 = vlaneseq
    %v3367 = vshrl.u32 %v3366, 7
    %v3368 = vsub.s32 0, %v3367
    %v3369 = vrot.slane %v3364, %v3368
    %v3387 = vunpack.c.l.b16 %v3348
    %v3388 = vunpack.c.l.b16 %v3349
    %v3389 = vunpack.c.l.b16 %v3350
    %v3390 = vunpack.c.l.b16 %v3351
    %v3391 = vunpack.c.l.b16 %v3352
    %v3392 = vunpack.c.l.b16 %v3353
    %v3393 = vunpack.c.l.b16 %v3354
    %v3394 = vunpack.c.l.b16 %v3355
    %v3395 = vunpack.c.l.b16 %v3356
    %v3396 = vunpack.c.l.b16 %v3357
    %v3397 = vunpack.c.l.b16 %v3358
    %v3398 = vunpack.c.l.b16 %v3359
    %v3399 = vunpack.c.l.b16 %v3360
    %v3400 = vunpack.c.l.b16 %v3361
    %v3401 = vunpack.c.l.b16 %v3362
    %v3402 = vunpack.c.l.b16 %v3363
    %v3403 = vpack.c.b16 %v3388, %v3387
    %v3404 = vpack.c.b16 %v3390, %v3389
    %v3405 = vpack.c.b16 %v3392, %v3391
    %v3406 = vpack.c.b16 %v3394, %v3393
    %v3407 = vpack.c.b16 %v3396, %v3395
    %v3408 = vpack.c.b16 %v3398, %v3397
    %v3409 = vpack.c.b16 %v3400, %v3399
    %v3410 = vpack.c.b16 %v3402, %v3401
    %3419 = vmatprep.subr.bf16.mxu0 0
    %3420 = vmatpush1.bf16.msra.mxu0 %v3403
    %3421 = vmatprep.subr.bf16.mxu0 0
    %3422 = vmatpush1.bf16.msra.mxu0 %v3404
    %3423 = vmatprep.subr.bf16.mxu0 0
    %3424 = vmatpush1.bf16.msra.mxu0 %v3405
    %3425 = vmatprep.subr.bf16.mxu0 0
    %3426 = vmatpush1.bf16.msra.mxu0 %v3406
    %3427 = vmatprep.subr.bf16.mxu0 0
    %3428 = vmatpush1.bf16.msra.mxu0 %v3407
    %3429 = vmatprep.subr.bf16.mxu0 0
    %3430 = vmatpush1.bf16.msra.mxu0 %v3408
    %3431 = vmatprep.subr.bf16.mxu0 0
    %3432 = vmatpush1.bf16.msra.mxu0 %v3409
    %3433 = vmatprep.subr.bf16.mxu0 0
    %3434 = vmatpush1.bf16.msra.mxu0 %v3410
    %3435 = vmatprep.subr.bf16.mxu0 0
    %3436 = vmatpush1.bf16.msra.mxu0 0
    %3437 = vmatprep.subr.bf16.mxu0 0
    %3438 = vmatpush1.bf16.msra.mxu0 0
    %3439 = vmatprep.subr.bf16.mxu0 0
    %3440 = vmatpush1.bf16.msra.mxu0 0
    %3441 = vmatprep.subr.bf16.mxu0 0
    %3442 = vmatpush1.bf16.msra.mxu0 0
    %3443 = vmatprep.subr.bf16.mxu0 0
    %3444 = vmatpush1.bf16.msra.mxu0 0
    %3445 = vmatprep.subr.bf16.mxu0 0
    %3446 = vmatpush1.bf16.msra.mxu0 0
    %3447 = vmatprep.subr.bf16.mxu0 0
    %3448 = vmatpush1.bf16.msra.mxu0 0
    %3449 = vmatprep.subr.bf16.mxu0 0
    %3450 = vmatpush1.bf16.msra.mxu0 0
    %3451 = vmatprep.mubr.bf16.mxu0 0
    %3452 = vmatmul.mubr.bf16.gmra.mrb[0].mxu0 %v3347
    %v3453 = vpop.f32.mrb[0].mxu0
    %v3454 = vadd.f32 %v3369, %v3453
    %v3455 = vpop.f32.mrb[0].mxu0
    %v3456 = vpop.f32.mrb[0].mxu0
    %v3457 = vpop.f32.mrb[0].mxu0
    %3458 = vdwg.mxu0
    %3459 = vst [vmem:[#allocation15] sm:$0xff] %v3454
    %3460 = vst [vmem:[#allocation16] sm:$0xff] %v3059
    %s3461 = scalar_lea.vmem [#allocation16], 8
    %3462 = vst [vmem:[%s3461] sm:$0xff] %v3346
    // Predicated region
    $region78: #{tpu_custom_call.1} parent=1 // pred_check
      _
    $region79: #{tpu_custom_call.1} parent=1 // pred_check_branch
      %3464 = sbr.rel (0) target = $region81
    $region80: #{tpu_custom_call.1} parent=1 // pred_region
      %s3466 = ssub.s32 128, 128
      %3467 = vsyncadd [#allocation5], %s3466
      %s3469 = sshll.u32 [#allocation15], 4
      %s3470 = int_to_ptr.vmem [resolvable:$true] %s3469
      %3472 = dma.vmem_to_hbm [thread:$0]  %s3470, 128, %s12, [#allocation5]
    $region81: #{tpu_custom_call.1} parent=1 // pred_fallthru
      _
    // Predicated region
    $region82: #{tpu_custom_call.1} parent=1 // pred_check
      _
    $region83: #{tpu_custom_call.1} parent=1 // pred_check_branch
      %3474 = sbr.rel (0) target = $region85
    $region84: #{tpu_custom_call.1} parent=1 // pred_region
      %s3476 = ssub.s32 256, 256
      %3477 = vsyncadd [#allocation17], %s3476
      %s3478 = sshll.u32 [#allocation16], 4
      %s3479 = int_to_ptr.vmem [resolvable:$true] %s3478
      %3484 = dma.vmem_to_hbm [thread:$0]  %s3479, 256, %s13, [#allocation17], 128, 128, 8
    $region85: #{tpu_custom_call.1} parent=1 // pred_fallthru
      _
    // Predicated region
    $region86: #{tpu_custom_call.1} parent=1 // pred_check
      _
    $region87: #{tpu_custom_call.1} parent=1 // pred_check_branch
      %3486 = sbr.rel (0) target = $region89
    $region88: #{tpu_custom_call.1} parent=1 // pred_region
      %3487 = dma.done [#allocation5], 128
    $region89: #{tpu_custom_call.1} parent=1 // pred_fallthru
      _
    // Predicated region
    $region90: #{tpu_custom_call.1} parent=1 // pred_check
      _
    $region91: #{tpu_custom_call.1} parent=1 // pred_check_branch
      %3489 = sbr.rel (0) target = $region93
    $region92: #{tpu_custom_call.1} parent=1 // pred_region
      %3490 = dma.done [#allocation17], 256
    $region93: #{tpu_custom_call.1} parent=1 // pred_fallthru
      _
    %3491 = vsyncpa [#allocation4], 1
    %3492 = vsyncpa [#allocation7], 1
    %3493 = vsyncpa [#allocation10], 1
    %3494 = vsyncpa [#allocation13], 1
    %3495 = vsyncpa [#allocation5], 1
    %3496 = vsyncpa [#allocation17], 1

</llo_original>
